<compile_context>
chip_gen: v7x
topology: tpu7x:2x2x1
jax: 0.10.0
libtpu: 0.0.40
codegen_flags: <defaults>
</compile_context>

<pallas_src>
import functools

import jax
import jax.numpy as jnp
from jax import lax
from jax.experimental import pallas as pl
from jax.experimental.pallas import tpu as pltpu


# -----------------------------------------------------------------------------
# Fused ensemble-retrieval kernel
# -----------------------------------------------------------------------------
def _ensemble_kernel(rw_ref, x_ref, wcat_ref, gt_ref, ids_ref, scores_ref):
    # rw_ref:     SMEM [M*K] f32      flattened per-(model, rank) ensemble weights
    # x_ref:      VMEM [8, F] bf16    flattened query batch, padded to 8 rows
    # wcat_ref:   VMEM [F, M*D] bf16  all projection weights, concatenated on D
    # gt_ref:     VMEM [M, D, N] bf16 per-model galleries, pre-transposed (D-major)
    # ids_ref:    VMEM [KP, 1] int32  ensemble top-K image ids in rank order (KP >= K)
    # scores_ref: VMEM [KP, 1] f32    ensemble top-K scores
    M, D, N = gt_ref.shape
    K = rw_ref.shape[0] // M
    KP = ids_ref.shape[0]

    # ---- projection: ONE fused MXU matmul for all M sub-models --------------
    emb_all = jnp.dot(x_ref[...], wcat_ref[...],
                      preferred_element_type=jnp.float32)          # [8, M*D] f32
    emb0 = emb_all[0:1, :]        # batch element 0 (reference uses result_ids[0])

    # Hoisted iotas / masks (reused across all ranking phases).
    lane_ids = lax.broadcasted_iota(jnp.int32, (1, N), 1)           # image ids
    sub_iota = lax.broadcasted_iota(jnp.int32, (8, N), 0)
    col_pos = lax.broadcasted_iota(jnp.int32, (N, N), 0)            # i
    row_pos = lax.broadcasted_iota(jnp.int32, (N, N), 1)            # j
    id_tiebreak = col_pos < row_pos                                 # smallest-id wins

    # ---- per-model: L2-normalize (f32 math) + cosine sims (bf16 MXU, f32 acc)
    sims = []                                                       # lane-oriented [1, N]
    S = jnp.zeros((8, N), jnp.float32)                              # models stacked on sublanes
    for m in range(M):
        e = emb0[:, m * D:(m + 1) * D]                              # lane-aligned slice
        inv_norm = lax.rsqrt(jnp.sum(e * e, axis=-1, keepdims=True) + 1e-12)
        e_n = (e * inv_norm).astype(jnp.bfloat16)
        s_m = jnp.dot(e_n, gt_ref[m],
                      preferred_element_type=jnp.float32)           # [1, N]
        sims.append(s_m)
        S = jnp.where(sub_iota == m, s_m, S)
    S_t = jnp.transpose(S, (1, 0))                                  # [N, 8] one XLU transpose

    # ---- per-model rank-by-counting + rank-weight accumulation --------------
    # rank_j = #{i : s_i > s_j  or  (s_i == s_j and i < j)}  -> fully parallel VPU
    ens = jnp.zeros((1, N), jnp.float32)                            # ensemble score table
    for m in range(M):
        row = sims[m]                                               # (i, j) -> s_j
        col = S_t[:, m:m + 1]                                       # (i, j) -> s_i
        beats = (col > row) | ((col == row) & id_tiebreak)          # [N, N]
        rank = jnp.sum(beats.astype(jnp.int32), axis=0, keepdims=True)   # [1, N]
        w = jnp.zeros((1, N), jnp.float32)
        for r in range(K):                                          # independent per-lane selects
            w = w + jnp.where(rank == r, rw_ref[m * K + r], 0.0)
        ens = ens + w

    # ---- ensemble top-K: same counting scheme over the accumulated table ----
    E = jnp.where(sub_iota == 0, ens, 0.0)                          # [8, N] (pad for transpose)
    e_col = jnp.transpose(E, (1, 0))[:, 0:1]                        # [N, 1]
    beats = (e_col > ens) | ((e_col == ens) & id_tiebreak)
    erank = jnp.sum(beats.astype(jnp.int32), axis=0, keepdims=True)  # [1, N]

    # Ranks are a permutation of 0..N-1, so each output row matches exactly one
    # lane; extraction is KP independent masked lane-sums (pipelined, no serial
    # dependency chain).
    r_iota = lax.broadcasted_iota(jnp.int32, (KP, N), 0)
    onehot = erank == r_iota                                        # [KP, N]
    ids_ref[...] = jnp.sum(jnp.where(onehot, lane_ids, 0),
                           axis=1, keepdims=True)                   # [KP, 1] int32
    scores_ref[...] = jnp.sum(jnp.where(onehot, ens, 0.0),
                              axis=1, keepdims=True)                # [KP, 1] f32


# -----------------------------------------------------------------------------
# Ensemble forward (wrapper: padding, layout prep, single pallas_call)
# -----------------------------------------------------------------------------
def make_rank_weights(num_models, top_k=10):
    base = jnp.asarray([x * 0.5 for x in range(top_k, 0, -1)], jnp.float32)
    factors = [1.0 if i == 0 else (0.75 if i == 1 else 0.5)
               for i in range(num_models)]
    return jnp.stack([base * f for f in factors])                   # [M, top_k]


@functools.partial(jax.jit, static_argnames=("top_k",))
def ensemble_forward(query_image, proj_w, gallery, rank_weights, top_k=10):
    """query_image [B,C,H,W]; proj_w [M,F,D]; gallery [M,N,D] (L2-normalized rows);
    rank_weights [M, top_k].  Returns (result_ids, result_scores) for batch
    element 0, matching result['result_ids'][0] in the reference."""
    B = query_image.shape[0]
    M, F, D = proj_w.shape

    x_flat = query_image.reshape(B, -1)                             # [B, F]
    pad = (-B) % 8                                                  # full sublane tile
    if pad:
        x_flat = jnp.pad(x_flat, ((0, pad), (0, 0)))
    x_bf16 = x_flat.astype(jnp.bfloat16)

    # Fuse the M projection matmuls into one: [M,F,D] -> [F, M*D]; model m lives
    # in lanes m*D:(m+1)*D (lane-aligned slices inside the kernel, no relayout).
    w_cat = jnp.transpose(proj_w, (1, 0, 2)).reshape(F, M * D).astype(jnp.bfloat16)
    # Pre-transpose the (constant) gallery so the sims dot is a canonical
    # [m,k]x[k,n] MXU matmul with sims lane-dense in N (no in-kernel vxpose).
    g_t = jnp.transpose(gallery, (0, 2, 1)).astype(jnp.bfloat16)    # [M, D, N]
    rw_flat = rank_weights.reshape(-1).astype(jnp.float32)          # flat 1-D SMEM

    kp = ((top_k + 7) // 8) * 8                                     # pad output sublanes
    ids, scores = pl.pallas_call(
        _ensemble_kernel,
        out_shape=(jax.ShapeDtypeStruct((kp, 1), jnp.int32),
                   jax.ShapeDtypeStruct((kp, 1), jnp.float32)),
        in_specs=[
            pl.BlockSpec(memory_space=pltpu.MemorySpace.SMEM),      # rank weights
            pl.BlockSpec(memory_space=pltpu.MemorySpace.VMEM),      # query batch
            pl.BlockSpec(memory_space=pltpu.MemorySpace.VMEM),      # fused projections
            pl.BlockSpec(memory_space=pltpu.MemorySpace.VMEM),      # galleries (D-major)
        ],
        out_specs=(pl.BlockSpec(memory_space=pltpu.MemorySpace.VMEM),
                   pl.BlockSpec(memory_space=pltpu.MemorySpace.VMEM)),
    )(rw_flat, x_bf16, w_cat, g_t)
    return ids[:top_k, 0], scores[:top_k, 0]


# -----------------------------------------------------------------------------
# Main
# -----------------------------------------------------------------------------
if __name__ == "__main__":
    key = jax.random.PRNGKey(0)

    # Small shapes: batch=2, channels=4, spatial=16x16, embed dim=128,
    # 3 sub-models, 256 images per index gallery.
    B, C, H, W = 2, 4, 16, 16
    M, D, N = 3, 128, 256
    F = C * H * W

    k_img, k_w, k_g = jax.random.split(key, 3)
    query_image = jax.random.normal(k_img, (B, C, H, W), jnp.float32)

    # Deterministic synthetic parameters for the M ImageRetrieval sub-models,
    # stored in bf16 so the kernel's HBM traffic is bf16.
    proj_w = (jax.random.normal(k_w, (M, F, D), jnp.float32)
              * (1.0 / jnp.sqrt(F))).astype(jnp.bfloat16)
    gallery = jax.random.normal(k_g, (M, N, D), jnp.float32)
    gallery = (gallery / jnp.linalg.norm(gallery, axis=-1, keepdims=True)
               ).astype(jnp.bfloat16)

    rank_weights = make_rank_weights(M, top_k=10)

    result_ids, result_similarities = ensemble_forward(
        query_image, proj_w, gallery, rank_weights, top_k=10)
    jax.block_until_ready((result_ids, result_similarities))

    assert result_ids.shape == (10,)
    assert result_similarities.shape == (10,)
    s = result_similarities
    # Ensemble scores must be strictly positive and sorted non-increasing.
    assert bool(jnp.all(s[:-1] >= s[1:]))
    assert bool(jnp.all(s > 0.0))
    # Ranks form a permutation, so the top-10 ids must be distinct.
    assert len(set(int(i) for i in result_ids)) == 10
    print("KERNEL_OK")
</pallas_src>

<mosaic_0001>
module attributes {stable_mosaic.version = 11 : i64} {
  func.func @_ensemble_kernel(%arg0: memref<30xf32, #tpu.memory_space<smem>>, %arg1: memref<8x1024xbf16, #tpu.memory_space<vmem>>, %arg2: memref<1024x384xbf16, #tpu.memory_space<vmem>>, %arg3: memref<3x128x256xbf16, #tpu.memory_space<vmem>>, %arg4: memref<16x1xi32, #tpu.memory_space<vmem>>, %arg5: memref<16x1xf32, #tpu.memory_space<vmem>>) attributes {dimension_semantics = [], scalar_prefetch = 0 : i64, scratch_operands = 0 : i64, tpu.core_type = #tpu.core_type<tc>} {
    %c0 = arith.constant 0 : index
    %c0_0 = arith.constant 0 : index
    %0 = vector.load %arg1[%c0, %c0_0] : memref<8x1024xbf16, #tpu.memory_space<vmem>>, vector<8x1024xbf16>
    %c0_1 = arith.constant 0 : index
    %c0_2 = arith.constant 0 : index
    %1 = vector.load %arg2[%c0_1, %c0_2] : memref<1024x384xbf16, #tpu.memory_space<vmem>>, vector<1024x384xbf16>
    %cst = arith.constant dense<0.000000e+00> : vector<8x384xf32>
    %2 = tpu.matmul %0, %1, %cst {dimension_numbers = #tpu.dot_dimension_numbers<[1], [0], [0], [1], [0, 0, 1, 1], [], []>} : vector<8x1024xbf16>, vector<1024x384xbf16>, vector<8x384xf32> -> vector<8x384xf32>
    %3 = vector.extract_strided_slice %2 {offsets = [0, 0], sizes = [1, 384], strides = [1, 1]} : vector<8x384xf32> to vector<1x384xf32>
    %4 = tpu.iota {dimensions = array<i32: 1>} : vector<1x256xi32>
    %5 = tpu.iota {dimensions = array<i32: 0>} : vector<8x256xi32>
    %6 = tpu.iota {dimensions = array<i32: 0>} : vector<256x256xi32>
    %7 = tpu.iota {dimensions = array<i32: 1>} : vector<256x256xi32>
    %8 = arith.cmpi slt, %6, %7 : vector<256x256xi32>
    %cst_3 = arith.constant 0.000000e+00 : f32
    %9 = vector.broadcast %cst_3 : f32 to vector<8x256xf32>
    %10 = vector.extract_strided_slice %3 {offsets = [0, 0], sizes = [1, 128], strides = [1, 1]} : vector<1x384xf32> to vector<1x128xf32>
    %11 = arith.mulf %10, %10 : vector<1x128xf32>
    %cst_4 = arith.constant dense<0.000000e+00> : vector<1xf32>
    %12 = vector.multi_reduction <add>, %11, %cst_4 [1] : vector<1x128xf32> to vector<1xf32>
    %13 = vector.shape_cast %12 : vector<1xf32> to vector<1x1xf32>
    %cst_5 = arith.constant 9.99999996E-13 : f32
    %14 = vector.broadcast %cst_5 : f32 to vector<1x1xf32>
    %15 = arith.addf %13, %14 : vector<1x1xf32>
    %16 = math.rsqrt %15 : vector<1x1xf32>
    %17 = vector.broadcast %16 : vector<1x1xf32> to vector<1x128xf32>
    %18 = arith.mulf %10, %17 : vector<1x128xf32>
    %19 = arith.truncf %18 : vector<1x128xf32> to vector<1x128xbf16>
    %c0_6 = arith.constant 0 : index
    %c0_7 = arith.constant 0 : index
    %c0_8 = arith.constant 0 : index
    %20 = vector.load %arg3[%c0_6, %c0_7, %c0_8] : memref<3x128x256xbf16, #tpu.memory_space<vmem>>, vector<1x128x256xbf16>
    %21 = vector.shape_cast %20 : vector<1x128x256xbf16> to vector<128x256xbf16>
    %cst_9 = arith.constant dense<0.000000e+00> : vector<1x256xf32>
    %22 = tpu.matmul %19, %21, %cst_9 {dimension_numbers = #tpu.dot_dimension_numbers<[1], [0], [0], [1], [0, 0, 1, 1], [], []>} : vector<1x128xbf16>, vector<128x256xbf16>, vector<1x256xf32> -> vector<1x256xf32>
    %c0_i32 = arith.constant 0 : i32
    %23 = vector.broadcast %c0_i32 : i32 to vector<8x256xi32>
    %24 = arith.cmpi eq, %5, %23 : vector<8x256xi32>
    %25 = vector.shape_cast %22 : vector<1x256xf32> to vector<1x256xf32>
    %26 = vector.broadcast %25 : vector<1x256xf32> to vector<8x256xf32>
    %27 = arith.select %24, %26, %9 : vector<8x256xi1>, vector<8x256xf32>
    %28 = vector.extract_strided_slice %3 {offsets = [0, 128], sizes = [1, 128], strides = [1, 1]} : vector<1x384xf32> to vector<1x128xf32>
    %29 = arith.mulf %28, %28 : vector<1x128xf32>
    %cst_10 = arith.constant dense<0.000000e+00> : vector<1xf32>
    %30 = vector.multi_reduction <add>, %29, %cst_10 [1] : vector<1x128xf32> to vector<1xf32>
    %31 = vector.shape_cast %30 : vector<1xf32> to vector<1x1xf32>
    %cst_11 = arith.constant 9.99999996E-13 : f32
    %32 = vector.broadcast %cst_11 : f32 to vector<1x1xf32>
    %33 = arith.addf %31, %32 : vector<1x1xf32>
    %34 = math.rsqrt %33 : vector<1x1xf32>
    %35 = vector.broadcast %34 : vector<1x1xf32> to vector<1x128xf32>
    %36 = arith.mulf %28, %35 : vector<1x128xf32>
    %37 = arith.truncf %36 : vector<1x128xf32> to vector<1x128xbf16>
    %c1 = arith.constant 1 : index
    %c0_12 = arith.constant 0 : index
    %c0_13 = arith.constant 0 : index
    %38 = vector.load %arg3[%c1, %c0_12, %c0_13] : memref<3x128x256xbf16, #tpu.memory_space<vmem>>, vector<1x128x256xbf16>
    %39 = vector.shape_cast %38 : vector<1x128x256xbf16> to vector<128x256xbf16>
    %cst_14 = arith.constant dense<0.000000e+00> : vector<1x256xf32>
    %40 = tpu.matmul %37, %39, %cst_14 {dimension_numbers = #tpu.dot_dimension_numbers<[1], [0], [0], [1], [0, 0, 1, 1], [], []>} : vector<1x128xbf16>, vector<128x256xbf16>, vector<1x256xf32> -> vector<1x256xf32>
    %c1_i32 = arith.constant 1 : i32
    %41 = vector.broadcast %c1_i32 : i32 to vector<8x256xi32>
    %42 = arith.cmpi eq, %5, %41 : vector<8x256xi32>
    %43 = vector.shape_cast %40 : vector<1x256xf32> to vector<1x256xf32>
    %44 = vector.broadcast %43 : vector<1x256xf32> to vector<8x256xf32>
    %45 = arith.select %42, %44, %27 : vector<8x256xi1>, vector<8x256xf32>
    %46 = vector.extract_strided_slice %3 {offsets = [0, 256], sizes = [1, 128], strides = [1, 1]} : vector<1x384xf32> to vector<1x128xf32>
    %47 = arith.mulf %46, %46 : vector<1x128xf32>
    %cst_15 = arith.constant dense<0.000000e+00> : vector<1xf32>
    %48 = vector.multi_reduction <add>, %47, %cst_15 [1] : vector<1x128xf32> to vector<1xf32>
    %49 = vector.shape_cast %48 : vector<1xf32> to vector<1x1xf32>
    %cst_16 = arith.constant 9.99999996E-13 : f32
    %50 = vector.broadcast %cst_16 : f32 to vector<1x1xf32>
    %51 = arith.addf %49, %50 : vector<1x1xf32>
    %52 = math.rsqrt %51 : vector<1x1xf32>
    %53 = vector.broadcast %52 : vector<1x1xf32> to vector<1x128xf32>
    %54 = arith.mulf %46, %53 : vector<1x128xf32>
    %55 = arith.truncf %54 : vector<1x128xf32> to vector<1x128xbf16>
    %c2 = arith.constant 2 : index
    %c0_17 = arith.constant 0 : index
    %c0_18 = arith.constant 0 : index
    %56 = vector.load %arg3[%c2, %c0_17, %c0_18] : memref<3x128x256xbf16, #tpu.memory_space<vmem>>, vector<1x128x256xbf16>
    %57 = vector.shape_cast %56 : vector<1x128x256xbf16> to vector<128x256xbf16>
    %cst_19 = arith.constant dense<0.000000e+00> : vector<1x256xf32>
    %58 = tpu.matmul %55, %57, %cst_19 {dimension_numbers = #tpu.dot_dimension_numbers<[1], [0], [0], [1], [0, 0, 1, 1], [], []>} : vector<1x128xbf16>, vector<128x256xbf16>, vector<1x256xf32> -> vector<1x256xf32>
    %c2_i32 = arith.constant 2 : i32
    %59 = vector.broadcast %c2_i32 : i32 to vector<8x256xi32>
    %60 = arith.cmpi eq, %5, %59 : vector<8x256xi32>
    %61 = vector.shape_cast %58 : vector<1x256xf32> to vector<1x256xf32>
    %62 = vector.broadcast %61 : vector<1x256xf32> to vector<8x256xf32>
    %63 = arith.select %60, %62, %45 : vector<8x256xi1>, vector<8x256xf32>
    %64 = tpu.transpose %63, [1, 0] : vector<8x256xf32> -> vector<256x8xf32>
    %cst_20 = arith.constant 0.000000e+00 : f32
    %65 = vector.broadcast %cst_20 : f32 to vector<1x256xf32>
    %66 = vector.extract_strided_slice %64 {offsets = [0, 0], sizes = [256, 1], strides = [1, 1]} : vector<256x8xf32> to vector<256x1xf32>
    %67 = vector.broadcast %66 : vector<256x1xf32> to vector<256x256xf32>
    %68 = vector.broadcast %22 : vector<1x256xf32> to vector<256x256xf32>
    %69 = arith.cmpf ogt, %67, %68 : vector<256x256xf32>
    %70 = vector.broadcast %66 : vector<256x1xf32> to vector<256x256xf32>
    %71 = vector.broadcast %22 : vector<1x256xf32> to vector<256x256xf32>
    %72 = arith.cmpf oeq, %70, %71 : vector<256x256xf32>
    %73 = arith.andi %72, %8 : vector<256x256xi1>
    %74 = arith.ori %69, %73 : vector<256x256xi1>
    %75 = arith.extui %74 : vector<256x256xi1> to vector<256x256xi32>
    %cst_21 = arith.constant dense<0> : vector<256xi32>
    %76 = vector.multi_reduction <add>, %75, %cst_21 [0] : vector<256x256xi32> to vector<256xi32>
    %77 = vector.shape_cast %76 : vector<256xi32> to vector<1x256xi32>
    %cst_22 = arith.constant 0.000000e+00 : f32
    %78 = vector.broadcast %cst_22 : f32 to vector<1x256xf32>
    %c0_i32_23 = arith.constant 0 : i32
    %79 = vector.broadcast %c0_i32_23 : i32 to vector<1x256xi32>
    %80 = arith.cmpi eq, %77, %79 : vector<1x256xi32>
    %c0_24 = arith.constant 0 : index
    %81 = memref.load %arg0[%c0_24] : memref<30xf32, #tpu.memory_space<smem>>
    %cst_25 = arith.constant 0.000000e+00 : f32
    %82 = vector.broadcast %81 : f32 to vector<1x256xf32>
    %83 = vector.broadcast %cst_25 : f32 to vector<1x256xf32>
    %84 = arith.select %80, %82, %83 : vector<1x256xi1>, vector<1x256xf32>
    %85 = arith.addf %78, %84 : vector<1x256xf32>
    %c1_i32_26 = arith.constant 1 : i32
    %86 = vector.broadcast %c1_i32_26 : i32 to vector<1x256xi32>
    %87 = arith.cmpi eq, %77, %86 : vector<1x256xi32>
    %c1_27 = arith.constant 1 : index
    %88 = memref.load %arg0[%c1_27] : memref<30xf32, #tpu.memory_space<smem>>
    %cst_28 = arith.constant 0.000000e+00 : f32
    %89 = vector.broadcast %88 : f32 to vector<1x256xf32>
    %90 = vector.broadcast %cst_28 : f32 to vector<1x256xf32>
    %91 = arith.select %87, %89, %90 : vector<1x256xi1>, vector<1x256xf32>
    %92 = arith.addf %85, %91 : vector<1x256xf32>
    %c2_i32_29 = arith.constant 2 : i32
    %93 = vector.broadcast %c2_i32_29 : i32 to vector<1x256xi32>
    %94 = arith.cmpi eq, %77, %93 : vector<1x256xi32>
    %c2_30 = arith.constant 2 : index
    %95 = memref.load %arg0[%c2_30] : memref<30xf32, #tpu.memory_space<smem>>
    %cst_31 = arith.constant 0.000000e+00 : f32
    %96 = vector.broadcast %95 : f32 to vector<1x256xf32>
    %97 = vector.broadcast %cst_31 : f32 to vector<1x256xf32>
    %98 = arith.select %94, %96, %97 : vector<1x256xi1>, vector<1x256xf32>
    %99 = arith.addf %92, %98 : vector<1x256xf32>
    %c3_i32 = arith.constant 3 : i32
    %100 = vector.broadcast %c3_i32 : i32 to vector<1x256xi32>
    %101 = arith.cmpi eq, %77, %100 : vector<1x256xi32>
    %c3 = arith.constant 3 : index
    %102 = memref.load %arg0[%c3] : memref<30xf32, #tpu.memory_space<smem>>
    %cst_32 = arith.constant 0.000000e+00 : f32
    %103 = vector.broadcast %102 : f32 to vector<1x256xf32>
    %104 = vector.broadcast %cst_32 : f32 to vector<1x256xf32>
    %105 = arith.select %101, %103, %104 : vector<1x256xi1>, vector<1x256xf32>
    %106 = arith.addf %99, %105 : vector<1x256xf32>
    %c4_i32 = arith.constant 4 : i32
    %107 = vector.broadcast %c4_i32 : i32 to vector<1x256xi32>
    %108 = arith.cmpi eq, %77, %107 : vector<1x256xi32>
    %c4 = arith.constant 4 : index
    %109 = memref.load %arg0[%c4] : memref<30xf32, #tpu.memory_space<smem>>
    %cst_33 = arith.constant 0.000000e+00 : f32
    %110 = vector.broadcast %109 : f32 to vector<1x256xf32>
    %111 = vector.broadcast %cst_33 : f32 to vector<1x256xf32>
    %112 = arith.select %108, %110, %111 : vector<1x256xi1>, vector<1x256xf32>
    %113 = arith.addf %106, %112 : vector<1x256xf32>
    %c5_i32 = arith.constant 5 : i32
    %114 = vector.broadcast %c5_i32 : i32 to vector<1x256xi32>
    %115 = arith.cmpi eq, %77, %114 : vector<1x256xi32>
    %c5 = arith.constant 5 : index
    %116 = memref.load %arg0[%c5] : memref<30xf32, #tpu.memory_space<smem>>
    %cst_34 = arith.constant 0.000000e+00 : f32
    %117 = vector.broadcast %116 : f32 to vector<1x256xf32>
    %118 = vector.broadcast %cst_34 : f32 to vector<1x256xf32>
    %119 = arith.select %115, %117, %118 : vector<1x256xi1>, vector<1x256xf32>
    %120 = arith.addf %113, %119 : vector<1x256xf32>
    %c6_i32 = arith.constant 6 : i32
    %121 = vector.broadcast %c6_i32 : i32 to vector<1x256xi32>
    %122 = arith.cmpi eq, %77, %121 : vector<1x256xi32>
    %c6 = arith.constant 6 : index
    %123 = memref.load %arg0[%c6] : memref<30xf32, #tpu.memory_space<smem>>
    %cst_35 = arith.constant 0.000000e+00 : f32
    %124 = vector.broadcast %123 : f32 to vector<1x256xf32>
    %125 = vector.broadcast %cst_35 : f32 to vector<1x256xf32>
    %126 = arith.select %122, %124, %125 : vector<1x256xi1>, vector<1x256xf32>
    %127 = arith.addf %120, %126 : vector<1x256xf32>
    %c7_i32 = arith.constant 7 : i32
    %128 = vector.broadcast %c7_i32 : i32 to vector<1x256xi32>
    %129 = arith.cmpi eq, %77, %128 : vector<1x256xi32>
    %c7 = arith.constant 7 : index
    %130 = memref.load %arg0[%c7] : memref<30xf32, #tpu.memory_space<smem>>
    %cst_36 = arith.constant 0.000000e+00 : f32
    %131 = vector.broadcast %130 : f32 to vector<1x256xf32>
    %132 = vector.broadcast %cst_36 : f32 to vector<1x256xf32>
    %133 = arith.select %129, %131, %132 : vector<1x256xi1>, vector<1x256xf32>
    %134 = arith.addf %127, %133 : vector<1x256xf32>
    %c8_i32 = arith.constant 8 : i32
    %135 = vector.broadcast %c8_i32 : i32 to vector<1x256xi32>
    %136 = arith.cmpi eq, %77, %135 : vector<1x256xi32>
    %c8 = arith.constant 8 : index
    %137 = memref.load %arg0[%c8] : memref<30xf32, #tpu.memory_space<smem>>
    %cst_37 = arith.constant 0.000000e+00 : f32
    %138 = vector.broadcast %137 : f32 to vector<1x256xf32>
    %139 = vector.broadcast %cst_37 : f32 to vector<1x256xf32>
    %140 = arith.select %136, %138, %139 : vector<1x256xi1>, vector<1x256xf32>
    %141 = arith.addf %134, %140 : vector<1x256xf32>
    %c9_i32 = arith.constant 9 : i32
    %142 = vector.broadcast %c9_i32 : i32 to vector<1x256xi32>
    %143 = arith.cmpi eq, %77, %142 : vector<1x256xi32>
    %c9 = arith.constant 9 : index
    %144 = memref.load %arg0[%c9] : memref<30xf32, #tpu.memory_space<smem>>
    %cst_38 = arith.constant 0.000000e+00 : f32
    %145 = vector.broadcast %144 : f32 to vector<1x256xf32>
    %146 = vector.broadcast %cst_38 : f32 to vector<1x256xf32>
    %147 = arith.select %143, %145, %146 : vector<1x256xi1>, vector<1x256xf32>
    %148 = arith.addf %141, %147 : vector<1x256xf32>
    %149 = arith.addf %65, %148 : vector<1x256xf32>
    %150 = vector.extract_strided_slice %64 {offsets = [0, 1], sizes = [256, 1], strides = [1, 1]} : vector<256x8xf32> to vector<256x1xf32>
    %151 = vector.broadcast %150 : vector<256x1xf32> to vector<256x256xf32>
    %152 = vector.broadcast %40 : vector<1x256xf32> to vector<256x256xf32>
    %153 = arith.cmpf ogt, %151, %152 : vector<256x256xf32>
    %154 = vector.broadcast %150 : vector<256x1xf32> to vector<256x256xf32>
    %155 = vector.broadcast %40 : vector<1x256xf32> to vector<256x256xf32>
    %156 = arith.cmpf oeq, %154, %155 : vector<256x256xf32>
    %157 = arith.andi %156, %8 : vector<256x256xi1>
    %158 = arith.ori %153, %157 : vector<256x256xi1>
    %159 = arith.extui %158 : vector<256x256xi1> to vector<256x256xi32>
    %cst_39 = arith.constant dense<0> : vector<256xi32>
    %160 = vector.multi_reduction <add>, %159, %cst_39 [0] : vector<256x256xi32> to vector<256xi32>
    %161 = vector.shape_cast %160 : vector<256xi32> to vector<1x256xi32>
    %cst_40 = arith.constant 0.000000e+00 : f32
    %162 = vector.broadcast %cst_40 : f32 to vector<1x256xf32>
    %c0_i32_41 = arith.constant 0 : i32
    %163 = vector.broadcast %c0_i32_41 : i32 to vector<1x256xi32>
    %164 = arith.cmpi eq, %161, %163 : vector<1x256xi32>
    %c10 = arith.constant 10 : index
    %165 = memref.load %arg0[%c10] : memref<30xf32, #tpu.memory_space<smem>>
    %cst_42 = arith.constant 0.000000e+00 : f32
    %166 = vector.broadcast %165 : f32 to vector<1x256xf32>
    %167 = vector.broadcast %cst_42 : f32 to vector<1x256xf32>
    %168 = arith.select %164, %166, %167 : vector<1x256xi1>, vector<1x256xf32>
    %169 = arith.addf %162, %168 : vector<1x256xf32>
    %c1_i32_43 = arith.constant 1 : i32
    %170 = vector.broadcast %c1_i32_43 : i32 to vector<1x256xi32>
    %171 = arith.cmpi eq, %161, %170 : vector<1x256xi32>
    %c11 = arith.constant 11 : index
    %172 = memref.load %arg0[%c11] : memref<30xf32, #tpu.memory_space<smem>>
    %cst_44 = arith.constant 0.000000e+00 : f32
    %173 = vector.broadcast %172 : f32 to vector<1x256xf32>
    %174 = vector.broadcast %cst_44 : f32 to vector<1x256xf32>
    %175 = arith.select %171, %173, %174 : vector<1x256xi1>, vector<1x256xf32>
    %176 = arith.addf %169, %175 : vector<1x256xf32>
    %c2_i32_45 = arith.constant 2 : i32
    %177 = vector.broadcast %c2_i32_45 : i32 to vector<1x256xi32>
    %178 = arith.cmpi eq, %161, %177 : vector<1x256xi32>
    %c12 = arith.constant 12 : index
    %179 = memref.load %arg0[%c12] : memref<30xf32, #tpu.memory_space<smem>>
    %cst_46 = arith.constant 0.000000e+00 : f32
    %180 = vector.broadcast %179 : f32 to vector<1x256xf32>
    %181 = vector.broadcast %cst_46 : f32 to vector<1x256xf32>
    %182 = arith.select %178, %180, %181 : vector<1x256xi1>, vector<1x256xf32>
    %183 = arith.addf %176, %182 : vector<1x256xf32>
    %c3_i32_47 = arith.constant 3 : i32
    %184 = vector.broadcast %c3_i32_47 : i32 to vector<1x256xi32>
    %185 = arith.cmpi eq, %161, %184 : vector<1x256xi32>
    %c13 = arith.constant 13 : index
    %186 = memref.load %arg0[%c13] : memref<30xf32, #tpu.memory_space<smem>>
    %cst_48 = arith.constant 0.000000e+00 : f32
    %187 = vector.broadcast %186 : f32 to vector<1x256xf32>
    %188 = vector.broadcast %cst_48 : f32 to vector<1x256xf32>
    %189 = arith.select %185, %187, %188 : vector<1x256xi1>, vector<1x256xf32>
    %190 = arith.addf %183, %189 : vector<1x256xf32>
    %c4_i32_49 = arith.constant 4 : i32
    %191 = vector.broadcast %c4_i32_49 : i32 to vector<1x256xi32>
    %192 = arith.cmpi eq, %161, %191 : vector<1x256xi32>
    %c14 = arith.constant 14 : index
    %193 = memref.load %arg0[%c14] : memref<30xf32, #tpu.memory_space<smem>>
    %cst_50 = arith.constant 0.000000e+00 : f32
    %194 = vector.broadcast %193 : f32 to vector<1x256xf32>
    %195 = vector.broadcast %cst_50 : f32 to vector<1x256xf32>
    %196 = arith.select %192, %194, %195 : vector<1x256xi1>, vector<1x256xf32>
    %197 = arith.addf %190, %196 : vector<1x256xf32>
    %c5_i32_51 = arith.constant 5 : i32
    %198 = vector.broadcast %c5_i32_51 : i32 to vector<1x256xi32>
    %199 = arith.cmpi eq, %161, %198 : vector<1x256xi32>
    %c15 = arith.constant 15 : index
    %200 = memref.load %arg0[%c15] : memref<30xf32, #tpu.memory_space<smem>>
    %cst_52 = arith.constant 0.000000e+00 : f32
    %201 = vector.broadcast %200 : f32 to vector<1x256xf32>
    %202 = vector.broadcast %cst_52 : f32 to vector<1x256xf32>
    %203 = arith.select %199, %201, %202 : vector<1x256xi1>, vector<1x256xf32>
    %204 = arith.addf %197, %203 : vector<1x256xf32>
    %c6_i32_53 = arith.constant 6 : i32
    %205 = vector.broadcast %c6_i32_53 : i32 to vector<1x256xi32>
    %206 = arith.cmpi eq, %161, %205 : vector<1x256xi32>
    %c16 = arith.constant 16 : index
    %207 = memref.load %arg0[%c16] : memref<30xf32, #tpu.memory_space<smem>>
    %cst_54 = arith.constant 0.000000e+00 : f32
    %208 = vector.broadcast %207 : f32 to vector<1x256xf32>
    %209 = vector.broadcast %cst_54 : f32 to vector<1x256xf32>
    %210 = arith.select %206, %208, %209 : vector<1x256xi1>, vector<1x256xf32>
    %211 = arith.addf %204, %210 : vector<1x256xf32>
    %c7_i32_55 = arith.constant 7 : i32
    %212 = vector.broadcast %c7_i32_55 : i32 to vector<1x256xi32>
    %213 = arith.cmpi eq, %161, %212 : vector<1x256xi32>
    %c17 = arith.constant 17 : index
    %214 = memref.load %arg0[%c17] : memref<30xf32, #tpu.memory_space<smem>>
    %cst_56 = arith.constant 0.000000e+00 : f32
    %215 = vector.broadcast %214 : f32 to vector<1x256xf32>
    %216 = vector.broadcast %cst_56 : f32 to vector<1x256xf32>
    %217 = arith.select %213, %215, %216 : vector<1x256xi1>, vector<1x256xf32>
    %218 = arith.addf %211, %217 : vector<1x256xf32>
    %c8_i32_57 = arith.constant 8 : i32
    %219 = vector.broadcast %c8_i32_57 : i32 to vector<1x256xi32>
    %220 = arith.cmpi eq, %161, %219 : vector<1x256xi32>
    %c18 = arith.constant 18 : index
    %221 = memref.load %arg0[%c18] : memref<30xf32, #tpu.memory_space<smem>>
    %cst_58 = arith.constant 0.000000e+00 : f32
    %222 = vector.broadcast %221 : f32 to vector<1x256xf32>
    %223 = vector.broadcast %cst_58 : f32 to vector<1x256xf32>
    %224 = arith.select %220, %222, %223 : vector<1x256xi1>, vector<1x256xf32>
    %225 = arith.addf %218, %224 : vector<1x256xf32>
    %c9_i32_59 = arith.constant 9 : i32
    %226 = vector.broadcast %c9_i32_59 : i32 to vector<1x256xi32>
    %227 = arith.cmpi eq, %161, %226 : vector<1x256xi32>
    %c19 = arith.constant 19 : index
    %228 = memref.load %arg0[%c19] : memref<30xf32, #tpu.memory_space<smem>>
    %cst_60 = arith.constant 0.000000e+00 : f32
    %229 = vector.broadcast %228 : f32 to vector<1x256xf32>
    %230 = vector.broadcast %cst_60 : f32 to vector<1x256xf32>
    %231 = arith.select %227, %229, %230 : vector<1x256xi1>, vector<1x256xf32>
    %232 = arith.addf %225, %231 : vector<1x256xf32>
    %233 = arith.addf %149, %232 : vector<1x256xf32>
    %234 = vector.extract_strided_slice %64 {offsets = [0, 2], sizes = [256, 1], strides = [1, 1]} : vector<256x8xf32> to vector<256x1xf32>
    %235 = vector.broadcast %234 : vector<256x1xf32> to vector<256x256xf32>
    %236 = vector.broadcast %58 : vector<1x256xf32> to vector<256x256xf32>
    %237 = arith.cmpf ogt, %235, %236 : vector<256x256xf32>
    %238 = vector.broadcast %234 : vector<256x1xf32> to vector<256x256xf32>
    %239 = vector.broadcast %58 : vector<1x256xf32> to vector<256x256xf32>
    %240 = arith.cmpf oeq, %238, %239 : vector<256x256xf32>
    %241 = arith.andi %240, %8 : vector<256x256xi1>
    %242 = arith.ori %237, %241 : vector<256x256xi1>
    %243 = arith.extui %242 : vector<256x256xi1> to vector<256x256xi32>
    %cst_61 = arith.constant dense<0> : vector<256xi32>
    %244 = vector.multi_reduction <add>, %243, %cst_61 [0] : vector<256x256xi32> to vector<256xi32>
    %245 = vector.shape_cast %244 : vector<256xi32> to vector<1x256xi32>
    %cst_62 = arith.constant 0.000000e+00 : f32
    %246 = vector.broadcast %cst_62 : f32 to vector<1x256xf32>
    %c0_i32_63 = arith.constant 0 : i32
    %247 = vector.broadcast %c0_i32_63 : i32 to vector<1x256xi32>
    %248 = arith.cmpi eq, %245, %247 : vector<1x256xi32>
    %c20 = arith.constant 20 : index
    %249 = memref.load %arg0[%c20] : memref<30xf32, #tpu.memory_space<smem>>
    %cst_64 = arith.constant 0.000000e+00 : f32
    %250 = vector.broadcast %249 : f32 to vector<1x256xf32>
    %251 = vector.broadcast %cst_64 : f32 to vector<1x256xf32>
    %252 = arith.select %248, %250, %251 : vector<1x256xi1>, vector<1x256xf32>
    %253 = arith.addf %246, %252 : vector<1x256xf32>
    %c1_i32_65 = arith.constant 1 : i32
    %254 = vector.broadcast %c1_i32_65 : i32 to vector<1x256xi32>
    %255 = arith.cmpi eq, %245, %254 : vector<1x256xi32>
    %c21 = arith.constant 21 : index
    %256 = memref.load %arg0[%c21] : memref<30xf32, #tpu.memory_space<smem>>
    %cst_66 = arith.constant 0.000000e+00 : f32
    %257 = vector.broadcast %256 : f32 to vector<1x256xf32>
    %258 = vector.broadcast %cst_66 : f32 to vector<1x256xf32>
    %259 = arith.select %255, %257, %258 : vector<1x256xi1>, vector<1x256xf32>
    %260 = arith.addf %253, %259 : vector<1x256xf32>
    %c2_i32_67 = arith.constant 2 : i32
    %261 = vector.broadcast %c2_i32_67 : i32 to vector<1x256xi32>
    %262 = arith.cmpi eq, %245, %261 : vector<1x256xi32>
    %c22 = arith.constant 22 : index
    %263 = memref.load %arg0[%c22] : memref<30xf32, #tpu.memory_space<smem>>
    %cst_68 = arith.constant 0.000000e+00 : f32
    %264 = vector.broadcast %263 : f32 to vector<1x256xf32>
    %265 = vector.broadcast %cst_68 : f32 to vector<1x256xf32>
    %266 = arith.select %262, %264, %265 : vector<1x256xi1>, vector<1x256xf32>
    %267 = arith.addf %260, %266 : vector<1x256xf32>
    %c3_i32_69 = arith.constant 3 : i32
    %268 = vector.broadcast %c3_i32_69 : i32 to vector<1x256xi32>
    %269 = arith.cmpi eq, %245, %268 : vector<1x256xi32>
    %c23 = arith.constant 23 : index
    %270 = memref.load %arg0[%c23] : memref<30xf32, #tpu.memory_space<smem>>
    %cst_70 = arith.constant 0.000000e+00 : f32
    %271 = vector.broadcast %270 : f32 to vector<1x256xf32>
    %272 = vector.broadcast %cst_70 : f32 to vector<1x256xf32>
    %273 = arith.select %269, %271, %272 : vector<1x256xi1>, vector<1x256xf32>
    %274 = arith.addf %267, %273 : vector<1x256xf32>
    %c4_i32_71 = arith.constant 4 : i32
    %275 = vector.broadcast %c4_i32_71 : i32 to vector<1x256xi32>
    %276 = arith.cmpi eq, %245, %275 : vector<1x256xi32>
    %c24 = arith.constant 24 : index
    %277 = memref.load %arg0[%c24] : memref<30xf32, #tpu.memory_space<smem>>
    %cst_72 = arith.constant 0.000000e+00 : f32
    %278 = vector.broadcast %277 : f32 to vector<1x256xf32>
    %279 = vector.broadcast %cst_72 : f32 to vector<1x256xf32>
    %280 = arith.select %276, %278, %279 : vector<1x256xi1>, vector<1x256xf32>
    %281 = arith.addf %274, %280 : vector<1x256xf32>
    %c5_i32_73 = arith.constant 5 : i32
    %282 = vector.broadcast %c5_i32_73 : i32 to vector<1x256xi32>
    %283 = arith.cmpi eq, %245, %282 : vector<1x256xi32>
    %c25 = arith.constant 25 : index
    %284 = memref.load %arg0[%c25] : memref<30xf32, #tpu.memory_space<smem>>
    %cst_74 = arith.constant 0.000000e+00 : f32
    %285 = vector.broadcast %284 : f32 to vector<1x256xf32>
    %286 = vector.broadcast %cst_74 : f32 to vector<1x256xf32>
    %287 = arith.select %283, %285, %286 : vector<1x256xi1>, vector<1x256xf32>
    %288 = arith.addf %281, %287 : vector<1x256xf32>
    %c6_i32_75 = arith.constant 6 : i32
    %289 = vector.broadcast %c6_i32_75 : i32 to vector<1x256xi32>
    %290 = arith.cmpi eq, %245, %289 : vector<1x256xi32>
    %c26 = arith.constant 26 : index
    %291 = memref.load %arg0[%c26] : memref<30xf32, #tpu.memory_space<smem>>
    %cst_76 = arith.constant 0.000000e+00 : f32
    %292 = vector.broadcast %291 : f32 to vector<1x256xf32>
    %293 = vector.broadcast %cst_76 : f32 to vector<1x256xf32>
    %294 = arith.select %290, %292, %293 : vector<1x256xi1>, vector<1x256xf32>
    %295 = arith.addf %288, %294 : vector<1x256xf32>
    %c7_i32_77 = arith.constant 7 : i32
    %296 = vector.broadcast %c7_i32_77 : i32 to vector<1x256xi32>
    %297 = arith.cmpi eq, %245, %296 : vector<1x256xi32>
    %c27 = arith.constant 27 : index
    %298 = memref.load %arg0[%c27] : memref<30xf32, #tpu.memory_space<smem>>
    %cst_78 = arith.constant 0.000000e+00 : f32
    %299 = vector.broadcast %298 : f32 to vector<1x256xf32>
    %300 = vector.broadcast %cst_78 : f32 to vector<1x256xf32>
    %301 = arith.select %297, %299, %300 : vector<1x256xi1>, vector<1x256xf32>
    %302 = arith.addf %295, %301 : vector<1x256xf32>
    %c8_i32_79 = arith.constant 8 : i32
    %303 = vector.broadcast %c8_i32_79 : i32 to vector<1x256xi32>
    %304 = arith.cmpi eq, %245, %303 : vector<1x256xi32>
    %c28 = arith.constant 28 : index
    %305 = memref.load %arg0[%c28] : memref<30xf32, #tpu.memory_space<smem>>
    %cst_80 = arith.constant 0.000000e+00 : f32
    %306 = vector.broadcast %305 : f32 to vector<1x256xf32>
    %307 = vector.broadcast %cst_80 : f32 to vector<1x256xf32>
    %308 = arith.select %304, %306, %307 : vector<1x256xi1>, vector<1x256xf32>
    %309 = arith.addf %302, %308 : vector<1x256xf32>
    %c9_i32_81 = arith.constant 9 : i32
    %310 = vector.broadcast %c9_i32_81 : i32 to vector<1x256xi32>
    %311 = arith.cmpi eq, %245, %310 : vector<1x256xi32>
    %c29 = arith.constant 29 : index
    %312 = memref.load %arg0[%c29] : memref<30xf32, #tpu.memory_space<smem>>
    %cst_82 = arith.constant 0.000000e+00 : f32
    %313 = vector.broadcast %312 : f32 to vector<1x256xf32>
    %314 = vector.broadcast %cst_82 : f32 to vector<1x256xf32>
    %315 = arith.select %311, %313, %314 : vector<1x256xi1>, vector<1x256xf32>
    %316 = arith.addf %309, %315 : vector<1x256xf32>
    %317 = arith.addf %233, %316 : vector<1x256xf32>
    %c0_i32_83 = arith.constant 0 : i32
    %318 = vector.broadcast %c0_i32_83 : i32 to vector<8x256xi32>
    %319 = arith.cmpi eq, %5, %318 : vector<8x256xi32>
    %cst_84 = arith.constant 0.000000e+00 : f32
    %320 = vector.shape_cast %317 : vector<1x256xf32> to vector<1x256xf32>
    %321 = vector.broadcast %320 : vector<1x256xf32> to vector<8x256xf32>
    %322 = vector.broadcast %cst_84 : f32 to vector<8x256xf32>
    %323 = arith.select %319, %321, %322 : vector<8x256xi1>, vector<8x256xf32>
    %324 = tpu.transpose %323, [1, 0] : vector<8x256xf32> -> vector<256x8xf32>
    %325 = vector.extract_strided_slice %324 {offsets = [0, 0], sizes = [256, 1], strides = [1, 1]} : vector<256x8xf32> to vector<256x1xf32>
    %326 = vector.broadcast %325 : vector<256x1xf32> to vector<256x256xf32>
    %327 = vector.broadcast %317 : vector<1x256xf32> to vector<256x256xf32>
    %328 = arith.cmpf ogt, %326, %327 : vector<256x256xf32>
    %329 = vector.broadcast %325 : vector<256x1xf32> to vector<256x256xf32>
    %330 = vector.broadcast %317 : vector<1x256xf32> to vector<256x256xf32>
    %331 = arith.cmpf oeq, %329, %330 : vector<256x256xf32>
    %332 = arith.andi %331, %8 : vector<256x256xi1>
    %333 = arith.ori %328, %332 : vector<256x256xi1>
    %334 = arith.extui %333 : vector<256x256xi1> to vector<256x256xi32>
    %cst_85 = arith.constant dense<0> : vector<256xi32>
    %335 = vector.multi_reduction <add>, %334, %cst_85 [0] : vector<256x256xi32> to vector<256xi32>
    %336 = vector.shape_cast %335 : vector<256xi32> to vector<1x256xi32>
    %337 = tpu.iota {dimensions = array<i32: 0>} : vector<16x256xi32>
    %338 = vector.broadcast %336 : vector<1x256xi32> to vector<16x256xi32>
    %339 = arith.cmpi eq, %338, %337 : vector<16x256xi32>
    %c0_i32_86 = arith.constant 0 : i32
    %340 = vector.shape_cast %4 : vector<1x256xi32> to vector<1x256xi32>
    %341 = vector.broadcast %340 : vector<1x256xi32> to vector<16x256xi32>
    %342 = vector.broadcast %c0_i32_86 : i32 to vector<16x256xi32>
    %343 = arith.select %339, %341, %342 : vector<16x256xi1>, vector<16x256xi32>
    %cst_87 = arith.constant dense<0> : vector<16xi32>
    %344 = vector.multi_reduction <add>, %343, %cst_87 [1] : vector<16x256xi32> to vector<16xi32>
    %345 = vector.shape_cast %344 : vector<16xi32> to vector<16x1xi32>
    %c0_88 = arith.constant 0 : index
    %c0_89 = arith.constant 0 : index
    %346 = vector.load %arg4[%c0_88, %c0_89] : memref<16x1xi32, #tpu.memory_space<vmem>>, vector<16x1xi32>
    tpu.vector_store %arg4[%c0_88, %c0_89], %345 {strides = array<i32>} : memref<16x1xi32, #tpu.memory_space<vmem>>, vector<16x1xi32>,
    %cst_90 = arith.constant 0.000000e+00 : f32
    %347 = vector.shape_cast %317 : vector<1x256xf32> to vector<1x256xf32>
    %348 = vector.broadcast %347 : vector<1x256xf32> to vector<16x256xf32>
    %349 = vector.broadcast %cst_90 : f32 to vector<16x256xf32>
    %350 = arith.select %339, %348, %349 : vector<16x256xi1>, vector<16x256xf32>
    %cst_91 = arith.constant dense<0.000000e+00> : vector<16xf32>
    %351 = vector.multi_reduction <add>, %350, %cst_91 [1] : vector<16x256xf32> to vector<16xf32>
    %352 = vector.shape_cast %351 : vector<16xf32> to vector<16x1xf32>
    %c0_92 = arith.constant 0 : index
    %c0_93 = arith.constant 0 : index
    %353 = vector.load %arg5[%c0_92, %c0_93] : memref<16x1xf32, #tpu.memory_space<vmem>>, vector<16x1xf32>
    tpu.vector_store %arg5[%c0_92, %c0_93], %352 {strides = array<i32>} : memref<16x1xf32, #tpu.memory_space<vmem>>, vector<16x1xf32>,
    return
  }
}

</mosaic_0001>

<llo_original>
// kernel: ensemble_forward.1
$region0: #{ensemble_forward.1}
  #allocation0 [shape = 'u32[]', space=smem, size = 0x4, offset = 0x4, fixed_abs, tag = 'smem constant byte address 0x4 - core index']
  #allocation1 [shape = 'u32[144,128]{1,0:T(1,128)}', space=vmem, size = 0x12000, scoped, tag = 'internal scratch']
  %s0 = inlined_call_operand.vmem [shape: f32[30], index: 0, kind: input, shape index: {}]
  %s1 = inlined_call_operand.vmem [shape: bf16[8,1024], index: 1, kind: input, shape index: {}]
  %s2 = inlined_call_operand.vmem [shape: bf16[1024,384], index: 2, kind: input, shape index: {}]
  %s3 = inlined_call_operand.vmem [shape: bf16[3,128,256], index: 3, kind: input, shape index: {}]
  %s4 = inlined_call_operand.vmem [shape: s32[16,1], index: 4, kind: output, shape index: {0}]
  %s5 = inlined_call_operand.vmem [shape: f32[16,1], index: 5, kind: output, shape index: {1}]
  %6 = xla_tuple %s4, %s5
  %s7 = sld [smem:[#allocation0]]
  $region38: #{ensemble_forward.1} parent=0
    _
  %s9 = ssub.s32 1, %s7
  %s10 = scalar_select 0, %s9, %s7
  $region1: #{ensemble_forward.1} parent=0
    #allocation2 [shape = 'u8[512]{0}', space=smem, size = 0x200, scoped, tag = 'input window, operand 0, single buffered']
    #allocation3 [shape = 's32[1]{0}', space=sflag, size = 0x4, scoped, tag = 'scoped memory for ensemble_forward.1']
    %11 = vsyncpa [#allocation3], 0
    // Predicated region
    $region2: #{ensemble_forward.1} parent=1 // pred_check
      _
    $region3: #{ensemble_forward.1} parent=1 // pred_check_branch
      %13 = sbr.rel (0) target = $region5
    $region4: #{ensemble_forward.1} parent=1 // pred_region
      %s15 = ssub.s32 16, 16
      %16 = vsyncadd [#allocation3], %s15
      %s18 = sshll.u32 %s0, 4
      %s19 = int_to_ptr.vmem [resolvable:$true] %s18
      %21 = dma.vmem_to_smem %s19, 16, [#allocation2], [#allocation3]
    $region5: #{ensemble_forward.1} parent=1 // pred_fallthru
      _
    // Predicated region
    $region6: #{ensemble_forward.1} parent=1 // pred_check
      _
    $region7: #{ensemble_forward.1} parent=1 // pred_check_branch
      %23 = sbr.rel (0) target = $region9
    $region8: #{ensemble_forward.1} parent=1 // pred_region
      _
    $region9: #{ensemble_forward.1} parent=1 // pred_fallthru
      _
    // Predicated region
    $region10: #{ensemble_forward.1} parent=1 // pred_check
      _
    $region11: #{ensemble_forward.1} parent=1 // pred_check_branch
      %25 = sbr.rel (0) target = $region13
    $region12: #{ensemble_forward.1} parent=1 // pred_region
      _
    $region13: #{ensemble_forward.1} parent=1 // pred_fallthru
      _
    // Predicated region
    $region14: #{ensemble_forward.1} parent=1 // pred_check
      _
    $region15: #{ensemble_forward.1} parent=1 // pred_check_branch
      %27 = sbr.rel (0) target = $region17
    $region16: #{ensemble_forward.1} parent=1 // pred_region
      _
    $region17: #{ensemble_forward.1} parent=1 // pred_fallthru
      _
    // Predicated region
    $region18: #{ensemble_forward.1} parent=1 // pred_check
      _
    $region19: #{ensemble_forward.1} parent=1 // pred_check_branch
      %29 = sbr.rel (0) target = $region21
    $region20: #{ensemble_forward.1} parent=1 // pred_region
      %30 = dma.done [#allocation3], 16
    $region21: #{ensemble_forward.1} parent=1 // pred_fallthru
      _
    %31 = sfence
    %v33 = vld [vmem:[%s1] sm:$0xff]
    %v34 = vld [vmem:[%s1 + $0x8] sm:$0xff]
    %v35 = vld [vmem:[%s1 + $0x10] sm:$0xff]
    %v36 = vld [vmem:[%s1 + $0x18] sm:$0xff]
    %v37 = vld [vmem:[%s2] sm:$0xff]
    %v38 = vld [vmem:[%s2 + $0x8] sm:$0xf]
    %v39 = vld [vmem:[%s2 + $0xc] sm:$0xff]
    %v40 = vld [vmem:[%s2 + $0x14] sm:$0xf]
    %v41 = vld [vmem:[%s2 + $0x18] sm:$0xff]
    %v42 = vld [vmem:[%s2 + $0x20] sm:$0xf]
    %v43 = vld [vmem:[%s2 + $0x24] sm:$0xff]
    %v44 = vld [vmem:[%s2 + $0x2c] sm:$0xf]
    %v45 = vld [vmem:[%s2 + $0x30] sm:$0xff]
    %v46 = vld [vmem:[%s2 + $0x38] sm:$0xf]
    %v47 = vld [vmem:[%s2 + $0x3c] sm:$0xff]
    %v48 = vld [vmem:[%s2 + $0x44] sm:$0xf]
    %v49 = vld [vmem:[%s2 + $0x48] sm:$0xff]
    %v50 = vld [vmem:[%s2 + $0x50] sm:$0xf]
    %v51 = vld [vmem:[%s2 + $0x54] sm:$0xff]
    %v52 = vld [vmem:[%s2 + $0x5c] sm:$0xf]
    %v53 = vld [vmem:[%s2 + $0x60] sm:$0xff]
    %v54 = vld [vmem:[%s2 + $0x68] sm:$0xf]
    %v55 = vld [vmem:[%s2 + $0x6c] sm:$0xff]
    %v56 = vld [vmem:[%s2 + $0x74] sm:$0xf]
    %v57 = vld [vmem:[%s2 + $0x78] sm:$0xff]
    %v58 = vld [vmem:[%s2 + $0x80] sm:$0xf]
    %v59 = vld [vmem:[%s2 + $0x84] sm:$0xff]
    %v60 = vld [vmem:[%s2 + $0x8c] sm:$0xf]
    %v61 = vld [vmem:[%s2 + $0x90] sm:$0xff]
    %v62 = vld [vmem:[%s2 + $0x98] sm:$0xf]
    %v63 = vld [vmem:[%s2 + $0x9c] sm:$0xff]
    %v64 = vld [vmem:[%s2 + $0xa4] sm:$0xf]
    %v65 = vld [vmem:[%s2 + $0xa8] sm:$0xff]
    %v66 = vld [vmem:[%s2 + $0xb0] sm:$0xf]
    %v67 = vld [vmem:[%s2 + $0xb4] sm:$0xff]
    %v68 = vld [vmem:[%s2 + $0xbc] sm:$0xf]
    %v69 = vld [vmem:[%s2 + $0xc0] sm:$0xff]
    %v70 = vld [vmem:[%s2 + $0xc8] sm:$0xf]
    %v71 = vld [vmem:[%s2 + $0xcc] sm:$0xff]
    %v72 = vld [vmem:[%s2 + $0xd4] sm:$0xf]
    %v73 = vld [vmem:[%s2 + $0xd8] sm:$0xff]
    %v74 = vld [vmem:[%s2 + $0xe0] sm:$0xf]
    %v75 = vld [vmem:[%s2 + $0xe4] sm:$0xff]
    %v76 = vld [vmem:[%s2 + $0xec] sm:$0xf]
    %v77 = vld [vmem:[%s2 + $0xf0] sm:$0xff]
    %v78 = vld [vmem:[%s2 + $0xf8] sm:$0xf]
    %v79 = vld [vmem:[%s2 + $0xfc] sm:$0xff]
    %v80 = vld [vmem:[%s2 + $0x104] sm:$0xf]
    %v81 = vld [vmem:[%s2 + $0x108] sm:$0xff]
    %v82 = vld [vmem:[%s2 + $0x110] sm:$0xf]
    %v83 = vld [vmem:[%s2 + $0x114] sm:$0xff]
    %v84 = vld [vmem:[%s2 + $0x11c] sm:$0xf]
    %v85 = vld [vmem:[%s2 + $0x120] sm:$0xff]
    %v86 = vld [vmem:[%s2 + $0x128] sm:$0xf]
    %v87 = vld [vmem:[%s2 + $0x12c] sm:$0xff]
    %v88 = vld [vmem:[%s2 + $0x134] sm:$0xf]
    %v89 = vld [vmem:[%s2 + $0x138] sm:$0xff]
    %v90 = vld [vmem:[%s2 + $0x140] sm:$0xf]
    %v91 = vld [vmem:[%s2 + $0x144] sm:$0xff]
    %v92 = vld [vmem:[%s2 + $0x14c] sm:$0xf]
    %v93 = vld [vmem:[%s2 + $0x150] sm:$0xff]
    %v94 = vld [vmem:[%s2 + $0x158] sm:$0xf]
    %v95 = vld [vmem:[%s2 + $0x15c] sm:$0xff]
    %v96 = vld [vmem:[%s2 + $0x164] sm:$0xf]
    %v97 = vld [vmem:[%s2 + $0x168] sm:$0xff]
    %v98 = vld [vmem:[%s2 + $0x170] sm:$0xf]
    %v99 = vld [vmem:[%s2 + $0x174] sm:$0xff]
    %v100 = vld [vmem:[%s2 + $0x17c] sm:$0xf]
    %v101 = vld [vmem:[%s2 + $0x180] sm:$0xff]
    %v102 = vld [vmem:[%s2 + $0x188] sm:$0xf]
    %v103 = vld [vmem:[%s2 + $0x18c] sm:$0xff]
    %v104 = vld [vmem:[%s2 + $0x194] sm:$0xf]
    %v105 = vld [vmem:[%s2 + $0x198] sm:$0xff]
    %v106 = vld [vmem:[%s2 + $0x1a0] sm:$0xf]
    %v107 = vld [vmem:[%s2 + $0x1a4] sm:$0xff]
    %v108 = vld [vmem:[%s2 + $0x1ac] sm:$0xf]
    %v109 = vld [vmem:[%s2 + $0x1b0] sm:$0xff]
    %v110 = vld [vmem:[%s2 + $0x1b8] sm:$0xf]
    %v111 = vld [vmem:[%s2 + $0x1bc] sm:$0xff]
    %v112 = vld [vmem:[%s2 + $0x1c4] sm:$0xf]
    %v113 = vld [vmem:[%s2 + $0x1c8] sm:$0xff]
    %v114 = vld [vmem:[%s2 + $0x1d0] sm:$0xf]
    %v115 = vld [vmem:[%s2 + $0x1d4] sm:$0xff]
    %v116 = vld [vmem:[%s2 + $0x1dc] sm:$0xf]
    %v117 = vld [vmem:[%s2 + $0x1e0] sm:$0xff]
    %v118 = vld [vmem:[%s2 + $0x1e8] sm:$0xf]
    %v119 = vld [vmem:[%s2 + $0x1ec] sm:$0xff]
    %v120 = vld [vmem:[%s2 + $0x1f4] sm:$0xf]
    %v121 = vld [vmem:[%s2 + $0x1f8] sm:$0xff]
    %v122 = vld [vmem:[%s2 + $0x200] sm:$0xf]
    %v123 = vld [vmem:[%s2 + $0x204] sm:$0xff]
    %v124 = vld [vmem:[%s2 + $0x20c] sm:$0xf]
    %v125 = vld [vmem:[%s2 + $0x210] sm:$0xff]
    %v126 = vld [vmem:[%s2 + $0x218] sm:$0xf]
    %v127 = vld [vmem:[%s2 + $0x21c] sm:$0xff]
    %v128 = vld [vmem:[%s2 + $0x224] sm:$0xf]
    %v129 = vld [vmem:[%s2 + $0x228] sm:$0xff]
    %v130 = vld [vmem:[%s2 + $0x230] sm:$0xf]
    %v131 = vld [vmem:[%s2 + $0x234] sm:$0xff]
    %v132 = vld [vmem:[%s2 + $0x23c] sm:$0xf]
    %v133 = vld [vmem:[%s2 + $0x240] sm:$0xff]
    %v134 = vld [vmem:[%s2 + $0x248] sm:$0xf]
    %v135 = vld [vmem:[%s2 + $0x24c] sm:$0xff]
    %v136 = vld [vmem:[%s2 + $0x254] sm:$0xf]
    %v137 = vld [vmem:[%s2 + $0x258] sm:$0xff]
    %v138 = vld [vmem:[%s2 + $0x260] sm:$0xf]
    %v139 = vld [vmem:[%s2 + $0x264] sm:$0xff]
    %v140 = vld [vmem:[%s2 + $0x26c] sm:$0xf]
    %v141 = vld [vmem:[%s2 + $0x270] sm:$0xff]
    %v142 = vld [vmem:[%s2 + $0x278] sm:$0xf]
    %v143 = vld [vmem:[%s2 + $0x27c] sm:$0xff]
    %v144 = vld [vmem:[%s2 + $0x284] sm:$0xf]
    %v145 = vld [vmem:[%s2 + $0x288] sm:$0xff]
    %v146 = vld [vmem:[%s2 + $0x290] sm:$0xf]
    %v147 = vld [vmem:[%s2 + $0x294] sm:$0xff]
    %v148 = vld [vmem:[%s2 + $0x29c] sm:$0xf]
    %v149 = vld [vmem:[%s2 + $0x2a0] sm:$0xff]
    %v150 = vld [vmem:[%s2 + $0x2a8] sm:$0xf]
    %v151 = vld [vmem:[%s2 + $0x2ac] sm:$0xff]
    %v152 = vld [vmem:[%s2 + $0x2b4] sm:$0xf]
    %v153 = vld [vmem:[%s2 + $0x2b8] sm:$0xff]
    %v154 = vld [vmem:[%s2 + $0x2c0] sm:$0xf]
    %v155 = vld [vmem:[%s2 + $0x2c4] sm:$0xff]
    %v156 = vld [vmem:[%s2 + $0x2cc] sm:$0xf]
    %v157 = vld [vmem:[%s2 + $0x2d0] sm:$0xff]
    %v158 = vld [vmem:[%s2 + $0x2d8] sm:$0xf]
    %v159 = vld [vmem:[%s2 + $0x2dc] sm:$0xff]
    %v160 = vld [vmem:[%s2 + $0x2e4] sm:$0xf]
    %v161 = vld [vmem:[%s2 + $0x2e8] sm:$0xff]
    %v162 = vld [vmem:[%s2 + $0x2f0] sm:$0xf]
    %v163 = vld [vmem:[%s2 + $0x2f4] sm:$0xff]
    %v164 = vld [vmem:[%s2 + $0x2fc] sm:$0xf]
    %v165 = vld [vmem:[%s2 + $0x300] sm:$0xff]
    %v166 = vld [vmem:[%s2 + $0x308] sm:$0xf]
    %v167 = vld [vmem:[%s2 + $0x30c] sm:$0xff]
    %v168 = vld [vmem:[%s2 + $0x314] sm:$0xf]
    %v169 = vld [vmem:[%s2 + $0x318] sm:$0xff]
    %v170 = vld [vmem:[%s2 + $0x320] sm:$0xf]
    %v171 = vld [vmem:[%s2 + $0x324] sm:$0xff]
    %v172 = vld [vmem:[%s2 + $0x32c] sm:$0xf]
    %v173 = vld [vmem:[%s2 + $0x330] sm:$0xff]
    %v174 = vld [vmem:[%s2 + $0x338] sm:$0xf]
    %v175 = vld [vmem:[%s2 + $0x33c] sm:$0xff]
    %v176 = vld [vmem:[%s2 + $0x344] sm:$0xf]
    %v177 = vld [vmem:[%s2 + $0x348] sm:$0xff]
    %v178 = vld [vmem:[%s2 + $0x350] sm:$0xf]
    %v179 = vld [vmem:[%s2 + $0x354] sm:$0xff]
    %v180 = vld [vmem:[%s2 + $0x35c] sm:$0xf]
    %v181 = vld [vmem:[%s2 + $0x360] sm:$0xff]
    %v182 = vld [vmem:[%s2 + $0x368] sm:$0xf]
    %v183 = vld [vmem:[%s2 + $0x36c] sm:$0xff]
    %v184 = vld [vmem:[%s2 + $0x374] sm:$0xf]
    %v185 = vld [vmem:[%s2 + $0x378] sm:$0xff]
    %v186 = vld [vmem:[%s2 + $0x380] sm:$0xf]
    %v187 = vld [vmem:[%s2 + $0x384] sm:$0xff]
    %v188 = vld [vmem:[%s2 + $0x38c] sm:$0xf]
    %v189 = vld [vmem:[%s2 + $0x390] sm:$0xff]
    %v190 = vld [vmem:[%s2 + $0x398] sm:$0xf]
    %v191 = vld [vmem:[%s2 + $0x39c] sm:$0xff]
    %v192 = vld [vmem:[%s2 + $0x3a4] sm:$0xf]
    %v193 = vld [vmem:[%s2 + $0x3a8] sm:$0xff]
    %v194 = vld [vmem:[%s2 + $0x3b0] sm:$0xf]
    %v195 = vld [vmem:[%s2 + $0x3b4] sm:$0xff]
    %v196 = vld [vmem:[%s2 + $0x3bc] sm:$0xf]
    %v197 = vld [vmem:[%s2 + $0x3c0] sm:$0xff]
    %v198 = vld [vmem:[%s2 + $0x3c8] sm:$0xf]
    %v199 = vld [vmem:[%s2 + $0x3cc] sm:$0xff]
    %v200 = vld [vmem:[%s2 + $0x3d4] sm:$0xf]
    %v201 = vld [vmem:[%s2 + $0x3d8] sm:$0xff]
    %v202 = vld [vmem:[%s2 + $0x3e0] sm:$0xf]
    %v203 = vld [vmem:[%s2 + $0x3e4] sm:$0xff]
    %v204 = vld [vmem:[%s2 + $0x3ec] sm:$0xf]
    %v205 = vld [vmem:[%s2 + $0x3f0] sm:$0xff]
    %v206 = vld [vmem:[%s2 + $0x3f8] sm:$0xf]
    %v207 = vld [vmem:[%s2 + $0x3fc] sm:$0xff]
    %v208 = vld [vmem:[%s2 + $0x404] sm:$0xf]
    %v209 = vld [vmem:[%s2 + $0x408] sm:$0xff]
    %v210 = vld [vmem:[%s2 + $0x410] sm:$0xf]
    %v211 = vld [vmem:[%s2 + $0x414] sm:$0xff]
    %v212 = vld [vmem:[%s2 + $0x41c] sm:$0xf]
    %v213 = vld [vmem:[%s2 + $0x420] sm:$0xff]
    %v214 = vld [vmem:[%s2 + $0x428] sm:$0xf]
    %v215 = vld [vmem:[%s2 + $0x42c] sm:$0xff]
    %v216 = vld [vmem:[%s2 + $0x434] sm:$0xf]
    %v217 = vld [vmem:[%s2 + $0x438] sm:$0xff]
    %v218 = vld [vmem:[%s2 + $0x440] sm:$0xf]
    %v219 = vld [vmem:[%s2 + $0x444] sm:$0xff]
    %v220 = vld [vmem:[%s2 + $0x44c] sm:$0xf]
    %v221 = vld [vmem:[%s2 + $0x450] sm:$0xff]
    %v222 = vld [vmem:[%s2 + $0x458] sm:$0xf]
    %v223 = vld [vmem:[%s2 + $0x45c] sm:$0xff]
    %v224 = vld [vmem:[%s2 + $0x464] sm:$0xf]
    %v225 = vld [vmem:[%s2 + $0x468] sm:$0xff]
    %v226 = vld [vmem:[%s2 + $0x470] sm:$0xf]
    %v227 = vld [vmem:[%s2 + $0x474] sm:$0xff]
    %v228 = vld [vmem:[%s2 + $0x47c] sm:$0xf]
    %v229 = vld [vmem:[%s2 + $0x480] sm:$0xff]
    %v230 = vld [vmem:[%s2 + $0x488] sm:$0xf]
    %v231 = vld [vmem:[%s2 + $0x48c] sm:$0xff]
    %v232 = vld [vmem:[%s2 + $0x494] sm:$0xf]
    %v233 = vld [vmem:[%s2 + $0x498] sm:$0xff]
    %v234 = vld [vmem:[%s2 + $0x4a0] sm:$0xf]
    %v235 = vld [vmem:[%s2 + $0x4a4] sm:$0xff]
    %v236 = vld [vmem:[%s2 + $0x4ac] sm:$0xf]
    %v237 = vld [vmem:[%s2 + $0x4b0] sm:$0xff]
    %v238 = vld [vmem:[%s2 + $0x4b8] sm:$0xf]
    %v239 = vld [vmem:[%s2 + $0x4bc] sm:$0xff]
    %v240 = vld [vmem:[%s2 + $0x4c4] sm:$0xf]
    %v241 = vld [vmem:[%s2 + $0x4c8] sm:$0xff]
    %v242 = vld [vmem:[%s2 + $0x4d0] sm:$0xf]
    %v243 = vld [vmem:[%s2 + $0x4d4] sm:$0xff]
    %v244 = vld [vmem:[%s2 + $0x4dc] sm:$0xf]
    %v245 = vld [vmem:[%s2 + $0x4e0] sm:$0xff]
    %v246 = vld [vmem:[%s2 + $0x4e8] sm:$0xf]
    %v247 = vld [vmem:[%s2 + $0x4ec] sm:$0xff]
    %v248 = vld [vmem:[%s2 + $0x4f4] sm:$0xf]
    %v249 = vld [vmem:[%s2 + $0x4f8] sm:$0xff]
    %v250 = vld [vmem:[%s2 + $0x500] sm:$0xf]
    %v251 = vld [vmem:[%s2 + $0x504] sm:$0xff]
    %v252 = vld [vmem:[%s2 + $0x50c] sm:$0xf]
    %v253 = vld [vmem:[%s2 + $0x510] sm:$0xff]
    %v254 = vld [vmem:[%s2 + $0x518] sm:$0xf]
    %v255 = vld [vmem:[%s2 + $0x51c] sm:$0xff]
    %v256 = vld [vmem:[%s2 + $0x524] sm:$0xf]
    %v257 = vld [vmem:[%s2 + $0x528] sm:$0xff]
    %v258 = vld [vmem:[%s2 + $0x530] sm:$0xf]
    %v259 = vld [vmem:[%s2 + $0x534] sm:$0xff]
    %v260 = vld [vmem:[%s2 + $0x53c] sm:$0xf]
    %v261 = vld [vmem:[%s2 + $0x540] sm:$0xff]
    %v262 = vld [vmem:[%s2 + $0x548] sm:$0xf]
    %v263 = vld [vmem:[%s2 + $0x54c] sm:$0xff]
    %v264 = vld [vmem:[%s2 + $0x554] sm:$0xf]
    %v265 = vld [vmem:[%s2 + $0x558] sm:$0xff]
    %v266 = vld [vmem:[%s2 + $0x560] sm:$0xf]
    %v267 = vld [vmem:[%s2 + $0x564] sm:$0xff]
    %v268 = vld [vmem:[%s2 + $0x56c] sm:$0xf]
    %v269 = vld [vmem:[%s2 + $0x570] sm:$0xff]
    %v270 = vld [vmem:[%s2 + $0x578] sm:$0xf]
    %v271 = vld [vmem:[%s2 + $0x57c] sm:$0xff]
    %v272 = vld [vmem:[%s2 + $0x584] sm:$0xf]
    %v273 = vld [vmem:[%s2 + $0x588] sm:$0xff]
    %v274 = vld [vmem:[%s2 + $0x590] sm:$0xf]
    %v275 = vld [vmem:[%s2 + $0x594] sm:$0xff]
    %v276 = vld [vmem:[%s2 + $0x59c] sm:$0xf]
    %v277 = vld [vmem:[%s2 + $0x5a0] sm:$0xff]
    %v278 = vld [vmem:[%s2 + $0x5a8] sm:$0xf]
    %v279 = vld [vmem:[%s2 + $0x5ac] sm:$0xff]
    %v280 = vld [vmem:[%s2 + $0x5b4] sm:$0xf]
    %v281 = vld [vmem:[%s2 + $0x5b8] sm:$0xff]
    %v282 = vld [vmem:[%s2 + $0x5c0] sm:$0xf]
    %v283 = vld [vmem:[%s2 + $0x5c4] sm:$0xff]
    %v284 = vld [vmem:[%s2 + $0x5cc] sm:$0xf]
    %v285 = vld [vmem:[%s2 + $0x5d0] sm:$0xff]
    %v286 = vld [vmem:[%s2 + $0x5d8] sm:$0xf]
    %v287 = vld [vmem:[%s2 + $0x5dc] sm:$0xff]
    %v288 = vld [vmem:[%s2 + $0x5e4] sm:$0xf]
    %v289 = vld [vmem:[%s2 + $0x5e8] sm:$0xff]
    %v290 = vld [vmem:[%s2 + $0x5f0] sm:$0xf]
    %v291 = vld [vmem:[%s2 + $0x5f4] sm:$0xff]
    %v292 = vld [vmem:[%s2 + $0x5fc] sm:$0xf]
    %v297 = vunpack.c.l.b16 %v33
    %v298 = vunpack.c.h.b16 %v33
    %v299 = vunpack.c.l.b16 %v34
    %v300 = vunpack.c.h.b16 %v34
    %v301 = vunpack.c.l.b16 %v35
    %v302 = vunpack.c.h.b16 %v35
    %v303 = vunpack.c.l.b16 %v36
    %v304 = vunpack.c.h.b16 %v36
    %v305 = vpack.c.b16 %v297, %v297
    %v306 = vpack.c.b16 %v298, %v298
    %v307 = vpack.c.b16 %v299, %v299
    %v308 = vpack.c.b16 %v300, %v300
    %v309 = vpack.c.b16 %v301, %v301
    %v310 = vpack.c.b16 %v302, %v302
    %v311 = vpack.c.b16 %v303, %v303
    %v312 = vpack.c.b16 %v304, %v304
    %v577 = vunpack.c.l.b16 %v37
    %v578 = vunpack.c.h.b16 %v37
    %v579 = vunpack.c.l.b16 %v38
    %v580 = vunpack.c.l.b16 %v39
    %v581 = vunpack.c.h.b16 %v39
    %v582 = vunpack.c.l.b16 %v40
    %v583 = vunpack.c.l.b16 %v41
    %v584 = vunpack.c.h.b16 %v41
    %v585 = vunpack.c.l.b16 %v42
    %v586 = vunpack.c.l.b16 %v43
    %v587 = vunpack.c.h.b16 %v43
    %v588 = vunpack.c.l.b16 %v44
    %v589 = vunpack.c.l.b16 %v45
    %v590 = vunpack.c.h.b16 %v45
    %v591 = vunpack.c.l.b16 %v46
    %v592 = vunpack.c.l.b16 %v47
    %v593 = vunpack.c.h.b16 %v47
    %v594 = vunpack.c.l.b16 %v48
    %v595 = vunpack.c.l.b16 %v49
    %v596 = vunpack.c.h.b16 %v49
    %v597 = vunpack.c.l.b16 %v50
    %v598 = vunpack.c.l.b16 %v51
    %v599 = vunpack.c.h.b16 %v51
    %v600 = vunpack.c.l.b16 %v52
    %v601 = vunpack.c.l.b16 %v53
    %v602 = vunpack.c.h.b16 %v53
    %v603 = vunpack.c.l.b16 %v54
    %v604 = vunpack.c.l.b16 %v55
    %v605 = vunpack.c.h.b16 %v55
    %v606 = vunpack.c.l.b16 %v56
    %v607 = vunpack.c.l.b16 %v57
    %v608 = vunpack.c.h.b16 %v57
    %v609 = vunpack.c.l.b16 %v58
    %v610 = vunpack.c.l.b16 %v59
    %v611 = vunpack.c.h.b16 %v59
    %v612 = vunpack.c.l.b16 %v60
    %v613 = vunpack.c.l.b16 %v61
    %v614 = vunpack.c.h.b16 %v61
    %v615 = vunpack.c.l.b16 %v62
    %v616 = vunpack.c.l.b16 %v63
    %v617 = vunpack.c.h.b16 %v63
    %v618 = vunpack.c.l.b16 %v64
    %v619 = vunpack.c.l.b16 %v65
    %v620 = vunpack.c.h.b16 %v65
    %v621 = vunpack.c.l.b16 %v66
    %v622 = vunpack.c.l.b16 %v67
    %v623 = vunpack.c.h.b16 %v67
    %v624 = vunpack.c.l.b16 %v68
    %v625 = vunpack.c.l.b16 %v69
    %v626 = vunpack.c.h.b16 %v69
    %v627 = vunpack.c.l.b16 %v70
    %v628 = vunpack.c.l.b16 %v71
    %v629 = vunpack.c.h.b16 %v71
    %v630 = vunpack.c.l.b16 %v72
    %v631 = vunpack.c.l.b16 %v73
    %v632 = vunpack.c.h.b16 %v73
    %v633 = vunpack.c.l.b16 %v74
    %v634 = vunpack.c.l.b16 %v75
    %v635 = vunpack.c.h.b16 %v75
    %v636 = vunpack.c.l.b16 %v76
    %v637 = vunpack.c.l.b16 %v77
    %v638 = vunpack.c.h.b16 %v77
    %v639 = vunpack.c.l.b16 %v78
    %v640 = vunpack.c.l.b16 %v79
    %v641 = vunpack.c.h.b16 %v79
    %v642 = vunpack.c.l.b16 %v80
    %v643 = vunpack.c.l.b16 %v81
    %v644 = vunpack.c.h.b16 %v81
    %v645 = vunpack.c.l.b16 %v82
    %v646 = vunpack.c.l.b16 %v83
    %v647 = vunpack.c.h.b16 %v83
    %v648 = vunpack.c.l.b16 %v84
    %v649 = vunpack.c.l.b16 %v85
    %v650 = vunpack.c.h.b16 %v85
    %v651 = vunpack.c.l.b16 %v86
    %v652 = vunpack.c.l.b16 %v87
    %v653 = vunpack.c.h.b16 %v87
    %v654 = vunpack.c.l.b16 %v88
    %v655 = vunpack.c.l.b16 %v89
    %v656 = vunpack.c.h.b16 %v89
    %v657 = vunpack.c.l.b16 %v90
    %v658 = vunpack.c.l.b16 %v91
    %v659 = vunpack.c.h.b16 %v91
    %v660 = vunpack.c.l.b16 %v92
    %v661 = vunpack.c.l.b16 %v93
    %v662 = vunpack.c.h.b16 %v93
    %v663 = vunpack.c.l.b16 %v94
    %v664 = vunpack.c.l.b16 %v95
    %v665 = vunpack.c.h.b16 %v95
    %v666 = vunpack.c.l.b16 %v96
    %v667 = vunpack.c.l.b16 %v97
    %v668 = vunpack.c.h.b16 %v97
    %v669 = vunpack.c.l.b16 %v98
    %v670 = vunpack.c.l.b16 %v99
    %v671 = vunpack.c.h.b16 %v99
    %v672 = vunpack.c.l.b16 %v100
    %v673 = vunpack.c.l.b16 %v101
    %v674 = vunpack.c.h.b16 %v101
    %v675 = vunpack.c.l.b16 %v102
    %v676 = vunpack.c.l.b16 %v103
    %v677 = vunpack.c.h.b16 %v103
    %v678 = vunpack.c.l.b16 %v104
    %v679 = vunpack.c.l.b16 %v105
    %v680 = vunpack.c.h.b16 %v105
    %v681 = vunpack.c.l.b16 %v106
    %v682 = vunpack.c.l.b16 %v107
    %v683 = vunpack.c.h.b16 %v107
    %v684 = vunpack.c.l.b16 %v108
    %v685 = vunpack.c.l.b16 %v109
    %v686 = vunpack.c.h.b16 %v109
    %v687 = vunpack.c.l.b16 %v110
    %v688 = vunpack.c.l.b16 %v111
    %v689 = vunpack.c.h.b16 %v111
    %v690 = vunpack.c.l.b16 %v112
    %v691 = vunpack.c.l.b16 %v113
    %v692 = vunpack.c.h.b16 %v113
    %v693 = vunpack.c.l.b16 %v114
    %v694 = vunpack.c.l.b16 %v115
    %v695 = vunpack.c.h.b16 %v115
    %v696 = vunpack.c.l.b16 %v116
    %v697 = vunpack.c.l.b16 %v117
    %v698 = vunpack.c.h.b16 %v117
    %v699 = vunpack.c.l.b16 %v118
    %v700 = vunpack.c.l.b16 %v119
    %v701 = vunpack.c.h.b16 %v119
    %v702 = vunpack.c.l.b16 %v120
    %v703 = vunpack.c.l.b16 %v121
    %v704 = vunpack.c.h.b16 %v121
    %v705 = vunpack.c.l.b16 %v122
    %v706 = vunpack.c.l.b16 %v123
    %v707 = vunpack.c.h.b16 %v123
    %v708 = vunpack.c.l.b16 %v124
    %v709 = vunpack.c.l.b16 %v125
    %v710 = vunpack.c.h.b16 %v125
    %v711 = vunpack.c.l.b16 %v126
    %v712 = vunpack.c.l.b16 %v127
    %v713 = vunpack.c.h.b16 %v127
    %v714 = vunpack.c.l.b16 %v128
    %v715 = vunpack.c.l.b16 %v129
    %v716 = vunpack.c.h.b16 %v129
    %v717 = vunpack.c.l.b16 %v130
    %v718 = vunpack.c.l.b16 %v131
    %v719 = vunpack.c.h.b16 %v131
    %v720 = vunpack.c.l.b16 %v132
    %v721 = vunpack.c.l.b16 %v133
    %v722 = vunpack.c.h.b16 %v133
    %v723 = vunpack.c.l.b16 %v134
    %v724 = vunpack.c.l.b16 %v135
    %v725 = vunpack.c.h.b16 %v135
    %v726 = vunpack.c.l.b16 %v136
    %v727 = vunpack.c.l.b16 %v137
    %v728 = vunpack.c.h.b16 %v137
    %v729 = vunpack.c.l.b16 %v138
    %v730 = vunpack.c.l.b16 %v139
    %v731 = vunpack.c.h.b16 %v139
    %v732 = vunpack.c.l.b16 %v140
    %v733 = vunpack.c.l.b16 %v141
    %v734 = vunpack.c.h.b16 %v141
    %v735 = vunpack.c.l.b16 %v142
    %v736 = vunpack.c.l.b16 %v143
    %v737 = vunpack.c.h.b16 %v143
    %v738 = vunpack.c.l.b16 %v144
    %v739 = vunpack.c.l.b16 %v145
    %v740 = vunpack.c.h.b16 %v145
    %v741 = vunpack.c.l.b16 %v146
    %v742 = vunpack.c.l.b16 %v147
    %v743 = vunpack.c.h.b16 %v147
    %v744 = vunpack.c.l.b16 %v148
    %v745 = vunpack.c.l.b16 %v149
    %v746 = vunpack.c.h.b16 %v149
    %v747 = vunpack.c.l.b16 %v150
    %v748 = vunpack.c.l.b16 %v151
    %v749 = vunpack.c.h.b16 %v151
    %v750 = vunpack.c.l.b16 %v152
    %v751 = vunpack.c.l.b16 %v153
    %v752 = vunpack.c.h.b16 %v153
    %v753 = vunpack.c.l.b16 %v154
    %v754 = vunpack.c.l.b16 %v155
    %v755 = vunpack.c.h.b16 %v155
    %v756 = vunpack.c.l.b16 %v156
    %v757 = vunpack.c.l.b16 %v157
    %v758 = vunpack.c.h.b16 %v157
    %v759 = vunpack.c.l.b16 %v158
    %v760 = vunpack.c.l.b16 %v159
    %v761 = vunpack.c.h.b16 %v159
    %v762 = vunpack.c.l.b16 %v160
    %v763 = vunpack.c.l.b16 %v161
    %v764 = vunpack.c.h.b16 %v161
    %v765 = vunpack.c.l.b16 %v162
    %v766 = vunpack.c.l.b16 %v163
    %v767 = vunpack.c.h.b16 %v163
    %v768 = vunpack.c.l.b16 %v164
    %v769 = vunpack.c.l.b16 %v165
    %v770 = vunpack.c.h.b16 %v165
    %v771 = vunpack.c.l.b16 %v166
    %v772 = vunpack.c.l.b16 %v167
    %v773 = vunpack.c.h.b16 %v167
    %v774 = vunpack.c.l.b16 %v168
    %v775 = vunpack.c.l.b16 %v169
    %v776 = vunpack.c.h.b16 %v169
    %v777 = vunpack.c.l.b16 %v170
    %v778 = vunpack.c.l.b16 %v171
    %v779 = vunpack.c.h.b16 %v171
    %v780 = vunpack.c.l.b16 %v172
    %v781 = vunpack.c.l.b16 %v173
    %v782 = vunpack.c.h.b16 %v173
    %v783 = vunpack.c.l.b16 %v174
    %v784 = vunpack.c.l.b16 %v175
    %v785 = vunpack.c.h.b16 %v175
    %v786 = vunpack.c.l.b16 %v176
    %v787 = vunpack.c.l.b16 %v177
    %v788 = vunpack.c.h.b16 %v177
    %v789 = vunpack.c.l.b16 %v178
    %v790 = vunpack.c.l.b16 %v179
    %v791 = vunpack.c.h.b16 %v179
    %v792 = vunpack.c.l.b16 %v180
    %v793 = vunpack.c.l.b16 %v181
    %v794 = vunpack.c.h.b16 %v181
    %v795 = vunpack.c.l.b16 %v182
    %v796 = vunpack.c.l.b16 %v183
    %v797 = vunpack.c.h.b16 %v183
    %v798 = vunpack.c.l.b16 %v184
    %v799 = vunpack.c.l.b16 %v185
    %v800 = vunpack.c.h.b16 %v185
    %v801 = vunpack.c.l.b16 %v186
    %v802 = vunpack.c.l.b16 %v187
    %v803 = vunpack.c.h.b16 %v187
    %v804 = vunpack.c.l.b16 %v188
    %v805 = vunpack.c.l.b16 %v189
    %v806 = vunpack.c.h.b16 %v189
    %v807 = vunpack.c.l.b16 %v190
    %v808 = vunpack.c.l.b16 %v191
    %v809 = vunpack.c.h.b16 %v191
    %v810 = vunpack.c.l.b16 %v192
    %v811 = vunpack.c.l.b16 %v193
    %v812 = vunpack.c.h.b16 %v193
    %v813 = vunpack.c.l.b16 %v194
    %v814 = vunpack.c.l.b16 %v195
    %v815 = vunpack.c.h.b16 %v195
    %v816 = vunpack.c.l.b16 %v196
    %v817 = vunpack.c.l.b16 %v197
    %v818 = vunpack.c.h.b16 %v197
    %v819 = vunpack.c.l.b16 %v198
    %v820 = vunpack.c.l.b16 %v199
    %v821 = vunpack.c.h.b16 %v199
    %v822 = vunpack.c.l.b16 %v200
    %v823 = vunpack.c.l.b16 %v201
    %v824 = vunpack.c.h.b16 %v201
    %v825 = vunpack.c.l.b16 %v202
    %v826 = vunpack.c.l.b16 %v203
    %v827 = vunpack.c.h.b16 %v203
    %v828 = vunpack.c.l.b16 %v204
    %v829 = vunpack.c.l.b16 %v205
    %v830 = vunpack.c.h.b16 %v205
    %v831 = vunpack.c.l.b16 %v206
    %v832 = vunpack.c.l.b16 %v207
    %v833 = vunpack.c.h.b16 %v207
    %v834 = vunpack.c.l.b16 %v208
    %v835 = vunpack.c.l.b16 %v209
    %v836 = vunpack.c.h.b16 %v209
    %v837 = vunpack.c.l.b16 %v210
    %v838 = vunpack.c.l.b16 %v211
    %v839 = vunpack.c.h.b16 %v211
    %v840 = vunpack.c.l.b16 %v212
    %v841 = vunpack.c.l.b16 %v213
    %v842 = vunpack.c.h.b16 %v213
    %v843 = vunpack.c.l.b16 %v214
    %v844 = vunpack.c.l.b16 %v215
    %v845 = vunpack.c.h.b16 %v215
    %v846 = vunpack.c.l.b16 %v216
    %v847 = vunpack.c.l.b16 %v217
    %v848 = vunpack.c.h.b16 %v217
    %v849 = vunpack.c.l.b16 %v218
    %v850 = vunpack.c.l.b16 %v219
    %v851 = vunpack.c.h.b16 %v219
    %v852 = vunpack.c.l.b16 %v220
    %v853 = vunpack.c.l.b16 %v221
    %v854 = vunpack.c.h.b16 %v221
    %v855 = vunpack.c.l.b16 %v222
    %v856 = vunpack.c.l.b16 %v223
    %v857 = vunpack.c.h.b16 %v223
    %v858 = vunpack.c.l.b16 %v224
    %v859 = vunpack.c.l.b16 %v225
    %v860 = vunpack.c.h.b16 %v225
    %v861 = vunpack.c.l.b16 %v226
    %v862 = vunpack.c.l.b16 %v227
    %v863 = vunpack.c.h.b16 %v227
    %v864 = vunpack.c.l.b16 %v228
    %v865 = vunpack.c.l.b16 %v229
    %v866 = vunpack.c.h.b16 %v229
    %v867 = vunpack.c.l.b16 %v230
    %v868 = vunpack.c.l.b16 %v231
    %v869 = vunpack.c.h.b16 %v231
    %v870 = vunpack.c.l.b16 %v232
    %v871 = vunpack.c.l.b16 %v233
    %v872 = vunpack.c.h.b16 %v233
    %v873 = vunpack.c.l.b16 %v234
    %v874 = vunpack.c.l.b16 %v235
    %v875 = vunpack.c.h.b16 %v235
    %v876 = vunpack.c.l.b16 %v236
    %v877 = vunpack.c.l.b16 %v237
    %v878 = vunpack.c.h.b16 %v237
    %v879 = vunpack.c.l.b16 %v238
    %v880 = vunpack.c.l.b16 %v239
    %v881 = vunpack.c.h.b16 %v239
    %v882 = vunpack.c.l.b16 %v240
    %v883 = vunpack.c.l.b16 %v241
    %v884 = vunpack.c.h.b16 %v241
    %v885 = vunpack.c.l.b16 %v242
    %v886 = vunpack.c.l.b16 %v243
    %v887 = vunpack.c.h.b16 %v243
    %v888 = vunpack.c.l.b16 %v244
    %v889 = vunpack.c.l.b16 %v245
    %v890 = vunpack.c.h.b16 %v245
    %v891 = vunpack.c.l.b16 %v246
    %v892 = vunpack.c.l.b16 %v247
    %v893 = vunpack.c.h.b16 %v247
    %v894 = vunpack.c.l.b16 %v248
    %v895 = vunpack.c.l.b16 %v249
    %v896 = vunpack.c.h.b16 %v249
    %v897 = vunpack.c.l.b16 %v250
    %v898 = vunpack.c.l.b16 %v251
    %v899 = vunpack.c.h.b16 %v251
    %v900 = vunpack.c.l.b16 %v252
    %v901 = vunpack.c.l.b16 %v253
    %v902 = vunpack.c.h.b16 %v253
    %v903 = vunpack.c.l.b16 %v254
    %v904 = vunpack.c.l.b16 %v255
    %v905 = vunpack.c.h.b16 %v255
    %v906 = vunpack.c.l.b16 %v256
    %v907 = vunpack.c.l.b16 %v257
    %v908 = vunpack.c.h.b16 %v257
    %v909 = vunpack.c.l.b16 %v258
    %v910 = vunpack.c.l.b16 %v259
    %v911 = vunpack.c.h.b16 %v259
    %v912 = vunpack.c.l.b16 %v260
    %v913 = vunpack.c.l.b16 %v261
    %v914 = vunpack.c.h.b16 %v261
    %v915 = vunpack.c.l.b16 %v262
    %v916 = vunpack.c.l.b16 %v263
    %v917 = vunpack.c.h.b16 %v263
    %v918 = vunpack.c.l.b16 %v264
    %v919 = vunpack.c.l.b16 %v265
    %v920 = vunpack.c.h.b16 %v265
    %v921 = vunpack.c.l.b16 %v266
    %v922 = vunpack.c.l.b16 %v267
    %v923 = vunpack.c.h.b16 %v267
    %v924 = vunpack.c.l.b16 %v268
    %v925 = vunpack.c.l.b16 %v269
    %v926 = vunpack.c.h.b16 %v269
    %v927 = vunpack.c.l.b16 %v270
    %v928 = vunpack.c.l.b16 %v271
    %v929 = vunpack.c.h.b16 %v271
    %v930 = vunpack.c.l.b16 %v272
    %v931 = vunpack.c.l.b16 %v273
    %v932 = vunpack.c.h.b16 %v273
    %v933 = vunpack.c.l.b16 %v274
    %v934 = vunpack.c.l.b16 %v275
    %v935 = vunpack.c.h.b16 %v275
    %v936 = vunpack.c.l.b16 %v276
    %v937 = vunpack.c.l.b16 %v277
    %v938 = vunpack.c.h.b16 %v277
    %v939 = vunpack.c.l.b16 %v278
    %v940 = vunpack.c.l.b16 %v279
    %v941 = vunpack.c.h.b16 %v279
    %v942 = vunpack.c.l.b16 %v280
    %v943 = vunpack.c.l.b16 %v281
    %v944 = vunpack.c.h.b16 %v281
    %v945 = vunpack.c.l.b16 %v282
    %v946 = vunpack.c.l.b16 %v283
    %v947 = vunpack.c.h.b16 %v283
    %v948 = vunpack.c.l.b16 %v284
    %v949 = vunpack.c.l.b16 %v285
    %v950 = vunpack.c.h.b16 %v285
    %v951 = vunpack.c.l.b16 %v286
    %v952 = vunpack.c.l.b16 %v287
    %v953 = vunpack.c.h.b16 %v287
    %v954 = vunpack.c.l.b16 %v288
    %v955 = vunpack.c.l.b16 %v289
    %v956 = vunpack.c.h.b16 %v289
    %v957 = vunpack.c.l.b16 %v290
    %v958 = vunpack.c.l.b16 %v291
    %v959 = vunpack.c.h.b16 %v291
    %v960 = vunpack.c.l.b16 %v292
    %v961 = vpack.c.b16 %v580, %v577
    %v962 = vpack.c.b16 %v581, %v578
    %v963 = vpack.c.b16 %v582, %v579
    %v964 = vpack.c.b16 %v586, %v583
    %v965 = vpack.c.b16 %v587, %v584
    %v966 = vpack.c.b16 %v588, %v585
    %v967 = vpack.c.b16 %v592, %v589
    %v968 = vpack.c.b16 %v593, %v590
    %v969 = vpack.c.b16 %v594, %v591
    %v970 = vpack.c.b16 %v598, %v595
    %v971 = vpack.c.b16 %v599, %v596
    %v972 = vpack.c.b16 %v600, %v597
    %v973 = vpack.c.b16 %v604, %v601
    %v974 = vpack.c.b16 %v605, %v602
    %v975 = vpack.c.b16 %v606, %v603
    %v976 = vpack.c.b16 %v610, %v607
    %v977 = vpack.c.b16 %v611, %v608
    %v978 = vpack.c.b16 %v612, %v609
    %v979 = vpack.c.b16 %v616, %v613
    %v980 = vpack.c.b16 %v617, %v614
    %v981 = vpack.c.b16 %v618, %v615
    %v982 = vpack.c.b16 %v622, %v619
    %v983 = vpack.c.b16 %v623, %v620
    %v984 = vpack.c.b16 %v624, %v621
    %v985 = vpack.c.b16 %v628, %v625
    %v986 = vpack.c.b16 %v629, %v626
    %v987 = vpack.c.b16 %v630, %v627
    %v988 = vpack.c.b16 %v634, %v631
    %v989 = vpack.c.b16 %v635, %v632
    %v990 = vpack.c.b16 %v636, %v633
    %v991 = vpack.c.b16 %v640, %v637
    %v992 = vpack.c.b16 %v641, %v638
    %v993 = vpack.c.b16 %v642, %v639
    %v994 = vpack.c.b16 %v646, %v643
    %v995 = vpack.c.b16 %v647, %v644
    %v996 = vpack.c.b16 %v648, %v645
    %v997 = vpack.c.b16 %v652, %v649
    %v998 = vpack.c.b16 %v653, %v650
    %v999 = vpack.c.b16 %v654, %v651
    %v1000 = vpack.c.b16 %v658, %v655
    %v1001 = vpack.c.b16 %v659, %v656
    %v1002 = vpack.c.b16 %v660, %v657
    %v1003 = vpack.c.b16 %v664, %v661
    %v1004 = vpack.c.b16 %v665, %v662
    %v1005 = vpack.c.b16 %v666, %v663
    %v1006 = vpack.c.b16 %v670, %v667
    %v1007 = vpack.c.b16 %v671, %v668
    %v1008 = vpack.c.b16 %v672, %v669
    %v1009 = vpack.c.b16 %v676, %v673
    %v1010 = vpack.c.b16 %v677, %v674
    %v1011 = vpack.c.b16 %v678, %v675
    %v1012 = vpack.c.b16 %v682, %v679
    %v1013 = vpack.c.b16 %v683, %v680
    %v1014 = vpack.c.b16 %v684, %v681
    %v1015 = vpack.c.b16 %v688, %v685
    %v1016 = vpack.c.b16 %v689, %v686
    %v1017 = vpack.c.b16 %v690, %v687
    %v1018 = vpack.c.b16 %v694, %v691
    %v1019 = vpack.c.b16 %v695, %v692
    %v1020 = vpack.c.b16 %v696, %v693
    %v1021 = vpack.c.b16 %v700, %v697
    %v1022 = vpack.c.b16 %v701, %v698
    %v1023 = vpack.c.b16 %v702, %v699
    %v1024 = vpack.c.b16 %v706, %v703
    %v1025 = vpack.c.b16 %v707, %v704
    %v1026 = vpack.c.b16 %v708, %v705
    %v1027 = vpack.c.b16 %v712, %v709
    %v1028 = vpack.c.b16 %v713, %v710
    %v1029 = vpack.c.b16 %v714, %v711
    %v1030 = vpack.c.b16 %v718, %v715
    %v1031 = vpack.c.b16 %v719, %v716
    %v1032 = vpack.c.b16 %v720, %v717
    %v1033 = vpack.c.b16 %v724, %v721
    %v1034 = vpack.c.b16 %v725, %v722
    %v1035 = vpack.c.b16 %v726, %v723
    %v1036 = vpack.c.b16 %v730, %v727
    %v1037 = vpack.c.b16 %v731, %v728
    %v1038 = vpack.c.b16 %v732, %v729
    %v1039 = vpack.c.b16 %v736, %v733
    %v1040 = vpack.c.b16 %v737, %v734
    %v1041 = vpack.c.b16 %v738, %v735
    %v1042 = vpack.c.b16 %v742, %v739
    %v1043 = vpack.c.b16 %v743, %v740
    %v1044 = vpack.c.b16 %v744, %v741
    %v1045 = vpack.c.b16 %v748, %v745
    %v1046 = vpack.c.b16 %v749, %v746
    %v1047 = vpack.c.b16 %v750, %v747
    %v1048 = vpack.c.b16 %v754, %v751
    %v1049 = vpack.c.b16 %v755, %v752
    %v1050 = vpack.c.b16 %v756, %v753
    %v1051 = vpack.c.b16 %v760, %v757
    %v1052 = vpack.c.b16 %v761, %v758
    %v1053 = vpack.c.b16 %v762, %v759
    %v1054 = vpack.c.b16 %v766, %v763
    %v1055 = vpack.c.b16 %v767, %v764
    %v1056 = vpack.c.b16 %v768, %v765
    %v1057 = vpack.c.b16 %v772, %v769
    %v1058 = vpack.c.b16 %v773, %v770
    %v1059 = vpack.c.b16 %v774, %v771
    %v1060 = vpack.c.b16 %v778, %v775
    %v1061 = vpack.c.b16 %v779, %v776
    %v1062 = vpack.c.b16 %v780, %v777
    %v1063 = vpack.c.b16 %v784, %v781
    %v1064 = vpack.c.b16 %v785, %v782
    %v1065 = vpack.c.b16 %v786, %v783
    %v1066 = vpack.c.b16 %v790, %v787
    %v1067 = vpack.c.b16 %v791, %v788
    %v1068 = vpack.c.b16 %v792, %v789
    %v1069 = vpack.c.b16 %v796, %v793
    %v1070 = vpack.c.b16 %v797, %v794
    %v1071 = vpack.c.b16 %v798, %v795
    %v1072 = vpack.c.b16 %v802, %v799
    %v1073 = vpack.c.b16 %v803, %v800
    %v1074 = vpack.c.b16 %v804, %v801
    %v1075 = vpack.c.b16 %v808, %v805
    %v1076 = vpack.c.b16 %v809, %v806
    %v1077 = vpack.c.b16 %v810, %v807
    %v1078 = vpack.c.b16 %v814, %v811
    %v1079 = vpack.c.b16 %v815, %v812
    %v1080 = vpack.c.b16 %v816, %v813
    %v1081 = vpack.c.b16 %v820, %v817
    %v1082 = vpack.c.b16 %v821, %v818
    %v1083 = vpack.c.b16 %v822, %v819
    %v1084 = vpack.c.b16 %v826, %v823
    %v1085 = vpack.c.b16 %v827, %v824
    %v1086 = vpack.c.b16 %v828, %v825
    %v1087 = vpack.c.b16 %v832, %v829
    %v1088 = vpack.c.b16 %v833, %v830
    %v1089 = vpack.c.b16 %v834, %v831
    %v1090 = vpack.c.b16 %v838, %v835
    %v1091 = vpack.c.b16 %v839, %v836
    %v1092 = vpack.c.b16 %v840, %v837
    %v1093 = vpack.c.b16 %v844, %v841
    %v1094 = vpack.c.b16 %v845, %v842
    %v1095 = vpack.c.b16 %v846, %v843
    %v1096 = vpack.c.b16 %v850, %v847
    %v1097 = vpack.c.b16 %v851, %v848
    %v1098 = vpack.c.b16 %v852, %v849
    %v1099 = vpack.c.b16 %v856, %v853
    %v1100 = vpack.c.b16 %v857, %v854
    %v1101 = vpack.c.b16 %v858, %v855
    %v1102 = vpack.c.b16 %v862, %v859
    %v1103 = vpack.c.b16 %v863, %v860
    %v1104 = vpack.c.b16 %v864, %v861
    %v1105 = vpack.c.b16 %v868, %v865
    %v1106 = vpack.c.b16 %v869, %v866
    %v1107 = vpack.c.b16 %v870, %v867
    %v1108 = vpack.c.b16 %v874, %v871
    %v1109 = vpack.c.b16 %v875, %v872
    %v1110 = vpack.c.b16 %v876, %v873
    %v1111 = vpack.c.b16 %v880, %v877
    %v1112 = vpack.c.b16 %v881, %v878
    %v1113 = vpack.c.b16 %v882, %v879
    %v1114 = vpack.c.b16 %v886, %v883
    %v1115 = vpack.c.b16 %v887, %v884
    %v1116 = vpack.c.b16 %v888, %v885
    %v1117 = vpack.c.b16 %v892, %v889
    %v1118 = vpack.c.b16 %v893, %v890
    %v1119 = vpack.c.b16 %v894, %v891
    %v1120 = vpack.c.b16 %v898, %v895
    %v1121 = vpack.c.b16 %v899, %v896
    %v1122 = vpack.c.b16 %v900, %v897
    %v1123 = vpack.c.b16 %v904, %v901
    %v1124 = vpack.c.b16 %v905, %v902
    %v1125 = vpack.c.b16 %v906, %v903
    %v1126 = vpack.c.b16 %v910, %v907
    %v1127 = vpack.c.b16 %v911, %v908
    %v1128 = vpack.c.b16 %v912, %v909
    %v1129 = vpack.c.b16 %v916, %v913
    %v1130 = vpack.c.b16 %v917, %v914
    %v1131 = vpack.c.b16 %v918, %v915
    %v1132 = vpack.c.b16 %v922, %v919
    %v1133 = vpack.c.b16 %v923, %v920
    %v1134 = vpack.c.b16 %v924, %v921
    %v1135 = vpack.c.b16 %v928, %v925
    %v1136 = vpack.c.b16 %v929, %v926
    %v1137 = vpack.c.b16 %v930, %v927
    %v1138 = vpack.c.b16 %v934, %v931
    %v1139 = vpack.c.b16 %v935, %v932
    %v1140 = vpack.c.b16 %v936, %v933
    %v1141 = vpack.c.b16 %v940, %v937
    %v1142 = vpack.c.b16 %v941, %v938
    %v1143 = vpack.c.b16 %v942, %v939
    %v1144 = vpack.c.b16 %v946, %v943
    %v1145 = vpack.c.b16 %v947, %v944
    %v1146 = vpack.c.b16 %v948, %v945
    %v1147 = vpack.c.b16 %v952, %v949
    %v1148 = vpack.c.b16 %v953, %v950
    %v1149 = vpack.c.b16 %v954, %v951
    %v1150 = vpack.c.b16 %v958, %v955
    %v1151 = vpack.c.b16 %v959, %v956
    %v1152 = vpack.c.b16 %v960, %v957
    %1345 = vmatprep.subr.bf16.mxu0 %v962
    %1346 = vmatpush1.bf16.msra.mxu0 %v961
    %1347 = vmatprep.subr.bf16.mxu0 %v965
    %1348 = vmatpush1.bf16.msra.mxu0 %v964
    %1349 = vmatprep.subr.bf16.mxu0 %v968
    %1350 = vmatpush1.bf16.msra.mxu0 %v967
    %1351 = vmatprep.subr.bf16.mxu0 %v971
    %1352 = vmatpush1.bf16.msra.mxu0 %v970
    %1353 = vmatprep.subr.bf16.mxu0 %v974
    %1354 = vmatpush1.bf16.msra.mxu0 %v973
    %1355 = vmatprep.subr.bf16.mxu0 %v977
    %1356 = vmatpush1.bf16.msra.mxu0 %v976
    %1357 = vmatprep.subr.bf16.mxu0 %v980
    %1358 = vmatpush1.bf16.msra.mxu0 %v979
    %1359 = vmatprep.subr.bf16.mxu0 %v983
    %1360 = vmatpush1.bf16.msra.mxu0 %v982
    %1361 = vmatprep.subr.bf16.mxu0 %v986
    %1362 = vmatpush1.bf16.msra.mxu0 %v985
    %1363 = vmatprep.subr.bf16.mxu0 %v989
    %1364 = vmatpush1.bf16.msra.mxu0 %v988
    %1365 = vmatprep.subr.bf16.mxu0 %v992
    %1366 = vmatpush1.bf16.msra.mxu0 %v991
    %1367 = vmatprep.subr.bf16.mxu0 %v995
    %1368 = vmatpush1.bf16.msra.mxu0 %v994
    %1369 = vmatprep.subr.bf16.mxu0 %v998
    %1370 = vmatpush1.bf16.msra.mxu0 %v997
    %1371 = vmatprep.subr.bf16.mxu0 %v1001
    %1372 = vmatpush1.bf16.msra.mxu0 %v1000
    %1373 = vmatprep.subr.bf16.mxu0 %v1004
    %1374 = vmatpush1.bf16.msra.mxu0 %v1003
    %1375 = vmatprep.subr.bf16.mxu0 %v1007
    %1376 = vmatpush1.bf16.msra.mxu0 %v1006
    %1377 = vmatprep.mubr.bf16.mxu0 %v306
    %1378 = vmatmul.mubr.bf16.gmra.mrb[0].mxu0 %v305
    %v1379 = vpop.f32.mrb[0].mxu0
    %v1380 = vadd.f32 0.0, %v1379
    %v1381 = vpop.f32.mrb[0].mxu0
    %v1382 = vadd.f32 0.0, %v1381
    %v1383 = vpop.f32.mrb[0].mxu0
    %v1384 = vpop.f32.mrb[0].mxu0
    %1385 = vdwg.mxu0
    %1386 = vmatprep.subr.bf16.mxu0 %v1010
    %1387 = vmatpush1.bf16.msra.mxu0 %v1009
    %1388 = vmatprep.subr.bf16.mxu0 %v1013
    %1389 = vmatpush1.bf16.msra.mxu0 %v1012
    %1390 = vmatprep.subr.bf16.mxu0 %v1016
    %1391 = vmatpush1.bf16.msra.mxu0 %v1015
    %1392 = vmatprep.subr.bf16.mxu0 %v1019
    %1393 = vmatpush1.bf16.msra.mxu0 %v1018
    %1394 = vmatprep.subr.bf16.mxu0 %v1022
    %1395 = vmatpush1.bf16.msra.mxu0 %v1021
    %1396 = vmatprep.subr.bf16.mxu0 %v1025
    %1397 = vmatpush1.bf16.msra.mxu0 %v1024
    %1398 = vmatprep.subr.bf16.mxu0 %v1028
    %1399 = vmatpush1.bf16.msra.mxu0 %v1027
    %1400 = vmatprep.subr.bf16.mxu0 %v1031
    %1401 = vmatpush1.bf16.msra.mxu0 %v1030
    %1402 = vmatprep.subr.bf16.mxu0 %v1034
    %1403 = vmatpush1.bf16.msra.mxu0 %v1033
    %1404 = vmatprep.subr.bf16.mxu0 %v1037
    %1405 = vmatpush1.bf16.msra.mxu0 %v1036
    %1406 = vmatprep.subr.bf16.mxu0 %v1040
    %1407 = vmatpush1.bf16.msra.mxu0 %v1039
    %1408 = vmatprep.subr.bf16.mxu0 %v1043
    %1409 = vmatpush1.bf16.msra.mxu0 %v1042
    %1410 = vmatprep.subr.bf16.mxu0 %v1046
    %1411 = vmatpush1.bf16.msra.mxu0 %v1045
    %1412 = vmatprep.subr.bf16.mxu0 %v1049
    %1413 = vmatpush1.bf16.msra.mxu0 %v1048
    %1414 = vmatprep.subr.bf16.mxu0 %v1052
    %1415 = vmatpush1.bf16.msra.mxu0 %v1051
    %1416 = vmatprep.subr.bf16.mxu0 %v1055
    %1417 = vmatpush1.bf16.msra.mxu0 %v1054
    %1418 = vmatprep.mubr.bf16.mxu0 %v308
    %1419 = vmatmul.mubr.bf16.gmra.mrb[0].mxu0 %v307
    %v1420 = vpop.f32.mrb[0].mxu0
    %v1421 = vadd.f32 %v1380, %v1420
    %v1422 = vpop.f32.mrb[0].mxu0
    %v1423 = vadd.f32 %v1382, %v1422
    %v1424 = vpop.f32.mrb[0].mxu0
    %v1425 = vpop.f32.mrb[0].mxu0
    %1426 = vdwg.mxu0
    %1427 = vmatprep.subr.bf16.mxu0 %v1058
    %1428 = vmatpush1.bf16.msra.mxu0 %v1057
    %1429 = vmatprep.subr.bf16.mxu0 %v1061
    %1430 = vmatpush1.bf16.msra.mxu0 %v1060
    %1431 = vmatprep.subr.bf16.mxu0 %v1064
    %1432 = vmatpush1.bf16.msra.mxu0 %v1063
    %1433 = vmatprep.subr.bf16.mxu0 %v1067
    %1434 = vmatpush1.bf16.msra.mxu0 %v1066
    %1435 = vmatprep.subr.bf16.mxu0 %v1070
    %1436 = vmatpush1.bf16.msra.mxu0 %v1069
    %1437 = vmatprep.subr.bf16.mxu0 %v1073
    %1438 = vmatpush1.bf16.msra.mxu0 %v1072
    %1439 = vmatprep.subr.bf16.mxu0 %v1076
    %1440 = vmatpush1.bf16.msra.mxu0 %v1075
    %1441 = vmatprep.subr.bf16.mxu0 %v1079
    %1442 = vmatpush1.bf16.msra.mxu0 %v1078
    %1443 = vmatprep.subr.bf16.mxu0 %v1082
    %1444 = vmatpush1.bf16.msra.mxu0 %v1081
    %1445 = vmatprep.subr.bf16.mxu0 %v1085
    %1446 = vmatpush1.bf16.msra.mxu0 %v1084
    %1447 = vmatprep.subr.bf16.mxu0 %v1088
    %1448 = vmatpush1.bf16.msra.mxu0 %v1087
    %1449 = vmatprep.subr.bf16.mxu0 %v1091
    %1450 = vmatpush1.bf16.msra.mxu0 %v1090
    %1451 = vmatprep.subr.bf16.mxu0 %v1094
    %1452 = vmatpush1.bf16.msra.mxu0 %v1093
    %1453 = vmatprep.subr.bf16.mxu0 %v1097
    %1454 = vmatpush1.bf16.msra.mxu0 %v1096
    %1455 = vmatprep.subr.bf16.mxu0 %v1100
    %1456 = vmatpush1.bf16.msra.mxu0 %v1099
    %1457 = vmatprep.subr.bf16.mxu0 %v1103
    %1458 = vmatpush1.bf16.msra.mxu0 %v1102
    %1459 = vmatprep.mubr.bf16.mxu0 %v310
    %1460 = vmatmul.mubr.bf16.gmra.mrb[0].mxu0 %v309
    %v1461 = vpop.f32.mrb[0].mxu0
    %v1462 = vadd.f32 %v1421, %v1461
    %v1463 = vpop.f32.mrb[0].mxu0
    %v1464 = vadd.f32 %v1423, %v1463
    %v1465 = vpop.f32.mrb[0].mxu0
    %v1466 = vpop.f32.mrb[0].mxu0
    %1467 = vdwg.mxu0
    %1468 = vmatprep.subr.bf16.mxu0 %v1106
    %1469 = vmatpush1.bf16.msra.mxu0 %v1105
    %1470 = vmatprep.subr.bf16.mxu0 %v1109
    %1471 = vmatpush1.bf16.msra.mxu0 %v1108
    %1472 = vmatprep.subr.bf16.mxu0 %v1112
    %1473 = vmatpush1.bf16.msra.mxu0 %v1111
    %1474 = vmatprep.subr.bf16.mxu0 %v1115
    %1475 = vmatpush1.bf16.msra.mxu0 %v1114
    %1476 = vmatprep.subr.bf16.mxu0 %v1118
    %1477 = vmatpush1.bf16.msra.mxu0 %v1117
    %1478 = vmatprep.subr.bf16.mxu0 %v1121
    %1479 = vmatpush1.bf16.msra.mxu0 %v1120
    %1480 = vmatprep.subr.bf16.mxu0 %v1124
    %1481 = vmatpush1.bf16.msra.mxu0 %v1123
    %1482 = vmatprep.subr.bf16.mxu0 %v1127
    %1483 = vmatpush1.bf16.msra.mxu0 %v1126
    %1484 = vmatprep.subr.bf16.mxu0 %v1130
    %1485 = vmatpush1.bf16.msra.mxu0 %v1129
    %1486 = vmatprep.subr.bf16.mxu0 %v1133
    %1487 = vmatpush1.bf16.msra.mxu0 %v1132
    %1488 = vmatprep.subr.bf16.mxu0 %v1136
    %1489 = vmatpush1.bf16.msra.mxu0 %v1135
    %1490 = vmatprep.subr.bf16.mxu0 %v1139
    %1491 = vmatpush1.bf16.msra.mxu0 %v1138
    %1492 = vmatprep.subr.bf16.mxu0 %v1142
    %1493 = vmatpush1.bf16.msra.mxu0 %v1141
    %1494 = vmatprep.subr.bf16.mxu0 %v1145
    %1495 = vmatpush1.bf16.msra.mxu0 %v1144
    %1496 = vmatprep.subr.bf16.mxu0 %v1148
    %1497 = vmatpush1.bf16.msra.mxu0 %v1147
    %1498 = vmatprep.subr.bf16.mxu0 %v1151
    %1499 = vmatpush1.bf16.msra.mxu0 %v1150
    %1500 = vmatprep.mubr.bf16.mxu0 %v312
    %1501 = vmatmul.mubr.bf16.gmra.mrb[0].mxu0 %v311
    %v1502 = vpop.f32.mrb[0].mxu0
    %v1503 = vadd.f32 %v1462, %v1502
    %v1504 = vpop.f32.mrb[0].mxu0
    %v1505 = vadd.f32 %v1464, %v1504
    %v1506 = vpop.f32.mrb[0].mxu0
    %v1507 = vpop.f32.mrb[0].mxu0
    %1508 = vdwg.mxu0
    %1509 = vmatprep.subr.bf16.mxu0 0
    %1510 = vmatpush1.bf16.msra.mxu0 %v963
    %1511 = vmatprep.subr.bf16.mxu0 0
    %1512 = vmatpush1.bf16.msra.mxu0 %v966
    %1513 = vmatprep.subr.bf16.mxu0 0
    %1514 = vmatpush1.bf16.msra.mxu0 %v969
    %1515 = vmatprep.subr.bf16.mxu0 0
    %1516 = vmatpush1.bf16.msra.mxu0 %v972
    %1517 = vmatprep.subr.bf16.mxu0 0
    %1518 = vmatpush1.bf16.msra.mxu0 %v975
    %1519 = vmatprep.subr.bf16.mxu0 0
    %1520 = vmatpush1.bf16.msra.mxu0 %v978
    %1521 = vmatprep.subr.bf16.mxu0 0
    %1522 = vmatpush1.bf16.msra.mxu0 %v981
    %1523 = vmatprep.subr.bf16.mxu0 0
    %1524 = vmatpush1.bf16.msra.mxu0 %v984
    %1525 = vmatprep.subr.bf16.mxu0 0
    %1526 = vmatpush1.bf16.msra.mxu0 %v987
    %1527 = vmatprep.subr.bf16.mxu0 0
    %1528 = vmatpush1.bf16.msra.mxu0 %v990
    %1529 = vmatprep.subr.bf16.mxu0 0
    %1530 = vmatpush1.bf16.msra.mxu0 %v993
    %1531 = vmatprep.subr.bf16.mxu0 0
    %1532 = vmatpush1.bf16.msra.mxu0 %v996
    %1533 = vmatprep.subr.bf16.mxu0 0
    %1534 = vmatpush1.bf16.msra.mxu0 %v999
    %1535 = vmatprep.subr.bf16.mxu0 0
    %1536 = vmatpush1.bf16.msra.mxu0 %v1002
    %1537 = vmatprep.subr.bf16.mxu0 0
    %1538 = vmatpush1.bf16.msra.mxu0 %v1005
    %1539 = vmatprep.subr.bf16.mxu0 0
    %1540 = vmatpush1.bf16.msra.mxu0 %v1008
    %1541 = vmatprep.mubr.bf16.mxu0 %v306
    %1542 = vmatmul.mubr.bf16.gmra.mrb[0].mxu0 %v305
    %v1543 = vpop.f32.mrb[0].mxu0
    %v1544 = vadd.f32 0.0, %v1543
    %v1545 = vpop.f32.mrb[0].mxu0
    %v1546 = vpop.f32.mrb[0].mxu0
    %v1547 = vpop.f32.mrb[0].mxu0
    %1548 = vdwg.mxu0
    %1549 = vmatprep.subr.bf16.mxu0 0
    %1550 = vmatpush1.bf16.msra.mxu0 %v1011
    %1551 = vmatprep.subr.bf16.mxu0 0
    %1552 = vmatpush1.bf16.msra.mxu0 %v1014
    %1553 = vmatprep.subr.bf16.mxu0 0
    %1554 = vmatpush1.bf16.msra.mxu0 %v1017
    %1555 = vmatprep.subr.bf16.mxu0 0
    %1556 = vmatpush1.bf16.msra.mxu0 %v1020
    %1557 = vmatprep.subr.bf16.mxu0 0
    %1558 = vmatpush1.bf16.msra.mxu0 %v1023
    %1559 = vmatprep.subr.bf16.mxu0 0
    %1560 = vmatpush1.bf16.msra.mxu0 %v1026
    %1561 = vmatprep.subr.bf16.mxu0 0
    %1562 = vmatpush1.bf16.msra.mxu0 %v1029
    %1563 = vmatprep.subr.bf16.mxu0 0
    %1564 = vmatpush1.bf16.msra.mxu0 %v1032
    %1565 = vmatprep.subr.bf16.mxu0 0
    %1566 = vmatpush1.bf16.msra.mxu0 %v1035
    %1567 = vmatprep.subr.bf16.mxu0 0
    %1568 = vmatpush1.bf16.msra.mxu0 %v1038
    %1569 = vmatprep.subr.bf16.mxu0 0
    %1570 = vmatpush1.bf16.msra.mxu0 %v1041
    %1571 = vmatprep.subr.bf16.mxu0 0
    %1572 = vmatpush1.bf16.msra.mxu0 %v1044
    %1573 = vmatprep.subr.bf16.mxu0 0
    %1574 = vmatpush1.bf16.msra.mxu0 %v1047
    %1575 = vmatprep.subr.bf16.mxu0 0
    %1576 = vmatpush1.bf16.msra.mxu0 %v1050
    %1577 = vmatprep.subr.bf16.mxu0 0
    %1578 = vmatpush1.bf16.msra.mxu0 %v1053
    %1579 = vmatprep.subr.bf16.mxu0 0
    %1580 = vmatpush1.bf16.msra.mxu0 %v1056
    %1581 = vmatprep.mubr.bf16.mxu0 %v308
    %1582 = vmatmul.mubr.bf16.gmra.mrb[0].mxu0 %v307
    %v1583 = vpop.f32.mrb[0].mxu0
    %v1584 = vadd.f32 %v1544, %v1583
    %v1585 = vpop.f32.mrb[0].mxu0
    %v1586 = vpop.f32.mrb[0].mxu0
    %v1587 = vpop.f32.mrb[0].mxu0
    %1588 = vdwg.mxu0
    %1589 = vmatprep.subr.bf16.mxu0 0
    %1590 = vmatpush1.bf16.msra.mxu0 %v1059
    %1591 = vmatprep.subr.bf16.mxu0 0
    %1592 = vmatpush1.bf16.msra.mxu0 %v1062
    %1593 = vmatprep.subr.bf16.mxu0 0
    %1594 = vmatpush1.bf16.msra.mxu0 %v1065
    %1595 = vmatprep.subr.bf16.mxu0 0
    %1596 = vmatpush1.bf16.msra.mxu0 %v1068
    %1597 = vmatprep.subr.bf16.mxu0 0
    %1598 = vmatpush1.bf16.msra.mxu0 %v1071
    %1599 = vmatprep.subr.bf16.mxu0 0
    %1600 = vmatpush1.bf16.msra.mxu0 %v1074
    %1601 = vmatprep.subr.bf16.mxu0 0
    %1602 = vmatpush1.bf16.msra.mxu0 %v1077
    %1603 = vmatprep.subr.bf16.mxu0 0
    %1604 = vmatpush1.bf16.msra.mxu0 %v1080
    %1605 = vmatprep.subr.bf16.mxu0 0
    %1606 = vmatpush1.bf16.msra.mxu0 %v1083
    %1607 = vmatprep.subr.bf16.mxu0 0
    %1608 = vmatpush1.bf16.msra.mxu0 %v1086
    %1609 = vmatprep.subr.bf16.mxu0 0
    %1610 = vmatpush1.bf16.msra.mxu0 %v1089
    %1611 = vmatprep.subr.bf16.mxu0 0
    %1612 = vmatpush1.bf16.msra.mxu0 %v1092
    %1613 = vmatprep.subr.bf16.mxu0 0
    %1614 = vmatpush1.bf16.msra.mxu0 %v1095
    %1615 = vmatprep.subr.bf16.mxu0 0
    %1616 = vmatpush1.bf16.msra.mxu0 %v1098
    %1617 = vmatprep.subr.bf16.mxu0 0
    %1618 = vmatpush1.bf16.msra.mxu0 %v1101
    %1619 = vmatprep.subr.bf16.mxu0 0
    %1620 = vmatpush1.bf16.msra.mxu0 %v1104
    %1621 = vmatprep.mubr.bf16.mxu0 %v310
    %1622 = vmatmul.mubr.bf16.gmra.mrb[0].mxu0 %v309
    %v1623 = vpop.f32.mrb[0].mxu0
    %v1624 = vadd.f32 %v1584, %v1623
    %v1625 = vpop.f32.mrb[0].mxu0
    %v1626 = vpop.f32.mrb[0].mxu0
    %v1627 = vpop.f32.mrb[0].mxu0
    %1628 = vdwg.mxu0
    %1629 = vmatprep.subr.bf16.mxu0 0
    %1630 = vmatpush1.bf16.msra.mxu0 %v1107
    %1631 = vmatprep.subr.bf16.mxu0 0
    %1632 = vmatpush1.bf16.msra.mxu0 %v1110
    %1633 = vmatprep.subr.bf16.mxu0 0
    %1634 = vmatpush1.bf16.msra.mxu0 %v1113
    %1635 = vmatprep.subr.bf16.mxu0 0
    %1636 = vmatpush1.bf16.msra.mxu0 %v1116
    %1637 = vmatprep.subr.bf16.mxu0 0
    %1638 = vmatpush1.bf16.msra.mxu0 %v1119
    %1639 = vmatprep.subr.bf16.mxu0 0
    %1640 = vmatpush1.bf16.msra.mxu0 %v1122
    %1641 = vmatprep.subr.bf16.mxu0 0
    %1642 = vmatpush1.bf16.msra.mxu0 %v1125
    %1643 = vmatprep.subr.bf16.mxu0 0
    %1644 = vmatpush1.bf16.msra.mxu0 %v1128
    %1645 = vmatprep.subr.bf16.mxu0 0
    %1646 = vmatpush1.bf16.msra.mxu0 %v1131
    %1647 = vmatprep.subr.bf16.mxu0 0
    %1648 = vmatpush1.bf16.msra.mxu0 %v1134
    %1649 = vmatprep.subr.bf16.mxu0 0
    %1650 = vmatpush1.bf16.msra.mxu0 %v1137
    %1651 = vmatprep.subr.bf16.mxu0 0
    %1652 = vmatpush1.bf16.msra.mxu0 %v1140
    %1653 = vmatprep.subr.bf16.mxu0 0
    %1654 = vmatpush1.bf16.msra.mxu0 %v1143
    %1655 = vmatprep.subr.bf16.mxu0 0
    %1656 = vmatpush1.bf16.msra.mxu0 %v1146
    %1657 = vmatprep.subr.bf16.mxu0 0
    %1658 = vmatpush1.bf16.msra.mxu0 %v1149
    %1659 = vmatprep.subr.bf16.mxu0 0
    %1660 = vmatpush1.bf16.msra.mxu0 %v1152
    %1661 = vmatprep.mubr.bf16.mxu0 %v312
    %1662 = vmatmul.mubr.bf16.gmra.mrb[0].mxu0 %v311
    %v1663 = vpop.f32.mrb[0].mxu0
    %v1664 = vadd.f32 %v1624, %v1663
    %v1665 = vpop.f32.mrb[0].mxu0
    %v1666 = vpop.f32.mrb[0].mxu0
    %v1667 = vpop.f32.mrb[0].mxu0
    %1668 = vdwg.mxu0
    %v1669 = vlaneseq
    %v1670 = vand.u32 %v1669, 127
    %v1671 = vadd.s32 %v1670, 128
    %v1672 = vlaneseq
    %v1673 = vshrl.u32 %v1672, 7
    %v1674 = vadd.s32 %v1673, 8
    %v1675 = vadd.s32 %v1673, 16
    %v1676 = vadd.s32 %v1673, 24
    %v1677 = vadd.s32 %v1673, 32
    %v1678 = vadd.s32 %v1673, 40
    %v1679 = vadd.s32 %v1673, 48
    %v1680 = vadd.s32 %v1673, 56
    %v1681 = vadd.s32 %v1673, 64
    %v1682 = vadd.s32 %v1673, 72
    %v1683 = vadd.s32 %v1673, 80
    %v1684 = vadd.s32 %v1673, 88
    %v1685 = vadd.s32 %v1673, 96
    %v1686 = vadd.s32 %v1673, 104
    %v1687 = vadd.s32 %v1673, 112
    %v1688 = vadd.s32 %v1673, 120
    %v1689 = vadd.s32 %v1673, 128
    %v1690 = vadd.s32 %v1673, 136
    %v1691 = vadd.s32 %v1673, 144
    %v1692 = vadd.s32 %v1673, 152
    %v1693 = vadd.s32 %v1673, 160
    %v1694 = vadd.s32 %v1673, 168
    %v1695 = vadd.s32 %v1673, 176
    %v1696 = vadd.s32 %v1673, 184
    %v1697 = vadd.s32 %v1673, 192
    %v1698 = vadd.s32 %v1673, 200
    %v1699 = vadd.s32 %v1673, 208
    %v1700 = vadd.s32 %v1673, 216
    %v1701 = vadd.s32 %v1673, 224
    %v1702 = vadd.s32 %v1673, 232
    %v1703 = vadd.s32 %v1673, 240
    %v1704 = vadd.s32 %v1673, 248
    %vm1705 = vcmp.lt.s32.totalorder %v1673, %v1670
    %vm1706 = vcmp.lt.s32.totalorder %v1673, %v1671
    %vm1707 = vcmp.lt.s32.totalorder %v1674, %v1670
    %vm1708 = vcmp.lt.s32.totalorder %v1674, %v1671
    %vm1709 = vcmp.lt.s32.totalorder %v1675, %v1670
    %vm1710 = vcmp.lt.s32.totalorder %v1675, %v1671
    %vm1711 = vcmp.lt.s32.totalorder %v1676, %v1670
    %vm1712 = vcmp.lt.s32.totalorder %v1676, %v1671
    %vm1713 = vcmp.lt.s32.totalorder %v1677, %v1670
    %vm1714 = vcmp.lt.s32.totalorder %v1677, %v1671
    %vm1715 = vcmp.lt.s32.totalorder %v1678, %v1670
    %vm1716 = vcmp.lt.s32.totalorder %v1678, %v1671
    %vm1717 = vcmp.lt.s32.totalorder %v1679, %v1670
    %vm1718 = vcmp.lt.s32.totalorder %v1679, %v1671
    %vm1719 = vcmp.lt.s32.totalorder %v1680, %v1670
    %vm1720 = vcmp.lt.s32.totalorder %v1680, %v1671
    %vm1721 = vcmp.lt.s32.totalorder %v1681, %v1670
    %vm1722 = vcmp.lt.s32.totalorder %v1681, %v1671
    %vm1723 = vcmp.lt.s32.totalorder %v1682, %v1670
    %vm1724 = vcmp.lt.s32.totalorder %v1682, %v1671
    %vm1725 = vcmp.lt.s32.totalorder %v1683, %v1670
    %vm1726 = vcmp.lt.s32.totalorder %v1683, %v1671
    %vm1727 = vcmp.lt.s32.totalorder %v1684, %v1670
    %vm1728 = vcmp.lt.s32.totalorder %v1684, %v1671
    %vm1729 = vcmp.lt.s32.totalorder %v1685, %v1670
    %vm1730 = vcmp.lt.s32.totalorder %v1685, %v1671
    %vm1731 = vcmp.lt.s32.totalorder %v1686, %v1670
    %vm1732 = vcmp.lt.s32.totalorder %v1686, %v1671
    %vm1733 = vcmp.lt.s32.totalorder %v1687, %v1670
    %vm1734 = vcmp.lt.s32.totalorder %v1687, %v1671
    %vm1735 = vcmp.lt.s32.totalorder %v1688, %v1670
    %vm1736 = vcmp.lt.s32.totalorder %v1688, %v1671
    %vm1737 = vcmp.lt.s32.totalorder %v1689, %v1670
    %vm1738 = vcmp.lt.s32.totalorder %v1689, %v1671
    %vm1739 = vcmp.lt.s32.totalorder %v1690, %v1670
    %vm1740 = vcmp.lt.s32.totalorder %v1690, %v1671
    %vm1741 = vcmp.lt.s32.totalorder %v1691, %v1670
    %vm1742 = vcmp.lt.s32.totalorder %v1691, %v1671
    %vm1743 = vcmp.lt.s32.totalorder %v1692, %v1670
    %vm1744 = vcmp.lt.s32.totalorder %v1692, %v1671
    %vm1745 = vcmp.lt.s32.totalorder %v1693, %v1670
    %vm1746 = vcmp.lt.s32.totalorder %v1693, %v1671
    %vm1747 = vcmp.lt.s32.totalorder %v1694, %v1670
    %vm1748 = vcmp.lt.s32.totalorder %v1694, %v1671
    %vm1749 = vcmp.lt.s32.totalorder %v1695, %v1670
    %vm1750 = vcmp.lt.s32.totalorder %v1695, %v1671
    %vm1751 = vcmp.lt.s32.totalorder %v1696, %v1670
    %vm1752 = vcmp.lt.s32.totalorder %v1696, %v1671
    %vm1753 = vcmp.lt.s32.totalorder %v1697, %v1670
    %vm1754 = vcmp.lt.s32.totalorder %v1697, %v1671
    %vm1755 = vcmp.lt.s32.totalorder %v1698, %v1670
    %vm1756 = vcmp.lt.s32.totalorder %v1698, %v1671
    %vm1757 = vcmp.lt.s32.totalorder %v1699, %v1670
    %vm1758 = vcmp.lt.s32.totalorder %v1699, %v1671
    %vm1759 = vcmp.lt.s32.totalorder %v1700, %v1670
    %vm1760 = vcmp.lt.s32.totalorder %v1700, %v1671
    %vm1761 = vcmp.lt.s32.totalorder %v1701, %v1670
    %vm1762 = vcmp.lt.s32.totalorder %v1701, %v1671
    %vm1763 = vcmp.lt.s32.totalorder %v1702, %v1670
    %vm1764 = vcmp.lt.s32.totalorder %v1702, %v1671
    %vm1765 = vcmp.lt.s32.totalorder %v1703, %v1670
    %vm1766 = vcmp.lt.s32.totalorder %v1703, %v1671
    %vm1767 = vcmp.lt.s32.totalorder %v1704, %v1670
    %vm1768 = vcmp.lt.s32.totalorder %v1704, %v1671
    %v1769 = vmul.f32 %v1503, %v1503
    %vm1770 = vcmask 1040384
    %v1771 = vsel %vm1770, %v1769, 0.0
    %1772 = vadd.xlane.f32.xlu0 %v1771
    %v1773 = vpop.xlane.xlu0 %1772
    %v1774 = vadd.f32 %v1773, 1e-12
    %v1775 = vrsqrt.pop %v1774
    %v1776 = vmul.f32 %v1503, %v1775
    %v1777 = vpack.c.bf16 %v1776, %v1776
    %v1778 = vld [vmem:[%s3] sm:$0xff]
    %v1779 = vld [vmem:[%s3 + $0x8] sm:$0xff]
    %v1780 = vld [vmem:[%s3 + $0x10] sm:$0xff]
    %v1781 = vld [vmem:[%s3 + $0x18] sm:$0xff]
    %v1782 = vld [vmem:[%s3 + $0x20] sm:$0xff]
    %v1783 = vld [vmem:[%s3 + $0x28] sm:$0xff]
    %v1784 = vld [vmem:[%s3 + $0x30] sm:$0xff]
    %v1785 = vld [vmem:[%s3 + $0x38] sm:$0xff]
    %v1786 = vld [vmem:[%s3 + $0x40] sm:$0xff]
    %v1787 = vld [vmem:[%s3 + $0x48] sm:$0xff]
    %v1788 = vld [vmem:[%s3 + $0x50] sm:$0xff]
    %v1789 = vld [vmem:[%s3 + $0x58] sm:$0xff]
    %v1790 = vld [vmem:[%s3 + $0x60] sm:$0xff]
    %v1791 = vld [vmem:[%s3 + $0x68] sm:$0xff]
    %v1792 = vld [vmem:[%s3 + $0x70] sm:$0xff]
    %v1793 = vld [vmem:[%s3 + $0x78] sm:$0xff]
    %v1810 = vunpack.c.l.b16 %v1778
    %v1811 = vunpack.c.h.b16 %v1778
    %v1812 = vunpack.c.l.b16 %v1779
    %v1813 = vunpack.c.h.b16 %v1779
    %v1814 = vunpack.c.l.b16 %v1780
    %v1815 = vunpack.c.h.b16 %v1780
    %v1816 = vunpack.c.l.b16 %v1781
    %v1817 = vunpack.c.h.b16 %v1781
    %v1818 = vunpack.c.l.b16 %v1782
    %v1819 = vunpack.c.h.b16 %v1782
    %v1820 = vunpack.c.l.b16 %v1783
    %v1821 = vunpack.c.h.b16 %v1783
    %v1822 = vunpack.c.l.b16 %v1784
    %v1823 = vunpack.c.h.b16 %v1784
    %v1824 = vunpack.c.l.b16 %v1785
    %v1825 = vunpack.c.h.b16 %v1785
    %v1826 = vunpack.c.l.b16 %v1786
    %v1827 = vunpack.c.h.b16 %v1786
    %v1828 = vunpack.c.l.b16 %v1787
    %v1829 = vunpack.c.h.b16 %v1787
    %v1830 = vunpack.c.l.b16 %v1788
    %v1831 = vunpack.c.h.b16 %v1788
    %v1832 = vunpack.c.l.b16 %v1789
    %v1833 = vunpack.c.h.b16 %v1789
    %v1834 = vunpack.c.l.b16 %v1790
    %v1835 = vunpack.c.h.b16 %v1790
    %v1836 = vunpack.c.l.b16 %v1791
    %v1837 = vunpack.c.h.b16 %v1791
    %v1838 = vunpack.c.l.b16 %v1792
    %v1839 = vunpack.c.h.b16 %v1792
    %v1840 = vunpack.c.l.b16 %v1793
    %v1841 = vunpack.c.h.b16 %v1793
    %v1842 = vpack.c.b16 %v1812, %v1810
    %v1843 = vpack.c.b16 %v1813, %v1811
    %v1844 = vpack.c.b16 %v1816, %v1814
    %v1845 = vpack.c.b16 %v1817, %v1815
    %v1846 = vpack.c.b16 %v1820, %v1818
    %v1847 = vpack.c.b16 %v1821, %v1819
    %v1848 = vpack.c.b16 %v1824, %v1822
    %v1849 = vpack.c.b16 %v1825, %v1823
    %v1850 = vpack.c.b16 %v1828, %v1826
    %v1851 = vpack.c.b16 %v1829, %v1827
    %v1852 = vpack.c.b16 %v1832, %v1830
    %v1853 = vpack.c.b16 %v1833, %v1831
    %v1854 = vpack.c.b16 %v1836, %v1834
    %v1855 = vpack.c.b16 %v1837, %v1835
    %v1856 = vpack.c.b16 %v1840, %v1838
    %v1857 = vpack.c.b16 %v1841, %v1839
    %1874 = vmatprep.subr.bf16.mxu0 %v1843
    %1875 = vmatpush1.bf16.msra.mxu0 %v1842
    %1876 = vmatprep.subr.bf16.mxu0 %v1845
    %1877 = vmatpush1.bf16.msra.mxu0 %v1844
    %1878 = vmatprep.subr.bf16.mxu0 %v1847
    %1879 = vmatpush1.bf16.msra.mxu0 %v1846
    %1880 = vmatprep.subr.bf16.mxu0 %v1849
    %1881 = vmatpush1.bf16.msra.mxu0 %v1848
    %1882 = vmatprep.subr.bf16.mxu0 %v1851
    %1883 = vmatpush1.bf16.msra.mxu0 %v1850
    %1884 = vmatprep.subr.bf16.mxu0 %v1853
    %1885 = vmatpush1.bf16.msra.mxu0 %v1852
    %1886 = vmatprep.subr.bf16.mxu0 %v1855
    %1887 = vmatpush1.bf16.msra.mxu0 %v1854
    %1888 = vmatprep.subr.bf16.mxu0 %v1857
    %1889 = vmatpush1.bf16.msra.mxu0 %v1856
    %1890 = vmatprep.subr.bf16.mxu0 0
    %1891 = vmatpush1.bf16.msra.mxu0 0
    %1892 = vmatprep.subr.bf16.mxu0 0
    %1893 = vmatpush1.bf16.msra.mxu0 0
    %1894 = vmatprep.subr.bf16.mxu0 0
    %1895 = vmatpush1.bf16.msra.mxu0 0
    %1896 = vmatprep.subr.bf16.mxu0 0
    %1897 = vmatpush1.bf16.msra.mxu0 0
    %1898 = vmatprep.subr.bf16.mxu0 0
    %1899 = vmatpush1.bf16.msra.mxu0 0
    %1900 = vmatprep.subr.bf16.mxu0 0
    %1901 = vmatpush1.bf16.msra.mxu0 0
    %1902 = vmatprep.subr.bf16.mxu0 0
    %1903 = vmatpush1.bf16.msra.mxu0 0
    %1904 = vmatprep.subr.bf16.mxu0 0
    %1905 = vmatpush1.bf16.msra.mxu0 0
    %1906 = vmatprep.mubr.bf16.mxu0 0
    %1907 = vmatmul.mubr.bf16.gmra.mrb[0].mxu0 %v1777
    %v1908 = vpop.f32.mrb[0].mxu0
    %v1909 = vadd.f32 0.0, %v1908
    %v1910 = vpop.f32.mrb[0].mxu0
    %v1911 = vadd.f32 0.0, %v1910
    %v1912 = vpop.f32.mrb[0].mxu0
    %v1913 = vpop.f32.mrb[0].mxu0
    %1914 = vdwg.mxu0
    %vm1915 = vcmp.eq.s32.totalorder %v1673, 0
    %v1916 = vlaneseq
    %v1917 = vshrl.u32 %v1916, 7
    %v1918 = vsub.s32 0, %v1917
    %v1919 = vrot.slane %v1909, %v1918
    %v1920 = vlaneseq
    %v1921 = vshrl.u32 %v1920, 7
    %v1922 = vsub.s32 0, %v1921
    %v1923 = vrot.slane %v1911, %v1922
    %v1924 = vsel %vm1915, %v1919, 0.0
    %v1925 = vsel %vm1915, %v1923, 0.0
    %v1926 = vmul.f32 %v1505, %v1505
    %v1927 = vsel %vm1770, %v1926, 0.0
    %1928 = vadd.xlane.f32.xlu0 %v1927
    %v1929 = vpop.xlane.xlu0 %1928
    %v1930 = vadd.f32 %v1929, 1e-12
    %v1931 = vrsqrt.pop %v1930
    %v1932 = vmul.f32 %v1505, %v1931
    %v1933 = vpack.c.bf16 %v1932, %v1932
    %s1934 = scalar_lea.vmem %s3, 128
    %v1935 = vld [vmem:[%s1934] sm:$0xff]
    %v1936 = vld [vmem:[%s1934 + $0x8] sm:$0xff]
    %v1937 = vld [vmem:[%s1934 + $0x10] sm:$0xff]
    %v1938 = vld [vmem:[%s1934 + $0x18] sm:$0xff]
    %v1939 = vld [vmem:[%s1934 + $0x20] sm:$0xff]
    %v1940 = vld [vmem:[%s1934 + $0x28] sm:$0xff]
    %v1941 = vld [vmem:[%s1934 + $0x30] sm:$0xff]
    %v1942 = vld [vmem:[%s1934 + $0x38] sm:$0xff]
    %v1943 = vld [vmem:[%s1934 + $0x40] sm:$0xff]
    %v1944 = vld [vmem:[%s1934 + $0x48] sm:$0xff]
    %v1945 = vld [vmem:[%s1934 + $0x50] sm:$0xff]
    %v1946 = vld [vmem:[%s1934 + $0x58] sm:$0xff]
    %v1947 = vld [vmem:[%s1934 + $0x60] sm:$0xff]
    %v1948 = vld [vmem:[%s1934 + $0x68] sm:$0xff]
    %v1949 = vld [vmem:[%s1934 + $0x70] sm:$0xff]
    %v1950 = vld [vmem:[%s1934 + $0x78] sm:$0xff]
    %v1967 = vunpack.c.l.b16 %v1935
    %v1968 = vunpack.c.h.b16 %v1935
    %v1969 = vunpack.c.l.b16 %v1936
    %v1970 = vunpack.c.h.b16 %v1936
    %v1971 = vunpack.c.l.b16 %v1937
    %v1972 = vunpack.c.h.b16 %v1937
    %v1973 = vunpack.c.l.b16 %v1938
    %v1974 = vunpack.c.h.b16 %v1938
    %v1975 = vunpack.c.l.b16 %v1939
    %v1976 = vunpack.c.h.b16 %v1939
    %v1977 = vunpack.c.l.b16 %v1940
    %v1978 = vunpack.c.h.b16 %v1940
    %v1979 = vunpack.c.l.b16 %v1941
    %v1980 = vunpack.c.h.b16 %v1941
    %v1981 = vunpack.c.l.b16 %v1942
    %v1982 = vunpack.c.h.b16 %v1942
    %v1983 = vunpack.c.l.b16 %v1943
    %v1984 = vunpack.c.h.b16 %v1943
    %v1985 = vunpack.c.l.b16 %v1944
    %v1986 = vunpack.c.h.b16 %v1944
    %v1987 = vunpack.c.l.b16 %v1945
    %v1988 = vunpack.c.h.b16 %v1945
    %v1989 = vunpack.c.l.b16 %v1946
    %v1990 = vunpack.c.h.b16 %v1946
    %v1991 = vunpack.c.l.b16 %v1947
    %v1992 = vunpack.c.h.b16 %v1947
    %v1993 = vunpack.c.l.b16 %v1948
    %v1994 = vunpack.c.h.b16 %v1948
    %v1995 = vunpack.c.l.b16 %v1949
    %v1996 = vunpack.c.h.b16 %v1949
    %v1997 = vunpack.c.l.b16 %v1950
    %v1998 = vunpack.c.h.b16 %v1950
    %v1999 = vpack.c.b16 %v1969, %v1967
    %v2000 = vpack.c.b16 %v1970, %v1968
    %v2001 = vpack.c.b16 %v1973, %v1971
    %v2002 = vpack.c.b16 %v1974, %v1972
    %v2003 = vpack.c.b16 %v1977, %v1975
    %v2004 = vpack.c.b16 %v1978, %v1976
    %v2005 = vpack.c.b16 %v1981, %v1979
    %v2006 = vpack.c.b16 %v1982, %v1980
    %v2007 = vpack.c.b16 %v1985, %v1983
    %v2008 = vpack.c.b16 %v1986, %v1984
    %v2009 = vpack.c.b16 %v1989, %v1987
    %v2010 = vpack.c.b16 %v1990, %v1988
    %v2011 = vpack.c.b16 %v1993, %v1991
    %v2012 = vpack.c.b16 %v1994, %v1992
    %v2013 = vpack.c.b16 %v1997, %v1995
    %v2014 = vpack.c.b16 %v1998, %v1996
    %2031 = vmatprep.subr.bf16.mxu0 %v2000
    %2032 = vmatpush1.bf16.msra.mxu0 %v1999
    %2033 = vmatprep.subr.bf16.mxu0 %v2002
    %2034 = vmatpush1.bf16.msra.mxu0 %v2001
    %2035 = vmatprep.subr.bf16.mxu0 %v2004
    %2036 = vmatpush1.bf16.msra.mxu0 %v2003
    %2037 = vmatprep.subr.bf16.mxu0 %v2006
    %2038 = vmatpush1.bf16.msra.mxu0 %v2005
    %2039 = vmatprep.subr.bf16.mxu0 %v2008
    %2040 = vmatpush1.bf16.msra.mxu0 %v2007
    %2041 = vmatprep.subr.bf16.mxu0 %v2010
    %2042 = vmatpush1.bf16.msra.mxu0 %v2009
    %2043 = vmatprep.subr.bf16.mxu0 %v2012
    %2044 = vmatpush1.bf16.msra.mxu0 %v2011
    %2045 = vmatprep.subr.bf16.mxu0 %v2014
    %2046 = vmatpush1.bf16.msra.mxu0 %v2013
    %2047 = vmatprep.subr.bf16.mxu0 0
    %2048 = vmatpush1.bf16.msra.mxu0 0
    %2049 = vmatprep.subr.bf16.mxu0 0
    %2050 = vmatpush1.bf16.msra.mxu0 0
    %2051 = vmatprep.subr.bf16.mxu0 0
    %2052 = vmatpush1.bf16.msra.mxu0 0
    %2053 = vmatprep.subr.bf16.mxu0 0
    %2054 = vmatpush1.bf16.msra.mxu0 0
    %2055 = vmatprep.subr.bf16.mxu0 0
    %2056 = vmatpush1.bf16.msra.mxu0 0
    %2057 = vmatprep.subr.bf16.mxu0 0
    %2058 = vmatpush1.bf16.msra.mxu0 0
    %2059 = vmatprep.subr.bf16.mxu0 0
    %2060 = vmatpush1.bf16.msra.mxu0 0
    %2061 = vmatprep.subr.bf16.mxu0 0
    %2062 = vmatpush1.bf16.msra.mxu0 0
    %2063 = vmatprep.mubr.bf16.mxu0 0
    %2064 = vmatmul.mubr.bf16.gmra.mrb[0].mxu0 %v1933
    %v2065 = vpop.f32.mrb[0].mxu0
    %v2066 = vadd.f32 0.0, %v2065
    %v2067 = vpop.f32.mrb[0].mxu0
    %v2068 = vadd.f32 0.0, %v2067
    %v2069 = vpop.f32.mrb[0].mxu0
    %v2070 = vpop.f32.mrb[0].mxu0
    %2071 = vdwg.mxu0
    %vm2072 = vcmp.eq.s32.totalorder %v1673, 1
    %v2073 = vlaneseq
    %v2074 = vshrl.u32 %v2073, 7
    %v2075 = vsub.s32 0, %v2074
    %v2076 = vrot.slane %v2066, %v2075
    %v2077 = vlaneseq
    %v2078 = vshrl.u32 %v2077, 7
    %v2079 = vsub.s32 0, %v2078
    %v2080 = vrot.slane %v2068, %v2079
    %v2081 = vsel %vm2072, %v2076, %v1924
    %v2082 = vsel %vm2072, %v2080, %v1925
    %v2083 = vmul.f32 %v1664, %v1664
    %v2084 = vsel %vm1770, %v2083, 0.0
    %2085 = vadd.xlane.f32.xlu0 %v2084
    %v2086 = vpop.xlane.xlu0 %2085
    %v2087 = vadd.f32 %v2086, 1e-12
    %v2088 = vrsqrt.pop %v2087
    %v2089 = vmul.f32 %v1664, %v2088
    %v2090 = vpack.c.bf16 %v2089, %v2089
    %s2091 = scalar_lea.vmem %s3, 256
    %v2092 = vld [vmem:[%s2091] sm:$0xff]
    %v2093 = vld [vmem:[%s2091 + $0x8] sm:$0xff]
    %v2094 = vld [vmem:[%s2091 + $0x10] sm:$0xff]
    %v2095 = vld [vmem:[%s2091 + $0x18] sm:$0xff]
    %v2096 = vld [vmem:[%s2091 + $0x20] sm:$0xff]
    %v2097 = vld [vmem:[%s2091 + $0x28] sm:$0xff]
    %v2098 = vld [vmem:[%s2091 + $0x30] sm:$0xff]
    %v2099 = vld [vmem:[%s2091 + $0x38] sm:$0xff]
    %v2100 = vld [vmem:[%s2091 + $0x40] sm:$0xff]
    %v2101 = vld [vmem:[%s2091 + $0x48] sm:$0xff]
    %v2102 = vld [vmem:[%s2091 + $0x50] sm:$0xff]
    %v2103 = vld [vmem:[%s2091 + $0x58] sm:$0xff]
    %v2104 = vld [vmem:[%s2091 + $0x60] sm:$0xff]
    %v2105 = vld [vmem:[%s2091 + $0x68] sm:$0xff]
    %v2106 = vld [vmem:[%s2091 + $0x70] sm:$0xff]
    %v2107 = vld [vmem:[%s2091 + $0x78] sm:$0xff]
    %v2124 = vunpack.c.l.b16 %v2092
    %v2125 = vunpack.c.h.b16 %v2092
    %v2126 = vunpack.c.l.b16 %v2093
    %v2127 = vunpack.c.h.b16 %v2093
    %v2128 = vunpack.c.l.b16 %v2094
    %v2129 = vunpack.c.h.b16 %v2094
    %v2130 = vunpack.c.l.b16 %v2095
    %v2131 = vunpack.c.h.b16 %v2095
    %v2132 = vunpack.c.l.b16 %v2096
    %v2133 = vunpack.c.h.b16 %v2096
    %v2134 = vunpack.c.l.b16 %v2097
    %v2135 = vunpack.c.h.b16 %v2097
    %v2136 = vunpack.c.l.b16 %v2098
    %v2137 = vunpack.c.h.b16 %v2098
    %v2138 = vunpack.c.l.b16 %v2099
    %v2139 = vunpack.c.h.b16 %v2099
    %v2140 = vunpack.c.l.b16 %v2100
    %v2141 = vunpack.c.h.b16 %v2100
    %v2142 = vunpack.c.l.b16 %v2101
    %v2143 = vunpack.c.h.b16 %v2101
    %v2144 = vunpack.c.l.b16 %v2102
    %v2145 = vunpack.c.h.b16 %v2102
    %v2146 = vunpack.c.l.b16 %v2103
    %v2147 = vunpack.c.h.b16 %v2103
    %v2148 = vunpack.c.l.b16 %v2104
    %v2149 = vunpack.c.h.b16 %v2104
    %v2150 = vunpack.c.l.b16 %v2105
    %v2151 = vunpack.c.h.b16 %v2105
    %v2152 = vunpack.c.l.b16 %v2106
    %v2153 = vunpack.c.h.b16 %v2106
    %v2154 = vunpack.c.l.b16 %v2107
    %v2155 = vunpack.c.h.b16 %v2107
    %v2156 = vpack.c.b16 %v2126, %v2124
    %v2157 = vpack.c.b16 %v2127, %v2125
    %v2158 = vpack.c.b16 %v2130, %v2128
    %v2159 = vpack.c.b16 %v2131, %v2129
    %v2160 = vpack.c.b16 %v2134, %v2132
    %v2161 = vpack.c.b16 %v2135, %v2133
    %v2162 = vpack.c.b16 %v2138, %v2136
    %v2163 = vpack.c.b16 %v2139, %v2137
    %v2164 = vpack.c.b16 %v2142, %v2140
    %v2165 = vpack.c.b16 %v2143, %v2141
    %v2166 = vpack.c.b16 %v2146, %v2144
    %v2167 = vpack.c.b16 %v2147, %v2145
    %v2168 = vpack.c.b16 %v2150, %v2148
    %v2169 = vpack.c.b16 %v2151, %v2149
    %v2170 = vpack.c.b16 %v2154, %v2152
    %v2171 = vpack.c.b16 %v2155, %v2153
    %2188 = vmatprep.subr.bf16.mxu0 %v2157
    %2189 = vmatpush1.bf16.msra.mxu0 %v2156
    %2190 = vmatprep.subr.bf16.mxu0 %v2159
    %2191 = vmatpush1.bf16.msra.mxu0 %v2158
    %2192 = vmatprep.subr.bf16.mxu0 %v2161
    %2193 = vmatpush1.bf16.msra.mxu0 %v2160
    %2194 = vmatprep.subr.bf16.mxu0 %v2163
    %2195 = vmatpush1.bf16.msra.mxu0 %v2162
    %2196 = vmatprep.subr.bf16.mxu0 %v2165
    %2197 = vmatpush1.bf16.msra.mxu0 %v2164
    %2198 = vmatprep.subr.bf16.mxu0 %v2167
    %2199 = vmatpush1.bf16.msra.mxu0 %v2166
    %2200 = vmatprep.subr.bf16.mxu0 %v2169
    %2201 = vmatpush1.bf16.msra.mxu0 %v2168
    %2202 = vmatprep.subr.bf16.mxu0 %v2171
    %2203 = vmatpush1.bf16.msra.mxu0 %v2170
    %2204 = vmatprep.subr.bf16.mxu0 0
    %2205 = vmatpush1.bf16.msra.mxu0 0
    %2206 = vmatprep.subr.bf16.mxu0 0
    %2207 = vmatpush1.bf16.msra.mxu0 0
    %2208 = vmatprep.subr.bf16.mxu0 0
    %2209 = vmatpush1.bf16.msra.mxu0 0
    %2210 = vmatprep.subr.bf16.mxu0 0
    %2211 = vmatpush1.bf16.msra.mxu0 0
    %2212 = vmatprep.subr.bf16.mxu0 0
    %2213 = vmatpush1.bf16.msra.mxu0 0
    %2214 = vmatprep.subr.bf16.mxu0 0
    %2215 = vmatpush1.bf16.msra.mxu0 0
    %2216 = vmatprep.subr.bf16.mxu0 0
    %2217 = vmatpush1.bf16.msra.mxu0 0
    %2218 = vmatprep.subr.bf16.mxu0 0
    %2219 = vmatpush1.bf16.msra.mxu0 0
    %2220 = vmatprep.mubr.bf16.mxu0 0
    %2221 = vmatmul.mubr.bf16.gmra.mrb[0].mxu0 %v2090
    %v2222 = vpop.f32.mrb[0].mxu0
    %v2223 = vadd.f32 0.0, %v2222
    %v2224 = vpop.f32.mrb[0].mxu0
    %v2225 = vadd.f32 0.0, %v2224
    %v2226 = vpop.f32.mrb[0].mxu0
    %v2227 = vpop.f32.mrb[0].mxu0
    %2228 = vdwg.mxu0
    %vm2229 = vcmp.eq.s32.totalorder %v1673, 2
    %v2230 = vlaneseq
    %v2231 = vshrl.u32 %v2230, 7
    %v2232 = vsub.s32 0, %v2231
    %v2233 = vrot.slane %v2223, %v2232
    %v2234 = vlaneseq
    %v2235 = vshrl.u32 %v2234, 7
    %v2236 = vsub.s32 0, %v2235
    %v2237 = vrot.slane %v2225, %v2236
    %v2238 = vsel %vm2229, %v2233, %v2081
    %v2239 = vsel %vm2229, %v2237, %v2082
    %2240 = vxpose.xlu0.b32.start [1/16] %v2238, 128
    %2241 = vxpose.xlu0.b32.cont [2/16] 0.0, 128
    %2242 = vxpose.xlu0.b32.cont [3/16] 0.0, 128
    %2243 = vxpose.xlu0.b32.cont [4/16] 0.0, 128
    %2244 = vxpose.xlu0.b32.cont [5/16] 0.0, 128
    %2245 = vxpose.xlu0.b32.cont [6/16] 0.0, 128
    %2246 = vxpose.xlu0.b32.cont [7/16] 0.0, 128
    %2247 = vxpose.xlu0.b32.cont [8/16] 0.0, 128
    %2248 = vxpose.xlu0.b32.cont [9/16] 0.0, 128
    %2249 = vxpose.xlu0.b32.cont [10/16] 0.0, 128
    %2250 = vxpose.xlu0.b32.cont [11/16] 0.0, 128
    %2251 = vxpose.xlu0.b32.cont [12/16] 0.0, 128
    %2252 = vxpose.xlu0.b32.cont [13/16] 0.0, 128
    %2253 = vxpose.xlu0.b32.cont [14/16] 0.0, 128
    %2254 = vxpose.xlu0.b32.cont [15/16] 0.0, 128
    %2255 = vxpose.xlu0.b32.end [16/16] 0.0, 128
    %v2256 = vpop.trf.xlu0
    %v2257 = vpop.trf.xlu0
    %v2258 = vpop.trf.xlu0
    %v2259 = vpop.trf.xlu0
    %v2260 = vpop.trf.xlu0
    %v2261 = vpop.trf.xlu0
    %v2262 = vpop.trf.xlu0
    %v2263 = vpop.trf.xlu0
    %v2264 = vpop.trf.xlu0
    %v2265 = vpop.trf.xlu0
    %v2266 = vpop.trf.xlu0
    %v2267 = vpop.trf.xlu0
    %v2268 = vpop.trf.xlu0
    %v2269 = vpop.trf.xlu0
    %v2270 = vpop.trf.xlu0
    %v2271 = vpop.trf.xlu0
    %2272 = vxpose.xlu0.b32.start [1/16] %v2239, 128
    %2273 = vxpose.xlu0.b32.cont [2/16] 0.0, 128
    %2274 = vxpose.xlu0.b32.cont [3/16] 0.0, 128
    %2275 = vxpose.xlu0.b32.cont [4/16] 0.0, 128
    %2276 = vxpose.xlu0.b32.cont [5/16] 0.0, 128
    %2277 = vxpose.xlu0.b32.cont [6/16] 0.0, 128
    %2278 = vxpose.xlu0.b32.cont [7/16] 0.0, 128
    %2279 = vxpose.xlu0.b32.cont [8/16] 0.0, 128
    %2280 = vxpose.xlu0.b32.cont [9/16] 0.0, 128
    %2281 = vxpose.xlu0.b32.cont [10/16] 0.0, 128
    %2282 = vxpose.xlu0.b32.cont [11/16] 0.0, 128
    %2283 = vxpose.xlu0.b32.cont [12/16] 0.0, 128
    %2284 = vxpose.xlu0.b32.cont [13/16] 0.0, 128
    %2285 = vxpose.xlu0.b32.cont [14/16] 0.0, 128
    %2286 = vxpose.xlu0.b32.cont [15/16] 0.0, 128
    %2287 = vxpose.xlu0.b32.end [16/16] 0.0, 128
    %v2288 = vpop.trf.xlu0
    %v2289 = vpop.trf.xlu0
    %v2290 = vpop.trf.xlu0
    %v2291 = vpop.trf.xlu0
    %v2292 = vpop.trf.xlu0
    %v2293 = vpop.trf.xlu0
    %v2294 = vpop.trf.xlu0
    %v2295 = vpop.trf.xlu0
    %v2296 = vpop.trf.xlu0
    %v2297 = vpop.trf.xlu0
    %v2298 = vpop.trf.xlu0
    %v2299 = vpop.trf.xlu0
    %v2300 = vpop.trf.xlu0
    %v2301 = vpop.trf.xlu0
    %v2302 = vpop.trf.xlu0
    %v2303 = vpop.trf.xlu0
    %2305 = vset.pattern.permute.xlu0 0
    %2306 = vperm.xlu0 %2305, %v2256
    %v2307 = vpop.permute.xlu0 %2306
    %2310 = vset.pattern.permute.xlu0 0
    %2311 = vperm.xlu0 %2310, %v2257
    %v2312 = vpop.permute.xlu0 %2311
    %2315 = vset.pattern.permute.xlu0 0
    %2316 = vperm.xlu0 %2315, %v2258
    %v2317 = vpop.permute.xlu0 %2316
    %2320 = vset.pattern.permute.xlu0 0
    %2321 = vperm.xlu0 %2320, %v2259
    %v2322 = vpop.permute.xlu0 %2321
    %2325 = vset.pattern.permute.xlu0 0
    %2326 = vperm.xlu0 %2325, %v2260
    %v2327 = vpop.permute.xlu0 %2326
    %2330 = vset.pattern.permute.xlu0 0
    %2331 = vperm.xlu0 %2330, %v2261
    %v2332 = vpop.permute.xlu0 %2331
    %2335 = vset.pattern.permute.xlu0 0
    %2336 = vperm.xlu0 %2335, %v2262
    %v2337 = vpop.permute.xlu0 %2336
    %2340 = vset.pattern.permute.xlu0 0
    %2341 = vperm.xlu0 %2340, %v2263
    %v2342 = vpop.permute.xlu0 %2341
    %2345 = vset.pattern.permute.xlu0 0
    %2346 = vperm.xlu0 %2345, %v2264
    %v2347 = vpop.permute.xlu0 %2346
    %2350 = vset.pattern.permute.xlu0 0
    %2351 = vperm.xlu0 %2350, %v2265
    %v2352 = vpop.permute.xlu0 %2351
    %2355 = vset.pattern.permute.xlu0 0
    %2356 = vperm.xlu0 %2355, %v2266
    %v2357 = vpop.permute.xlu0 %2356
    %2360 = vset.pattern.permute.xlu0 0
    %2361 = vperm.xlu0 %2360, %v2267
    %v2362 = vpop.permute.xlu0 %2361
    %2365 = vset.pattern.permute.xlu0 0
    %2366 = vperm.xlu0 %2365, %v2268
    %v2367 = vpop.permute.xlu0 %2366
    %2370 = vset.pattern.permute.xlu0 0
    %2371 = vperm.xlu0 %2370, %v2269
    %v2372 = vpop.permute.xlu0 %2371
    %2375 = vset.pattern.permute.xlu0 0
    %2376 = vperm.xlu0 %2375, %v2270
    %v2377 = vpop.permute.xlu0 %2376
    %2380 = vset.pattern.permute.xlu0 0
    %2381 = vperm.xlu0 %2380, %v2271
    %v2382 = vpop.permute.xlu0 %2381
    %2385 = vset.pattern.permute.xlu0 0
    %2386 = vperm.xlu0 %2385, %v2288
    %v2387 = vpop.permute.xlu0 %2386
    %2390 = vset.pattern.permute.xlu0 0
    %2391 = vperm.xlu0 %2390, %v2289
    %v2392 = vpop.permute.xlu0 %2391
    %2395 = vset.pattern.permute.xlu0 0
    %2396 = vperm.xlu0 %2395, %v2290
    %v2397 = vpop.permute.xlu0 %2396
    %2400 = vset.pattern.permute.xlu0 0
    %2401 = vperm.xlu0 %2400, %v2291
    %v2402 = vpop.permute.xlu0 %2401
    %2405 = vset.pattern.permute.xlu0 0
    %2406 = vperm.xlu0 %2405, %v2292
    %v2407 = vpop.permute.xlu0 %2406
    %2410 = vset.pattern.permute.xlu0 0
    %2411 = vperm.xlu0 %2410, %v2293
    %v2412 = vpop.permute.xlu0 %2411
    %2415 = vset.pattern.permute.xlu0 0
    %2416 = vperm.xlu0 %2415, %v2294
    %v2417 = vpop.permute.xlu0 %2416
    %2420 = vset.pattern.permute.xlu0 0
    %2421 = vperm.xlu0 %2420, %v2295
    %v2422 = vpop.permute.xlu0 %2421
    %2425 = vset.pattern.permute.xlu0 0
    %2426 = vperm.xlu0 %2425, %v2296
    %v2427 = vpop.permute.xlu0 %2426
    %2430 = vset.pattern.permute.xlu0 0
    %2431 = vperm.xlu0 %2430, %v2297
    %v2432 = vpop.permute.xlu0 %2431
    %2435 = vset.pattern.permute.xlu0 0
    %2436 = vperm.xlu0 %2435, %v2298
    %v2437 = vpop.permute.xlu0 %2436
    %2440 = vset.pattern.permute.xlu0 0
    %2441 = vperm.xlu0 %2440, %v2299
    %v2442 = vpop.permute.xlu0 %2441
    %2445 = vset.pattern.permute.xlu0 0
    %2446 = vperm.xlu0 %2445, %v2300
    %v2447 = vpop.permute.xlu0 %2446
    %2450 = vset.pattern.permute.xlu0 0
    %2451 = vperm.xlu0 %2450, %v2301
    %v2452 = vpop.permute.xlu0 %2451
    %2455 = vset.pattern.permute.xlu0 0
    %2456 = vperm.xlu0 %2455, %v2302
    %v2457 = vpop.permute.xlu0 %2456
    %2460 = vset.pattern.permute.xlu0 0
    %2461 = vperm.xlu0 %2460, %v2303
    %v2462 = vpop.permute.xlu0 %2461
    %vm2464 = vcmp.gt.f32.partialorder %v2307, %v1919
    %vm2465 = vcmp.gt.f32.partialorder %v2307, %v1923
    %vm2466 = vcmp.gt.f32.partialorder %v2312, %v1919
    %vm2467 = vcmp.gt.f32.partialorder %v2312, %v1923
    %vm2468 = vcmp.gt.f32.partialorder %v2317, %v1919
    %vm2469 = vcmp.gt.f32.partialorder %v2317, %v1923
    %vm2470 = vcmp.gt.f32.partialorder %v2322, %v1919
    %vm2471 = vcmp.gt.f32.partialorder %v2322, %v1923
    %vm2472 = vcmp.gt.f32.partialorder %v2327, %v1919
    %vm2473 = vcmp.gt.f32.partialorder %v2327, %v1923
    %vm2474 = vcmp.gt.f32.partialorder %v2332, %v1919
    %vm2475 = vcmp.gt.f32.partialorder %v2332, %v1923
    %vm2476 = vcmp.gt.f32.partialorder %v2337, %v1919
    %vm2477 = vcmp.gt.f32.partialorder %v2337, %v1923
    %vm2478 = vcmp.gt.f32.partialorder %v2342, %v1919
    %vm2479 = vcmp.gt.f32.partialorder %v2342, %v1923
    %vm2480 = vcmp.gt.f32.partialorder %v2347, %v1919
    %vm2481 = vcmp.gt.f32.partialorder %v2347, %v1923
    %vm2482 = vcmp.gt.f32.partialorder %v2352, %v1919
    %vm2483 = vcmp.gt.f32.partialorder %v2352, %v1923
    %vm2484 = vcmp.gt.f32.partialorder %v2357, %v1919
    %vm2485 = vcmp.gt.f32.partialorder %v2357, %v1923
    %vm2486 = vcmp.gt.f32.partialorder %v2362, %v1919
    %vm2487 = vcmp.gt.f32.partialorder %v2362, %v1923
    %vm2488 = vcmp.gt.f32.partialorder %v2367, %v1919
    %vm2489 = vcmp.gt.f32.partialorder %v2367, %v1923
    %vm2490 = vcmp.gt.f32.partialorder %v2372, %v1919
    %vm2491 = vcmp.gt.f32.partialorder %v2372, %v1923
    %vm2492 = vcmp.gt.f32.partialorder %v2377, %v1919
    %vm2493 = vcmp.gt.f32.partialorder %v2377, %v1923
    %vm2494 = vcmp.gt.f32.partialorder %v2382, %v1919
    %vm2495 = vcmp.gt.f32.partialorder %v2382, %v1923
    %vm2496 = vcmp.gt.f32.partialorder %v2387, %v1919
    %vm2497 = vcmp.gt.f32.partialorder %v2387, %v1923
    %vm2498 = vcmp.gt.f32.partialorder %v2392, %v1919
    %vm2499 = vcmp.gt.f32.partialorder %v2392, %v1923
    %vm2500 = vcmp.gt.f32.partialorder %v2397, %v1919
    %vm2501 = vcmp.gt.f32.partialorder %v2397, %v1923
    %vm2502 = vcmp.gt.f32.partialorder %v2402, %v1919
    %vm2503 = vcmp.gt.f32.partialorder %v2402, %v1923
    %vm2504 = vcmp.gt.f32.partialorder %v2407, %v1919
    %vm2505 = vcmp.gt.f32.partialorder %v2407, %v1923
    %vm2506 = vcmp.gt.f32.partialorder %v2412, %v1919
    %vm2507 = vcmp.gt.f32.partialorder %v2412, %v1923
    %vm2508 = vcmp.gt.f32.partialorder %v2417, %v1919
    %vm2509 = vcmp.gt.f32.partialorder %v2417, %v1923
    %vm2510 = vcmp.gt.f32.partialorder %v2422, %v1919
    %vm2511 = vcmp.gt.f32.partialorder %v2422, %v1923
    %vm2512 = vcmp.gt.f32.partialorder %v2427, %v1919
    %vm2513 = vcmp.gt.f32.partialorder %v2427, %v1923
    %vm2514 = vcmp.gt.f32.partialorder %v2432, %v1919
    %vm2515 = vcmp.gt.f32.partialorder %v2432, %v1923
    %vm2516 = vcmp.gt.f32.partialorder %v2437, %v1919
    %vm2517 = vcmp.gt.f32.partialorder %v2437, %v1923
    %vm2518 = vcmp.gt.f32.partialorder %v2442, %v1919
    %vm2519 = vcmp.gt.f32.partialorder %v2442, %v1923
    %vm2520 = vcmp.gt.f32.partialorder %v2447, %v1919
    %vm2521 = vcmp.gt.f32.partialorder %v2447, %v1923
    %vm2522 = vcmp.gt.f32.partialorder %v2452, %v1919
    %vm2523 = vcmp.gt.f32.partialorder %v2452, %v1923
    %vm2524 = vcmp.gt.f32.partialorder %v2457, %v1919
    %vm2525 = vcmp.gt.f32.partialorder %v2457, %v1923
    %vm2526 = vcmp.gt.f32.partialorder %v2462, %v1919
    %vm2527 = vcmp.gt.f32.partialorder %v2462, %v1923
    %vm2528 = vcmp.eq.f32.partialorder %v2307, %v1919
    %vm2529 = vcmp.eq.f32.partialorder %v2307, %v1923
    %vm2530 = vcmp.eq.f32.partialorder %v2312, %v1919
    %vm2531 = vcmp.eq.f32.partialorder %v2312, %v1923
    %vm2532 = vcmp.eq.f32.partialorder %v2317, %v1919
    %vm2533 = vcmp.eq.f32.partialorder %v2317, %v1923
    %vm2534 = vcmp.eq.f32.partialorder %v2322, %v1919
    %vm2535 = vcmp.eq.f32.partialorder %v2322, %v1923
    %vm2536 = vcmp.eq.f32.partialorder %v2327, %v1919
    %vm2537 = vcmp.eq.f32.partialorder %v2327, %v1923
    %vm2538 = vcmp.eq.f32.partialorder %v2332, %v1919
    %vm2539 = vcmp.eq.f32.partialorder %v2332, %v1923
    %vm2540 = vcmp.eq.f32.partialorder %v2337, %v1919
    %vm2541 = vcmp.eq.f32.partialorder %v2337, %v1923
    %vm2542 = vcmp.eq.f32.partialorder %v2342, %v1919
    %vm2543 = vcmp.eq.f32.partialorder %v2342, %v1923
    %vm2544 = vcmp.eq.f32.partialorder %v2347, %v1919
    %vm2545 = vcmp.eq.f32.partialorder %v2347, %v1923
    %vm2546 = vcmp.eq.f32.partialorder %v2352, %v1919
    %vm2547 = vcmp.eq.f32.partialorder %v2352, %v1923
    %vm2548 = vcmp.eq.f32.partialorder %v2357, %v1919
    %vm2549 = vcmp.eq.f32.partialorder %v2357, %v1923
    %vm2550 = vcmp.eq.f32.partialorder %v2362, %v1919
    %vm2551 = vcmp.eq.f32.partialorder %v2362, %v1923
    %vm2552 = vcmp.eq.f32.partialorder %v2367, %v1919
    %vm2553 = vcmp.eq.f32.partialorder %v2367, %v1923
    %vm2554 = vcmp.eq.f32.partialorder %v2372, %v1919
    %vm2555 = vcmp.eq.f32.partialorder %v2372, %v1923
    %vm2556 = vcmp.eq.f32.partialorder %v2377, %v1919
    %vm2557 = vcmp.eq.f32.partialorder %v2377, %v1923
    %vm2558 = vcmp.eq.f32.partialorder %v2382, %v1919
    %vm2559 = vcmp.eq.f32.partialorder %v2382, %v1923
    %vm2560 = vcmp.eq.f32.partialorder %v2387, %v1919
    %vm2561 = vcmp.eq.f32.partialorder %v2387, %v1923
    %vm2562 = vcmp.eq.f32.partialorder %v2392, %v1919
    %vm2563 = vcmp.eq.f32.partialorder %v2392, %v1923
    %vm2564 = vcmp.eq.f32.partialorder %v2397, %v1919
    %vm2565 = vcmp.eq.f32.partialorder %v2397, %v1923
    %vm2566 = vcmp.eq.f32.partialorder %v2402, %v1919
    %vm2567 = vcmp.eq.f32.partialorder %v2402, %v1923
    %vm2568 = vcmp.eq.f32.partialorder %v2407, %v1919
    %vm2569 = vcmp.eq.f32.partialorder %v2407, %v1923
    %vm2570 = vcmp.eq.f32.partialorder %v2412, %v1919
    %vm2571 = vcmp.eq.f32.partialorder %v2412, %v1923
    %vm2572 = vcmp.eq.f32.partialorder %v2417, %v1919
    %vm2573 = vcmp.eq.f32.partialorder %v2417, %v1923
    %vm2574 = vcmp.eq.f32.partialorder %v2422, %v1919
    %vm2575 = vcmp.eq.f32.partialorder %v2422, %v1923
    %vm2576 = vcmp.eq.f32.partialorder %v2427, %v1919
    %vm2577 = vcmp.eq.f32.partialorder %v2427, %v1923
    %vm2578 = vcmp.eq.f32.partialorder %v2432, %v1919
    %vm2579 = vcmp.eq.f32.partialorder %v2432, %v1923
    %vm2580 = vcmp.eq.f32.partialorder %v2437, %v1919
    %vm2581 = vcmp.eq.f32.partialorder %v2437, %v1923
    %vm2582 = vcmp.eq.f32.partialorder %v2442, %v1919
    %vm2583 = vcmp.eq.f32.partialorder %v2442, %v1923
    %vm2584 = vcmp.eq.f32.partialorder %v2447, %v1919
    %vm2585 = vcmp.eq.f32.partialorder %v2447, %v1923
    %vm2586 = vcmp.eq.f32.partialorder %v2452, %v1919
    %vm2587 = vcmp.eq.f32.partialorder %v2452, %v1923
    %vm2588 = vcmp.eq.f32.partialorder %v2457, %v1919
    %vm2589 = vcmp.eq.f32.partialorder %v2457, %v1923
    %vm2590 = vcmp.eq.f32.partialorder %v2462, %v1919
    %vm2591 = vcmp.eq.f32.partialorder %v2462, %v1923
    %vm2592 = vmand %vm2528, %vm1705
    %vm2593 = vmand %vm2529, %vm1706
    %vm2594 = vmand %vm2530, %vm1707
    %vm2595 = vmand %vm2531, %vm1708
    %vm2596 = vmand %vm2532, %vm1709
    %vm2597 = vmand %vm2533, %vm1710
    %vm2598 = vmand %vm2534, %vm1711
    %vm2599 = vmand %vm2535, %vm1712
    %vm2600 = vmand %vm2536, %vm1713
    %vm2601 = vmand %vm2537, %vm1714
    %vm2602 = vmand %vm2538, %vm1715
    %vm2603 = vmand %vm2539, %vm1716
    %vm2604 = vmand %vm2540, %vm1717
    %vm2605 = vmand %vm2541, %vm1718
    %vm2606 = vmand %vm2542, %vm1719
    %vm2607 = vmand %vm2543, %vm1720
    %vm2608 = vmand %vm2544, %vm1721
    %vm2609 = vmand %vm2545, %vm1722
    %vm2610 = vmand %vm2546, %vm1723
    %vm2611 = vmand %vm2547, %vm1724
    %vm2612 = vmand %vm2548, %vm1725
    %vm2613 = vmand %vm2549, %vm1726
    %vm2614 = vmand %vm2550, %vm1727
    %vm2615 = vmand %vm2551, %vm1728
    %vm2616 = vmand %vm2552, %vm1729
    %vm2617 = vmand %vm2553, %vm1730
    %vm2618 = vmand %vm2554, %vm1731
    %vm2619 = vmand %vm2555, %vm1732
    %vm2620 = vmand %vm2556, %vm1733
    %vm2621 = vmand %vm2557, %vm1734
    %vm2622 = vmand %vm2558, %vm1735
    %vm2623 = vmand %vm2559, %vm1736
    %vm2624 = vmand %vm2560, %vm1737
    %vm2625 = vmand %vm2561, %vm1738
    %vm2626 = vmand %vm2562, %vm1739
    %vm2627 = vmand %vm2563, %vm1740
    %vm2628 = vmand %vm2564, %vm1741
    %vm2629 = vmand %vm2565, %vm1742
    %vm2630 = vmand %vm2566, %vm1743
    %vm2631 = vmand %vm2567, %vm1744
    %vm2632 = vmand %vm2568, %vm1745
    %vm2633 = vmand %vm2569, %vm1746
    %vm2634 = vmand %vm2570, %vm1747
    %vm2635 = vmand %vm2571, %vm1748
    %vm2636 = vmand %vm2572, %vm1749
    %vm2637 = vmand %vm2573, %vm1750
    %vm2638 = vmand %vm2574, %vm1751
    %vm2639 = vmand %vm2575, %vm1752
    %vm2640 = vmand %vm2576, %vm1753
    %vm2641 = vmand %vm2577, %vm1754
    %vm2642 = vmand %vm2578, %vm1755
    %vm2643 = vmand %vm2579, %vm1756
    %vm2644 = vmand %vm2580, %vm1757
    %vm2645 = vmand %vm2581, %vm1758
    %vm2646 = vmand %vm2582, %vm1759
    %vm2647 = vmand %vm2583, %vm1760
    %vm2648 = vmand %vm2584, %vm1761
    %vm2649 = vmand %vm2585, %vm1762
    %vm2650 = vmand %vm2586, %vm1763
    %vm2651 = vmand %vm2587, %vm1764
    %vm2652 = vmand %vm2588, %vm1765
    %vm2653 = vmand %vm2589, %vm1766
    %vm2654 = vmand %vm2590, %vm1767
    %vm2655 = vmand %vm2591, %vm1768
    %vm2656 = vmor %vm2464, %vm2592
    %vm2657 = vmor %vm2465, %vm2593
    %vm2658 = vmor %vm2466, %vm2594
    %vm2659 = vmor %vm2467, %vm2595
    %vm2660 = vmor %vm2468, %vm2596
    %vm2661 = vmor %vm2469, %vm2597
    %vm2662 = vmor %vm2470, %vm2598
    %vm2663 = vmor %vm2471, %vm2599
    %vm2664 = vmor %vm2472, %vm2600
    %vm2665 = vmor %vm2473, %vm2601
    %vm2666 = vmor %vm2474, %vm2602
    %vm2667 = vmor %vm2475, %vm2603
    %vm2668 = vmor %vm2476, %vm2604
    %vm2669 = vmor %vm2477, %vm2605
    %vm2670 = vmor %vm2478, %vm2606
    %vm2671 = vmor %vm2479, %vm2607
    %vm2672 = vmor %vm2480, %vm2608
    %vm2673 = vmor %vm2481, %vm2609
    %vm2674 = vmor %vm2482, %vm2610
    %vm2675 = vmor %vm2483, %vm2611
    %vm2676 = vmor %vm2484, %vm2612
    %vm2677 = vmor %vm2485, %vm2613
    %vm2678 = vmor %vm2486, %vm2614
    %vm2679 = vmor %vm2487, %vm2615
    %vm2680 = vmor %vm2488, %vm2616
    %vm2681 = vmor %vm2489, %vm2617
    %vm2682 = vmor %vm2490, %vm2618
    %vm2683 = vmor %vm2491, %vm2619
    %vm2684 = vmor %vm2492, %vm2620
    %vm2685 = vmor %vm2493, %vm2621
    %vm2686 = vmor %vm2494, %vm2622
    %vm2687 = vmor %vm2495, %vm2623
    %vm2688 = vmor %vm2496, %vm2624
    %vm2689 = vmor %vm2497, %vm2625
    %vm2690 = vmor %vm2498, %vm2626
    %vm2691 = vmor %vm2499, %vm2627
    %vm2692 = vmor %vm2500, %vm2628
    %vm2693 = vmor %vm2501, %vm2629
    %vm2694 = vmor %vm2502, %vm2630
    %vm2695 = vmor %vm2503, %vm2631
    %vm2696 = vmor %vm2504, %vm2632
    %vm2697 = vmor %vm2505, %vm2633
    %vm2698 = vmor %vm2506, %vm2634
    %vm2699 = vmor %vm2507, %vm2635
    %vm2700 = vmor %vm2508, %vm2636
    %vm2701 = vmor %vm2509, %vm2637
    %vm2702 = vmor %vm2510, %vm2638
    %vm2703 = vmor %vm2511, %vm2639
    %vm2704 = vmor %vm2512, %vm2640
    %vm2705 = vmor %vm2513, %vm2641
    %vm2706 = vmor %vm2514, %vm2642
    %vm2707 = vmor %vm2515, %vm2643
    %vm2708 = vmor %vm2516, %vm2644
    %vm2709 = vmor %vm2517, %vm2645
    %vm2710 = vmor %vm2518, %vm2646
    %vm2711 = vmor %vm2519, %vm2647
    %vm2712 = vmor %vm2520, %vm2648
    %vm2713 = vmor %vm2521, %vm2649
    %vm2714 = vmor %vm2522, %vm2650
    %vm2715 = vmor %vm2523, %vm2651
    %vm2716 = vmor %vm2524, %vm2652
    %vm2717 = vmor %vm2525, %vm2653
    %vm2718 = vmor %vm2526, %vm2654
    %vm2719 = vmor %vm2527, %vm2655
    %v2720 = vsel %vm2656, 1, 0
    %v2721 = vsel %vm2657, 1, 0
    %v2722 = vsel %vm2658, 1, 0
    %v2723 = vsel %vm2659, 1, 0
    %v2724 = vsel %vm2660, 1, 0
    %v2725 = vsel %vm2661, 1, 0
    %v2726 = vsel %vm2662, 1, 0
    %v2727 = vsel %vm2663, 1, 0
    %v2728 = vsel %vm2664, 1, 0
    %v2729 = vsel %vm2665, 1, 0
    %v2730 = vsel %vm2666, 1, 0
    %v2731 = vsel %vm2667, 1, 0
    %v2732 = vsel %vm2668, 1, 0
    %v2733 = vsel %vm2669, 1, 0
    %v2734 = vsel %vm2670, 1, 0
    %v2735 = vsel %vm2671, 1, 0
    %v2736 = vsel %vm2672, 1, 0
    %v2737 = vsel %vm2673, 1, 0
    %v2738 = vsel %vm2674, 1, 0
    %v2739 = vsel %vm2675, 1, 0
    %v2740 = vsel %vm2676, 1, 0
    %v2741 = vsel %vm2677, 1, 0
    %v2742 = vsel %vm2678, 1, 0
    %v2743 = vsel %vm2679, 1, 0
    %v2744 = vsel %vm2680, 1, 0
    %v2745 = vsel %vm2681, 1, 0
    %v2746 = vsel %vm2682, 1, 0
    %v2747 = vsel %vm2683, 1, 0
    %v2748 = vsel %vm2684, 1, 0
    %v2749 = vsel %vm2685, 1, 0
    %v2750 = vsel %vm2686, 1, 0
    %v2751 = vsel %vm2687, 1, 0
    %v2752 = vsel %vm2688, 1, 0
    %v2753 = vsel %vm2689, 1, 0
    %v2754 = vsel %vm2690, 1, 0
    %v2755 = vsel %vm2691, 1, 0
    %v2756 = vsel %vm2692, 1, 0
    %v2757 = vsel %vm2693, 1, 0
    %v2758 = vsel %vm2694, 1, 0
    %v2759 = vsel %vm2695, 1, 0
    %v2760 = vsel %vm2696, 1, 0
    %v2761 = vsel %vm2697, 1, 0
    %v2762 = vsel %vm2698, 1, 0
    %v2763 = vsel %vm2699, 1, 0
    %v2764 = vsel %vm2700, 1, 0
    %v2765 = vsel %vm2701, 1, 0
    %v2766 = vsel %vm2702, 1, 0
    %v2767 = vsel %vm2703, 1, 0
    %v2768 = vsel %vm2704, 1, 0
    %v2769 = vsel %vm2705, 1, 0
    %v2770 = vsel %vm2706, 1, 0
    %v2771 = vsel %vm2707, 1, 0
    %v2772 = vsel %vm2708, 1, 0
    %v2773 = vsel %vm2709, 1, 0
    %v2774 = vsel %vm2710, 1, 0
    %v2775 = vsel %vm2711, 1, 0
    %v2776 = vsel %vm2712, 1, 0
    %v2777 = vsel %vm2713, 1, 0
    %v2778 = vsel %vm2714, 1, 0
    %v2779 = vsel %vm2715, 1, 0
    %v2780 = vsel %vm2716, 1, 0
    %v2781 = vsel %vm2717, 1, 0
    %v2782 = vsel %vm2718, 1, 0
    %v2783 = vsel %vm2719, 1, 0
    %v2784 = vadd.s32 %v2720, %v2724
    %v2785 = vadd.s32 %v2722, %v2726
    %v2786 = vadd.s32 %v2784, %v2728
    %v2787 = vadd.s32 %v2785, %v2730
    %v2788 = vadd.s32 %v2786, %v2732
    %v2789 = vadd.s32 %v2787, %v2734
    %v2790 = vadd.s32 %v2788, %v2736
    %v2791 = vadd.s32 %v2789, %v2738
    %v2792 = vadd.s32 %v2790, %v2740
    %v2793 = vadd.s32 %v2791, %v2742
    %v2794 = vadd.s32 %v2792, %v2744
    %v2795 = vadd.s32 %v2793, %v2746
    %v2796 = vadd.s32 %v2794, %v2748
    %v2797 = vadd.s32 %v2795, %v2750
    %v2798 = vadd.s32 %v2796, %v2752
    %v2799 = vadd.s32 %v2797, %v2754
    %v2800 = vadd.s32 %v2798, %v2756
    %v2801 = vadd.s32 %v2799, %v2758
    %v2802 = vadd.s32 %v2800, %v2760
    %v2803 = vadd.s32 %v2801, %v2762
    %v2804 = vadd.s32 %v2802, %v2764
    %v2805 = vadd.s32 %v2803, %v2766
    %v2806 = vadd.s32 %v2804, %v2768
    %v2807 = vadd.s32 %v2805, %v2770
    %v2808 = vadd.s32 %v2806, %v2772
    %v2809 = vadd.s32 %v2807, %v2774
    %v2810 = vadd.s32 %v2808, %v2776
    %v2811 = vadd.s32 %v2809, %v2778
    %v2812 = vadd.s32 %v2810, %v2780
    %v2813 = vadd.s32 %v2811, %v2782
    %v2814 = vadd.s32 %v2812, %v2813
    %v2815 = vrot.slane %v2814, 4
    %v2816 = vadd.s32 %v2814, %v2815
    %v2817 = vrot.slane %v2816, 2
    %v2818 = vadd.s32 %v2816, %v2817
    %v2819 = vrot.slane %v2818, 1
    %v2820 = vadd.s32 %v2818, %v2819
    %v2821 = vadd.s32 %v2721, %v2725
    %v2822 = vadd.s32 %v2723, %v2727
    %v2823 = vadd.s32 %v2821, %v2729
    %v2824 = vadd.s32 %v2822, %v2731
    %v2825 = vadd.s32 %v2823, %v2733
    %v2826 = vadd.s32 %v2824, %v2735
    %v2827 = vadd.s32 %v2825, %v2737
    %v2828 = vadd.s32 %v2826, %v2739
    %v2829 = vadd.s32 %v2827, %v2741
    %v2830 = vadd.s32 %v2828, %v2743
    %v2831 = vadd.s32 %v2829, %v2745
    %v2832 = vadd.s32 %v2830, %v2747
    %v2833 = vadd.s32 %v2831, %v2749
    %v2834 = vadd.s32 %v2832, %v2751
    %v2835 = vadd.s32 %v2833, %v2753
    %v2836 = vadd.s32 %v2834, %v2755
    %v2837 = vadd.s32 %v2835, %v2757
    %v2838 = vadd.s32 %v2836, %v2759
    %v2839 = vadd.s32 %v2837, %v2761
    %v2840 = vadd.s32 %v2838, %v2763
    %v2841 = vadd.s32 %v2839, %v2765
    %v2842 = vadd.s32 %v2840, %v2767
    %v2843 = vadd.s32 %v2841, %v2769
    %v2844 = vadd.s32 %v2842, %v2771
    %v2845 = vadd.s32 %v2843, %v2773
    %v2846 = vadd.s32 %v2844, %v2775
    %v2847 = vadd.s32 %v2845, %v2777
    %v2848 = vadd.s32 %v2846, %v2779
    %v2849 = vadd.s32 %v2847, %v2781
    %v2850 = vadd.s32 %v2848, %v2783
    %v2851 = vadd.s32 %v2849, %v2850
    %v2852 = vrot.slane %v2851, 4
    %v2853 = vadd.s32 %v2851, %v2852
    %v2854 = vrot.slane %v2853, 2
    %v2855 = vadd.s32 %v2853, %v2854
    %v2856 = vrot.slane %v2855, 1
    %v2857 = vadd.s32 %v2855, %v2856
    %vm2858 = vcmp.eq.s32.totalorder %v2820, 0
    %vm2859 = vcmp.eq.s32.totalorder %v2857, 0
    %s2860 = sld [smem:[#allocation2]]
    %v2861 = vstv %s2860
    %v2862 = vsel %vm2858, %v2861, 0.0
    %v2863 = vsel %vm2859, %v2861, 0.0
    %v2864 = vadd.f32 %v2862, 0.0
    %v2865 = vadd.f32 %v2863, 0.0
    %vm2866 = vcmp.eq.s32.totalorder %v2820, 1
    %vm2867 = vcmp.eq.s32.totalorder %v2857, 1
    %s2868 = sld [smem:[#allocation2 + $0x1]]
    %v2869 = vstv %s2868
    %v2870 = vsel %vm2866, %v2869, 0.0
    %v2871 = vsel %vm2867, %v2869, 0.0
    %v2872 = vadd.f32 %v2864, %v2870
    %v2873 = vadd.f32 %v2865, %v2871
    %vm2874 = vcmp.eq.s32.totalorder %v2820, 2
    %vm2875 = vcmp.eq.s32.totalorder %v2857, 2
    %s2876 = sld [smem:[#allocation2 + $0x2]]
    %v2877 = vstv %s2876
    %v2878 = vsel %vm2874, %v2877, 0.0
    %v2879 = vsel %vm2875, %v2877, 0.0
    %v2880 = vadd.f32 %v2872, %v2878
    %v2881 = vadd.f32 %v2873, %v2879
    %vm2882 = vcmp.eq.s32.totalorder %v2820, 3
    %vm2883 = vcmp.eq.s32.totalorder %v2857, 3
    %s2884 = sld [smem:[#allocation2 + $0x3]]
    %v2885 = vstv %s2884
    %v2886 = vsel %vm2882, %v2885, 0.0
    %v2887 = vsel %vm2883, %v2885, 0.0
    %v2888 = vadd.f32 %v2880, %v2886
    %v2889 = vadd.f32 %v2881, %v2887
    %vm2890 = vcmp.eq.s32.totalorder %v2820, 4
    %vm2891 = vcmp.eq.s32.totalorder %v2857, 4
    %s2892 = sld [smem:[#allocation2 + $0x4]]
    %v2893 = vstv %s2892
    %v2894 = vsel %vm2890, %v2893, 0.0
    %v2895 = vsel %vm2891, %v2893, 0.0
    %v2896 = vadd.f32 %v2888, %v2894
    %v2897 = vadd.f32 %v2889, %v2895
    %vm2898 = vcmp.eq.s32.totalorder %v2820, 5
    %vm2899 = vcmp.eq.s32.totalorder %v2857, 5
    %s2900 = sld [smem:[#allocation2 + $0x5]]
    %v2901 = vstv %s2900
    %v2902 = vsel %vm2898, %v2901, 0.0
    %v2903 = vsel %vm2899, %v2901, 0.0
    %v2904 = vadd.f32 %v2896, %v2902
    %v2905 = vadd.f32 %v2897, %v2903
    %vm2906 = vcmp.eq.s32.totalorder %v2820, 6
    %vm2907 = vcmp.eq.s32.totalorder %v2857, 6
    %s2908 = sld [smem:[#allocation2 + $0x6]]
    %v2909 = vstv %s2908
    %v2910 = vsel %vm2906, %v2909, 0.0
    %v2911 = vsel %vm2907, %v2909, 0.0
    %v2912 = vadd.f32 %v2904, %v2910
    %v2913 = vadd.f32 %v2905, %v2911
    %vm2914 = vcmp.eq.s32.totalorder %v2820, 7
    %vm2915 = vcmp.eq.s32.totalorder %v2857, 7
    %s2916 = sld [smem:[#allocation2 + $0x7]]
    %v2917 = vstv %s2916
    %v2918 = vsel %vm2914, %v2917, 0.0
    %v2919 = vsel %vm2915, %v2917, 0.0
    %v2920 = vadd.f32 %v2912, %v2918
    %v2921 = vadd.f32 %v2913, %v2919
    %vm2922 = vcmp.eq.s32.totalorder %v2820, 8
    %vm2923 = vcmp.eq.s32.totalorder %v2857, 8
    %s2924 = sld [smem:[#allocation2 + $0x8]]
    %v2925 = vstv %s2924
    %v2926 = vsel %vm2922, %v2925, 0.0
    %v2927 = vsel %vm2923, %v2925, 0.0
    %v2928 = vadd.f32 %v2920, %v2926
    %v2929 = vadd.f32 %v2921, %v2927
    %vm2930 = vcmp.eq.s32.totalorder %v2820, 9
    %vm2931 = vcmp.eq.s32.totalorder %v2857, 9
    %s2932 = sld [smem:[#allocation2 + $0x9]]
    %v2933 = vstv %s2932
    %v2934 = vsel %vm2930, %v2933, 0.0
    %v2935 = vsel %vm2931, %v2933, 0.0
    %v2936 = vadd.f32 %v2928, %v2934
    %v2937 = vadd.f32 %v2929, %v2935
    %v2938 = vadd.f32 %v2936, 0.0
    %v2939 = vadd.f32 %v2937, 0.0
    %2940 = vset.pattern.permute.xlu0 1
    %2941 = vperm.xlu0 %2940, %v2256
    %v2942 = vpop.permute.xlu0 %2941
    %2944 = vset.pattern.permute.xlu0 1
    %2945 = vperm.xlu0 %2944, %v2257
    %v2946 = vpop.permute.xlu0 %2945
    %2948 = vset.pattern.permute.xlu0 1
    %2949 = vperm.xlu0 %2948, %v2258
    %v2950 = vpop.permute.xlu0 %2949
    %2952 = vset.pattern.permute.xlu0 1
    %2953 = vperm.xlu0 %2952, %v2259
    %v2954 = vpop.permute.xlu0 %2953
    %2956 = vset.pattern.permute.xlu0 1
    %2957 = vperm.xlu0 %2956, %v2260
    %v2958 = vpop.permute.xlu0 %2957
    %2960 = vset.pattern.permute.xlu0 1
    %2961 = vperm.xlu0 %2960, %v2261
    %v2962 = vpop.permute.xlu0 %2961
    %2964 = vset.pattern.permute.xlu0 1
    %2965 = vperm.xlu0 %2964, %v2262
    %v2966 = vpop.permute.xlu0 %2965
    %2968 = vset.pattern.permute.xlu0 1
    %2969 = vperm.xlu0 %2968, %v2263
    %v2970 = vpop.permute.xlu0 %2969
    %2972 = vset.pattern.permute.xlu0 1
    %2973 = vperm.xlu0 %2972, %v2264
    %v2974 = vpop.permute.xlu0 %2973
    %2976 = vset.pattern.permute.xlu0 1
    %2977 = vperm.xlu0 %2976, %v2265
    %v2978 = vpop.permute.xlu0 %2977
    %2980 = vset.pattern.permute.xlu0 1
    %2981 = vperm.xlu0 %2980, %v2266
    %v2982 = vpop.permute.xlu0 %2981
    %2984 = vset.pattern.permute.xlu0 1
    %2985 = vperm.xlu0 %2984, %v2267
    %v2986 = vpop.permute.xlu0 %2985
    %2988 = vset.pattern.permute.xlu0 1
    %2989 = vperm.xlu0 %2988, %v2268
    %v2990 = vpop.permute.xlu0 %2989
    %2992 = vset.pattern.permute.xlu0 1
    %2993 = vperm.xlu0 %2992, %v2269
    %v2994 = vpop.permute.xlu0 %2993
    %2996 = vset.pattern.permute.xlu0 1
    %2997 = vperm.xlu0 %2996, %v2270
    %v2998 = vpop.permute.xlu0 %2997
    %3000 = vset.pattern.permute.xlu0 1
    %3001 = vperm.xlu0 %3000, %v2271
    %v3002 = vpop.permute.xlu0 %3001
    %3004 = vset.pattern.permute.xlu0 1
    %3005 = vperm.xlu0 %3004, %v2288
    %v3006 = vpop.permute.xlu0 %3005
    %3008 = vset.pattern.permute.xlu0 1
    %3009 = vperm.xlu0 %3008, %v2289
    %v3010 = vpop.permute.xlu0 %3009
    %3012 = vset.pattern.permute.xlu0 1
    %3013 = vperm.xlu0 %3012, %v2290
    %v3014 = vpop.permute.xlu0 %3013
    %3016 = vset.pattern.permute.xlu0 1
    %3017 = vperm.xlu0 %3016, %v2291
    %v3018 = vpop.permute.xlu0 %3017
    %3020 = vset.pattern.permute.xlu0 1
    %3021 = vperm.xlu0 %3020, %v2292
    %v3022 = vpop.permute.xlu0 %3021
    %3024 = vset.pattern.permute.xlu0 1
    %3025 = vperm.xlu0 %3024, %v2293
    %v3026 = vpop.permute.xlu0 %3025
    %3028 = vset.pattern.permute.xlu0 1
    %3029 = vperm.xlu0 %3028, %v2294
    %v3030 = vpop.permute.xlu0 %3029
    %3032 = vset.pattern.permute.xlu0 1
    %3033 = vperm.xlu0 %3032, %v2295
    %v3034 = vpop.permute.xlu0 %3033
    %3036 = vset.pattern.permute.xlu0 1
    %3037 = vperm.xlu0 %3036, %v2296
    %v3038 = vpop.permute.xlu0 %3037
    %3040 = vset.pattern.permute.xlu0 1
    %3041 = vperm.xlu0 %3040, %v2297
    %v3042 = vpop.permute.xlu0 %3041
    %3044 = vset.pattern.permute.xlu0 1
    %3045 = vperm.xlu0 %3044, %v2298
    %v3046 = vpop.permute.xlu0 %3045
    %3048 = vset.pattern.permute.xlu0 1
    %3049 = vperm.xlu0 %3048, %v2299
    %v3050 = vpop.permute.xlu0 %3049
    %3052 = vset.pattern.permute.xlu0 1
    %3053 = vperm.xlu0 %3052, %v2300
    %v3054 = vpop.permute.xlu0 %3053
    %3056 = vset.pattern.permute.xlu0 1
    %3057 = vperm.xlu0 %3056, %v2301
    %v3058 = vpop.permute.xlu0 %3057
    %3060 = vset.pattern.permute.xlu0 1
    %3061 = vperm.xlu0 %3060, %v2302
    %v3062 = vpop.permute.xlu0 %3061
    %3064 = vset.pattern.permute.xlu0 1
    %3065 = vperm.xlu0 %3064, %v2303
    %v3066 = vpop.permute.xlu0 %3065
    %vm3068 = vcmp.gt.f32.partialorder %v2942, %v2076
    %vm3069 = vcmp.gt.f32.partialorder %v2942, %v2080
    %vm3070 = vcmp.gt.f32.partialorder %v2946, %v2076
    %vm3071 = vcmp.gt.f32.partialorder %v2946, %v2080
    %vm3072 = vcmp.gt.f32.partialorder %v2950, %v2076
    %vm3073 = vcmp.gt.f32.partialorder %v2950, %v2080
    %vm3074 = vcmp.gt.f32.partialorder %v2954, %v2076
    %vm3075 = vcmp.gt.f32.partialorder %v2954, %v2080
    %vm3076 = vcmp.gt.f32.partialorder %v2958, %v2076
    %vm3077 = vcmp.gt.f32.partialorder %v2958, %v2080
    %vm3078 = vcmp.gt.f32.partialorder %v2962, %v2076
    %vm3079 = vcmp.gt.f32.partialorder %v2962, %v2080
    %vm3080 = vcmp.gt.f32.partialorder %v2966, %v2076
    %vm3081 = vcmp.gt.f32.partialorder %v2966, %v2080
    %vm3082 = vcmp.gt.f32.partialorder %v2970, %v2076
    %vm3083 = vcmp.gt.f32.partialorder %v2970, %v2080
    %vm3084 = vcmp.gt.f32.partialorder %v2974, %v2076
    %vm3085 = vcmp.gt.f32.partialorder %v2974, %v2080
    %vm3086 = vcmp.gt.f32.partialorder %v2978, %v2076
    %vm3087 = vcmp.gt.f32.partialorder %v2978, %v2080
    %vm3088 = vcmp.gt.f32.partialorder %v2982, %v2076
    %vm3089 = vcmp.gt.f32.partialorder %v2982, %v2080
    %vm3090 = vcmp.gt.f32.partialorder %v2986, %v2076
    %vm3091 = vcmp.gt.f32.partialorder %v2986, %v2080
    %vm3092 = vcmp.gt.f32.partialorder %v2990, %v2076
    %vm3093 = vcmp.gt.f32.partialorder %v2990, %v2080
    %vm3094 = vcmp.gt.f32.partialorder %v2994, %v2076
    %vm3095 = vcmp.gt.f32.partialorder %v2994, %v2080
    %vm3096 = vcmp.gt.f32.partialorder %v2998, %v2076
    %vm3097 = vcmp.gt.f32.partialorder %v2998, %v2080
    %vm3098 = vcmp.gt.f32.partialorder %v3002, %v2076
    %vm3099 = vcmp.gt.f32.partialorder %v3002, %v2080
    %vm3100 = vcmp.gt.f32.partialorder %v3006, %v2076
    %vm3101 = vcmp.gt.f32.partialorder %v3006, %v2080
    %vm3102 = vcmp.gt.f32.partialorder %v3010, %v2076
    %vm3103 = vcmp.gt.f32.partialorder %v3010, %v2080
    %vm3104 = vcmp.gt.f32.partialorder %v3014, %v2076
    %vm3105 = vcmp.gt.f32.partialorder %v3014, %v2080
    %vm3106 = vcmp.gt.f32.partialorder %v3018, %v2076
    %vm3107 = vcmp.gt.f32.partialorder %v3018, %v2080
    %vm3108 = vcmp.gt.f32.partialorder %v3022, %v2076
    %vm3109 = vcmp.gt.f32.partialorder %v3022, %v2080
    %vm3110 = vcmp.gt.f32.partialorder %v3026, %v2076
    %vm3111 = vcmp.gt.f32.partialorder %v3026, %v2080
    %vm3112 = vcmp.gt.f32.partialorder %v3030, %v2076
    %vm3113 = vcmp.gt.f32.partialorder %v3030, %v2080
    %vm3114 = vcmp.gt.f32.partialorder %v3034, %v2076
    %vm3115 = vcmp.gt.f32.partialorder %v3034, %v2080
    %vm3116 = vcmp.gt.f32.partialorder %v3038, %v2076
    %vm3117 = vcmp.gt.f32.partialorder %v3038, %v2080
    %vm3118 = vcmp.gt.f32.partialorder %v3042, %v2076
    %vm3119 = vcmp.gt.f32.partialorder %v3042, %v2080
    %vm3120 = vcmp.gt.f32.partialorder %v3046, %v2076
    %vm3121 = vcmp.gt.f32.partialorder %v3046, %v2080
    %vm3122 = vcmp.gt.f32.partialorder %v3050, %v2076
    %vm3123 = vcmp.gt.f32.partialorder %v3050, %v2080
    %vm3124 = vcmp.gt.f32.partialorder %v3054, %v2076
    %vm3125 = vcmp.gt.f32.partialorder %v3054, %v2080
    %vm3126 = vcmp.gt.f32.partialorder %v3058, %v2076
    %vm3127 = vcmp.gt.f32.partialorder %v3058, %v2080
    %vm3128 = vcmp.gt.f32.partialorder %v3062, %v2076
    %vm3129 = vcmp.gt.f32.partialorder %v3062, %v2080
    %vm3130 = vcmp.gt.f32.partialorder %v3066, %v2076
    %vm3131 = vcmp.gt.f32.partialorder %v3066, %v2080
    %vm3132 = vcmp.eq.f32.partialorder %v2942, %v2076
    %vm3133 = vcmp.eq.f32.partialorder %v2942, %v2080
    %vm3134 = vcmp.eq.f32.partialorder %v2946, %v2076
    %vm3135 = vcmp.eq.f32.partialorder %v2946, %v2080
    %vm3136 = vcmp.eq.f32.partialorder %v2950, %v2076
    %vm3137 = vcmp.eq.f32.partialorder %v2950, %v2080
    %vm3138 = vcmp.eq.f32.partialorder %v2954, %v2076
    %vm3139 = vcmp.eq.f32.partialorder %v2954, %v2080
    %vm3140 = vcmp.eq.f32.partialorder %v2958, %v2076
    %vm3141 = vcmp.eq.f32.partialorder %v2958, %v2080
    %vm3142 = vcmp.eq.f32.partialorder %v2962, %v2076
    %vm3143 = vcmp.eq.f32.partialorder %v2962, %v2080
    %vm3144 = vcmp.eq.f32.partialorder %v2966, %v2076
    %vm3145 = vcmp.eq.f32.partialorder %v2966, %v2080
    %vm3146 = vcmp.eq.f32.partialorder %v2970, %v2076
    %vm3147 = vcmp.eq.f32.partialorder %v2970, %v2080
    %vm3148 = vcmp.eq.f32.partialorder %v2974, %v2076
    %vm3149 = vcmp.eq.f32.partialorder %v2974, %v2080
    %vm3150 = vcmp.eq.f32.partialorder %v2978, %v2076
    %vm3151 = vcmp.eq.f32.partialorder %v2978, %v2080
    %vm3152 = vcmp.eq.f32.partialorder %v2982, %v2076
    %vm3153 = vcmp.eq.f32.partialorder %v2982, %v2080
    %vm3154 = vcmp.eq.f32.partialorder %v2986, %v2076
    %vm3155 = vcmp.eq.f32.partialorder %v2986, %v2080
    %vm3156 = vcmp.eq.f32.partialorder %v2990, %v2076
    %vm3157 = vcmp.eq.f32.partialorder %v2990, %v2080
    %vm3158 = vcmp.eq.f32.partialorder %v2994, %v2076
    %vm3159 = vcmp.eq.f32.partialorder %v2994, %v2080
    %vm3160 = vcmp.eq.f32.partialorder %v2998, %v2076
    %vm3161 = vcmp.eq.f32.partialorder %v2998, %v2080
    %vm3162 = vcmp.eq.f32.partialorder %v3002, %v2076
    %vm3163 = vcmp.eq.f32.partialorder %v3002, %v2080
    %vm3164 = vcmp.eq.f32.partialorder %v3006, %v2076
    %vm3165 = vcmp.eq.f32.partialorder %v3006, %v2080
    %vm3166 = vcmp.eq.f32.partialorder %v3010, %v2076
    %vm3167 = vcmp.eq.f32.partialorder %v3010, %v2080
    %vm3168 = vcmp.eq.f32.partialorder %v3014, %v2076
    %vm3169 = vcmp.eq.f32.partialorder %v3014, %v2080
    %vm3170 = vcmp.eq.f32.partialorder %v3018, %v2076
    %vm3171 = vcmp.eq.f32.partialorder %v3018, %v2080
    %vm3172 = vcmp.eq.f32.partialorder %v3022, %v2076
    %vm3173 = vcmp.eq.f32.partialorder %v3022, %v2080
    %vm3174 = vcmp.eq.f32.partialorder %v3026, %v2076
    %vm3175 = vcmp.eq.f32.partialorder %v3026, %v2080
    %vm3176 = vcmp.eq.f32.partialorder %v3030, %v2076
    %vm3177 = vcmp.eq.f32.partialorder %v3030, %v2080
    %vm3178 = vcmp.eq.f32.partialorder %v3034, %v2076
    %vm3179 = vcmp.eq.f32.partialorder %v3034, %v2080
    %vm3180 = vcmp.eq.f32.partialorder %v3038, %v2076
    %vm3181 = vcmp.eq.f32.partialorder %v3038, %v2080
    %vm3182 = vcmp.eq.f32.partialorder %v3042, %v2076
    %vm3183 = vcmp.eq.f32.partialorder %v3042, %v2080
    %vm3184 = vcmp.eq.f32.partialorder %v3046, %v2076
    %vm3185 = vcmp.eq.f32.partialorder %v3046, %v2080
    %vm3186 = vcmp.eq.f32.partialorder %v3050, %v2076
    %vm3187 = vcmp.eq.f32.partialorder %v3050, %v2080
    %vm3188 = vcmp.eq.f32.partialorder %v3054, %v2076
    %vm3189 = vcmp.eq.f32.partialorder %v3054, %v2080
    %vm3190 = vcmp.eq.f32.partialorder %v3058, %v2076
    %vm3191 = vcmp.eq.f32.partialorder %v3058, %v2080
    %vm3192 = vcmp.eq.f32.partialorder %v3062, %v2076
    %vm3193 = vcmp.eq.f32.partialorder %v3062, %v2080
    %vm3194 = vcmp.eq.f32.partialorder %v3066, %v2076
    %vm3195 = vcmp.eq.f32.partialorder %v3066, %v2080
    %vm3196 = vmand %vm3132, %vm1705
    %vm3197 = vmand %vm3133, %vm1706
    %vm3198 = vmand %vm3134, %vm1707
    %vm3199 = vmand %vm3135, %vm1708
    %vm3200 = vmand %vm3136, %vm1709
    %vm3201 = vmand %vm3137, %vm1710
    %vm3202 = vmand %vm3138, %vm1711
    %vm3203 = vmand %vm3139, %vm1712
    %vm3204 = vmand %vm3140, %vm1713
    %vm3205 = vmand %vm3141, %vm1714
    %vm3206 = vmand %vm3142, %vm1715
    %vm3207 = vmand %vm3143, %vm1716
    %vm3208 = vmand %vm3144, %vm1717
    %vm3209 = vmand %vm3145, %vm1718
    %vm3210 = vmand %vm3146, %vm1719
    %vm3211 = vmand %vm3147, %vm1720
    %vm3212 = vmand %vm3148, %vm1721
    %vm3213 = vmand %vm3149, %vm1722
    %vm3214 = vmand %vm3150, %vm1723
    %vm3215 = vmand %vm3151, %vm1724
    %vm3216 = vmand %vm3152, %vm1725
    %vm3217 = vmand %vm3153, %vm1726
    %vm3218 = vmand %vm3154, %vm1727
    %vm3219 = vmand %vm3155, %vm1728
    %vm3220 = vmand %vm3156, %vm1729
    %vm3221 = vmand %vm3157, %vm1730
    %vm3222 = vmand %vm3158, %vm1731
    %vm3223 = vmand %vm3159, %vm1732
    %vm3224 = vmand %vm3160, %vm1733
    %vm3225 = vmand %vm3161, %vm1734
    %vm3226 = vmand %vm3162, %vm1735
    %vm3227 = vmand %vm3163, %vm1736
    %vm3228 = vmand %vm3164, %vm1737
    %vm3229 = vmand %vm3165, %vm1738
    %vm3230 = vmand %vm3166, %vm1739
    %vm3231 = vmand %vm3167, %vm1740
    %vm3232 = vmand %vm3168, %vm1741
    %vm3233 = vmand %vm3169, %vm1742
    %vm3234 = vmand %vm3170, %vm1743
    %vm3235 = vmand %vm3171, %vm1744
    %vm3236 = vmand %vm3172, %vm1745
    %vm3237 = vmand %vm3173, %vm1746
    %vm3238 = vmand %vm3174, %vm1747
    %vm3239 = vmand %vm3175, %vm1748
    %vm3240 = vmand %vm3176, %vm1749
    %vm3241 = vmand %vm3177, %vm1750
    %vm3242 = vmand %vm3178, %vm1751
    %vm3243 = vmand %vm3179, %vm1752
    %vm3244 = vmand %vm3180, %vm1753
    %vm3245 = vmand %vm3181, %vm1754
    %vm3246 = vmand %vm3182, %vm1755
    %vm3247 = vmand %vm3183, %vm1756
    %vm3248 = vmand %vm3184, %vm1757
    %vm3249 = vmand %vm3185, %vm1758
    %vm3250 = vmand %vm3186, %vm1759
    %vm3251 = vmand %vm3187, %vm1760
    %vm3252 = vmand %vm3188, %vm1761
    %vm3253 = vmand %vm3189, %vm1762
    %vm3254 = vmand %vm3190, %vm1763
    %vm3255 = vmand %vm3191, %vm1764
    %vm3256 = vmand %vm3192, %vm1765
    %vm3257 = vmand %vm3193, %vm1766
    %vm3258 = vmand %vm3194, %vm1767
    %vm3259 = vmand %vm3195, %vm1768
    %vm3260 = vmor %vm3068, %vm3196
    %vm3261 = vmor %vm3069, %vm3197
    %vm3262 = vmor %vm3070, %vm3198
    %vm3263 = vmor %vm3071, %vm3199
    %vm3264 = vmor %vm3072, %vm3200
    %vm3265 = vmor %vm3073, %vm3201
    %vm3266 = vmor %vm3074, %vm3202
    %vm3267 = vmor %vm3075, %vm3203
    %vm3268 = vmor %vm3076, %vm3204
    %vm3269 = vmor %vm3077, %vm3205
    %vm3270 = vmor %vm3078, %vm3206
    %vm3271 = vmor %vm3079, %vm3207
    %vm3272 = vmor %vm3080, %vm3208
    %vm3273 = vmor %vm3081, %vm3209
    %vm3274 = vmor %vm3082, %vm3210
    %vm3275 = vmor %vm3083, %vm3211
    %vm3276 = vmor %vm3084, %vm3212
    %vm3277 = vmor %vm3085, %vm3213
    %vm3278 = vmor %vm3086, %vm3214
    %vm3279 = vmor %vm3087, %vm3215
    %vm3280 = vmor %vm3088, %vm3216
    %vm3281 = vmor %vm3089, %vm3217
    %vm3282 = vmor %vm3090, %vm3218
    %vm3283 = vmor %vm3091, %vm3219
    %vm3284 = vmor %vm3092, %vm3220
    %vm3285 = vmor %vm3093, %vm3221
    %vm3286 = vmor %vm3094, %vm3222
    %vm3287 = vmor %vm3095, %vm3223
    %vm3288 = vmor %vm3096, %vm3224
    %vm3289 = vmor %vm3097, %vm3225
    %vm3290 = vmor %vm3098, %vm3226
    %vm3291 = vmor %vm3099, %vm3227
    %vm3292 = vmor %vm3100, %vm3228
    %vm3293 = vmor %vm3101, %vm3229
    %vm3294 = vmor %vm3102, %vm3230
    %vm3295 = vmor %vm3103, %vm3231
    %vm3296 = vmor %vm3104, %vm3232
    %vm3297 = vmor %vm3105, %vm3233
    %vm3298 = vmor %vm3106, %vm3234
    %vm3299 = vmor %vm3107, %vm3235
    %vm3300 = vmor %vm3108, %vm3236
    %vm3301 = vmor %vm3109, %vm3237
    %vm3302 = vmor %vm3110, %vm3238
    %vm3303 = vmor %vm3111, %vm3239
    %vm3304 = vmor %vm3112, %vm3240
    %vm3305 = vmor %vm3113, %vm3241
    %vm3306 = vmor %vm3114, %vm3242
    %vm3307 = vmor %vm3115, %vm3243
    %vm3308 = vmor %vm3116, %vm3244
    %vm3309 = vmor %vm3117, %vm3245
    %vm3310 = vmor %vm3118, %vm3246
    %vm3311 = vmor %vm3119, %vm3247
    %vm3312 = vmor %vm3120, %vm3248
    %vm3313 = vmor %vm3121, %vm3249
    %vm3314 = vmor %vm3122, %vm3250
    %vm3315 = vmor %vm3123, %vm3251
    %vm3316 = vmor %vm3124, %vm3252
    %vm3317 = vmor %vm3125, %vm3253
    %vm3318 = vmor %vm3126, %vm3254
    %vm3319 = vmor %vm3127, %vm3255
    %vm3320 = vmor %vm3128, %vm3256
    %vm3321 = vmor %vm3129, %vm3257
    %vm3322 = vmor %vm3130, %vm3258
    %vm3323 = vmor %vm3131, %vm3259
    %v3324 = vsel %vm3260, 1, 0
    %v3325 = vsel %vm3261, 1, 0
    %v3326 = vsel %vm3262, 1, 0
    %v3327 = vsel %vm3263, 1, 0
    %v3328 = vsel %vm3264, 1, 0
    %v3329 = vsel %vm3265, 1, 0
    %v3330 = vsel %vm3266, 1, 0
    %v3331 = vsel %vm3267, 1, 0
    %v3332 = vsel %vm3268, 1, 0
    %v3333 = vsel %vm3269, 1, 0
    %v3334 = vsel %vm3270, 1, 0
    %v3335 = vsel %vm3271, 1, 0
    %v3336 = vsel %vm3272, 1, 0
    %v3337 = vsel %vm3273, 1, 0
    %v3338 = vsel %vm3274, 1, 0
    %v3339 = vsel %vm3275, 1, 0
    %v3340 = vsel %vm3276, 1, 0
    %v3341 = vsel %vm3277, 1, 0
    %v3342 = vsel %vm3278, 1, 0
    %v3343 = vsel %vm3279, 1, 0
    %v3344 = vsel %vm3280, 1, 0
    %v3345 = vsel %vm3281, 1, 0
    %v3346 = vsel %vm3282, 1, 0
    %v3347 = vsel %vm3283, 1, 0
    %v3348 = vsel %vm3284, 1, 0
    %v3349 = vsel %vm3285, 1, 0
    %v3350 = vsel %vm3286, 1, 0
    %v3351 = vsel %vm3287, 1, 0
    %v3352 = vsel %vm3288, 1, 0
    %v3353 = vsel %vm3289, 1, 0
    %v3354 = vsel %vm3290, 1, 0
    %v3355 = vsel %vm3291, 1, 0
    %v3356 = vsel %vm3292, 1, 0
    %v3357 = vsel %vm3293, 1, 0
    %v3358 = vsel %vm3294, 1, 0
    %v3359 = vsel %vm3295, 1, 0
    %v3360 = vsel %vm3296, 1, 0
    %v3361 = vsel %vm3297, 1, 0
    %v3362 = vsel %vm3298, 1, 0
    %v3363 = vsel %vm3299, 1, 0
    %v3364 = vsel %vm3300, 1, 0
    %v3365 = vsel %vm3301, 1, 0
    %v3366 = vsel %vm3302, 1, 0
    %v3367 = vsel %vm3303, 1, 0
    %v3368 = vsel %vm3304, 1, 0
    %v3369 = vsel %vm3305, 1, 0
    %v3370 = vsel %vm3306, 1, 0
    %v3371 = vsel %vm3307, 1, 0
    %v3372 = vsel %vm3308, 1, 0
    %v3373 = vsel %vm3309, 1, 0
    %v3374 = vsel %vm3310, 1, 0
    %v3375 = vsel %vm3311, 1, 0
    %v3376 = vsel %vm3312, 1, 0
    %v3377 = vsel %vm3313, 1, 0
    %v3378 = vsel %vm3314, 1, 0
    %v3379 = vsel %vm3315, 1, 0
    %v3380 = vsel %vm3316, 1, 0
    %v3381 = vsel %vm3317, 1, 0
    %v3382 = vsel %vm3318, 1, 0
    %v3383 = vsel %vm3319, 1, 0
    %v3384 = vsel %vm3320, 1, 0
    %v3385 = vsel %vm3321, 1, 0
    %v3386 = vsel %vm3322, 1, 0
    %v3387 = vsel %vm3323, 1, 0
    %v3388 = vadd.s32 %v3324, %v3328
    %v3389 = vadd.s32 %v3326, %v3330
    %v3390 = vadd.s32 %v3388, %v3332
    %v3391 = vadd.s32 %v3389, %v3334
    %v3392 = vadd.s32 %v3390, %v3336
    %v3393 = vadd.s32 %v3391, %v3338
    %v3394 = vadd.s32 %v3392, %v3340
    %v3395 = vadd.s32 %v3393, %v3342
    %v3396 = vadd.s32 %v3394, %v3344
    %v3397 = vadd.s32 %v3395, %v3346
    %v3398 = vadd.s32 %v3396, %v3348
    %v3399 = vadd.s32 %v3397, %v3350
    %v3400 = vadd.s32 %v3398, %v3352
    %v3401 = vadd.s32 %v3399, %v3354
    %v3402 = vadd.s32 %v3400, %v3356
    %v3403 = vadd.s32 %v3401, %v3358
    %v3404 = vadd.s32 %v3402, %v3360
    %v3405 = vadd.s32 %v3403, %v3362
    %v3406 = vadd.s32 %v3404, %v3364
    %v3407 = vadd.s32 %v3405, %v3366
    %v3408 = vadd.s32 %v3406, %v3368
    %v3409 = vadd.s32 %v3407, %v3370
    %v3410 = vadd.s32 %v3408, %v3372
    %v3411 = vadd.s32 %v3409, %v3374
    %v3412 = vadd.s32 %v3410, %v3376
    %v3413 = vadd.s32 %v3411, %v3378
    %v3414 = vadd.s32 %v3412, %v3380
    %v3415 = vadd.s32 %v3413, %v3382
    %v3416 = vadd.s32 %v3414, %v3384
    %v3417 = vadd.s32 %v3415, %v3386
    %v3418 = vadd.s32 %v3416, %v3417
    %v3419 = vrot.slane %v3418, 4
    %v3420 = vadd.s32 %v3418, %v3419
    %v3421 = vrot.slane %v3420, 2
    %v3422 = vadd.s32 %v3420, %v3421
    %v3423 = vrot.slane %v3422, 1
    %v3424 = vadd.s32 %v3422, %v3423
    %v3425 = vadd.s32 %v3325, %v3329
    %v3426 = vadd.s32 %v3327, %v3331
    %v3427 = vadd.s32 %v3425, %v3333
    %v3428 = vadd.s32 %v3426, %v3335
    %v3429 = vadd.s32 %v3427, %v3337
    %v3430 = vadd.s32 %v3428, %v3339
    %v3431 = vadd.s32 %v3429, %v3341
    %v3432 = vadd.s32 %v3430, %v3343
    %v3433 = vadd.s32 %v3431, %v3345
    %v3434 = vadd.s32 %v3432, %v3347
    %v3435 = vadd.s32 %v3433, %v3349
    %v3436 = vadd.s32 %v3434, %v3351
    %v3437 = vadd.s32 %v3435, %v3353
    %v3438 = vadd.s32 %v3436, %v3355
    %v3439 = vadd.s32 %v3437, %v3357
    %v3440 = vadd.s32 %v3438, %v3359
    %v3441 = vadd.s32 %v3439, %v3361
    %v3442 = vadd.s32 %v3440, %v3363
    %v3443 = vadd.s32 %v3441, %v3365
    %v3444 = vadd.s32 %v3442, %v3367
    %v3445 = vadd.s32 %v3443, %v3369
    %v3446 = vadd.s32 %v3444, %v3371
    %v3447 = vadd.s32 %v3445, %v3373
    %v3448 = vadd.s32 %v3446, %v3375
    %v3449 = vadd.s32 %v3447, %v3377
    %v3450 = vadd.s32 %v3448, %v3379
    %v3451 = vadd.s32 %v3449, %v3381
    %v3452 = vadd.s32 %v3450, %v3383
    %v3453 = vadd.s32 %v3451, %v3385
    %v3454 = vadd.s32 %v3452, %v3387
    %v3455 = vadd.s32 %v3453, %v3454
    %v3456 = vrot.slane %v3455, 4
    %v3457 = vadd.s32 %v3455, %v3456
    %v3458 = vrot.slane %v3457, 2
    %v3459 = vadd.s32 %v3457, %v3458
    %v3460 = vrot.slane %v3459, 1
    %v3461 = vadd.s32 %v3459, %v3460
    %vm3462 = vcmp.eq.s32.totalorder %v3424, 0
    %vm3463 = vcmp.eq.s32.totalorder %v3461, 0
    %s3464 = sld [smem:[#allocation2 + $0xa]]
    %v3465 = vstv %s3464
    %v3466 = vsel %vm3462, %v3465, 0.0
    %v3467 = vsel %vm3463, %v3465, 0.0
    %v3468 = vadd.f32 %v3466, 0.0
    %v3469 = vadd.f32 %v3467, 0.0
    %vm3470 = vcmp.eq.s32.totalorder %v3424, 1
    %vm3471 = vcmp.eq.s32.totalorder %v3461, 1
    %s3472 = sld [smem:[#allocation2 + $0xb]]
    %v3473 = vstv %s3472
    %v3474 = vsel %vm3470, %v3473, 0.0
    %v3475 = vsel %vm3471, %v3473, 0.0
    %v3476 = vadd.f32 %v3468, %v3474
    %v3477 = vadd.f32 %v3469, %v3475
    %vm3478 = vcmp.eq.s32.totalorder %v3424, 2
    %vm3479 = vcmp.eq.s32.totalorder %v3461, 2
    %s3480 = sld [smem:[#allocation2 + $0xc]]
    %v3481 = vstv %s3480
    %v3482 = vsel %vm3478, %v3481, 0.0
    %v3483 = vsel %vm3479, %v3481, 0.0
    %v3484 = vadd.f32 %v3476, %v3482
    %v3485 = vadd.f32 %v3477, %v3483
    %vm3486 = vcmp.eq.s32.totalorder %v3424, 3
    %vm3487 = vcmp.eq.s32.totalorder %v3461, 3
    %s3488 = sld [smem:[#allocation2 + $0xd]]
    %v3489 = vstv %s3488
    %v3490 = vsel %vm3486, %v3489, 0.0
    %v3491 = vsel %vm3487, %v3489, 0.0
    %v3492 = vadd.f32 %v3484, %v3490
    %v3493 = vadd.f32 %v3485, %v3491
    %vm3494 = vcmp.eq.s32.totalorder %v3424, 4
    %vm3495 = vcmp.eq.s32.totalorder %v3461, 4
    %s3496 = sld [smem:[#allocation2 + $0xe]]
    %v3497 = vstv %s3496
    %v3498 = vsel %vm3494, %v3497, 0.0
    %v3499 = vsel %vm3495, %v3497, 0.0
    %v3500 = vadd.f32 %v3492, %v3498
    %v3501 = vadd.f32 %v3493, %v3499
    %vm3502 = vcmp.eq.s32.totalorder %v3424, 5
    %vm3503 = vcmp.eq.s32.totalorder %v3461, 5
    %s3504 = sld [smem:[#allocation2 + $0xf]]
    %v3505 = vstv %s3504
    %v3506 = vsel %vm3502, %v3505, 0.0
    %v3507 = vsel %vm3503, %v3505, 0.0
    %v3508 = vadd.f32 %v3500, %v3506
    %v3509 = vadd.f32 %v3501, %v3507
    %vm3510 = vcmp.eq.s32.totalorder %v3424, 6
    %vm3511 = vcmp.eq.s32.totalorder %v3461, 6
    %s3512 = sld [smem:[#allocation2 + $0x10]]
    %v3513 = vstv %s3512
    %v3514 = vsel %vm3510, %v3513, 0.0
    %v3515 = vsel %vm3511, %v3513, 0.0
    %v3516 = vadd.f32 %v3508, %v3514
    %v3517 = vadd.f32 %v3509, %v3515
    %vm3518 = vcmp.eq.s32.totalorder %v3424, 7
    %vm3519 = vcmp.eq.s32.totalorder %v3461, 7
    %s3520 = sld [smem:[#allocation2 + $0x11]]
    %v3521 = vstv %s3520
    %v3522 = vsel %vm3518, %v3521, 0.0
    %v3523 = vsel %vm3519, %v3521, 0.0
    %v3524 = vadd.f32 %v3516, %v3522
    %v3525 = vadd.f32 %v3517, %v3523
    %vm3526 = vcmp.eq.s32.totalorder %v3424, 8
    %vm3527 = vcmp.eq.s32.totalorder %v3461, 8
    %s3528 = sld [smem:[#allocation2 + $0x12]]
    %v3529 = vstv %s3528
    %v3530 = vsel %vm3526, %v3529, 0.0
    %v3531 = vsel %vm3527, %v3529, 0.0
    %v3532 = vadd.f32 %v3524, %v3530
    %v3533 = vadd.f32 %v3525, %v3531
    %vm3534 = vcmp.eq.s32.totalorder %v3424, 9
    %vm3535 = vcmp.eq.s32.totalorder %v3461, 9
    %s3536 = sld [smem:[#allocation2 + $0x13]]
    %v3537 = vstv %s3536
    %v3538 = vsel %vm3534, %v3537, 0.0
    %v3539 = vsel %vm3535, %v3537, 0.0
    %v3540 = vadd.f32 %v3532, %v3538
    %v3541 = vadd.f32 %v3533, %v3539
    %v3542 = vadd.f32 %v2938, %v3540
    %v3543 = vadd.f32 %v2939, %v3541
    %3544 = vset.pattern.permute.xlu0 2
    %3545 = vperm.xlu0 %3544, %v2256
    %v3546 = vpop.permute.xlu0 %3545
    %3548 = vset.pattern.permute.xlu0 2
    %3549 = vperm.xlu0 %3548, %v2257
    %v3550 = vpop.permute.xlu0 %3549
    %3552 = vset.pattern.permute.xlu0 2
    %3553 = vperm.xlu0 %3552, %v2258
    %v3554 = vpop.permute.xlu0 %3553
    %3556 = vset.pattern.permute.xlu0 2
    %3557 = vperm.xlu0 %3556, %v2259
    %v3558 = vpop.permute.xlu0 %3557
    %3560 = vset.pattern.permute.xlu0 2
    %3561 = vperm.xlu0 %3560, %v2260
    %v3562 = vpop.permute.xlu0 %3561
    %3564 = vset.pattern.permute.xlu0 2
    %3565 = vperm.xlu0 %3564, %v2261
    %v3566 = vpop.permute.xlu0 %3565
    %3568 = vset.pattern.permute.xlu0 2
    %3569 = vperm.xlu0 %3568, %v2262
    %v3570 = vpop.permute.xlu0 %3569
    %3572 = vset.pattern.permute.xlu0 2
    %3573 = vperm.xlu0 %3572, %v2263
    %v3574 = vpop.permute.xlu0 %3573
    %3576 = vset.pattern.permute.xlu0 2
    %3577 = vperm.xlu0 %3576, %v2264
    %v3578 = vpop.permute.xlu0 %3577
    %3580 = vset.pattern.permute.xlu0 2
    %3581 = vperm.xlu0 %3580, %v2265
    %v3582 = vpop.permute.xlu0 %3581
    %3584 = vset.pattern.permute.xlu0 2
    %3585 = vperm.xlu0 %3584, %v2266
    %v3586 = vpop.permute.xlu0 %3585
    %3588 = vset.pattern.permute.xlu0 2
    %3589 = vperm.xlu0 %3588, %v2267
    %v3590 = vpop.permute.xlu0 %3589
    %3592 = vset.pattern.permute.xlu0 2
    %3593 = vperm.xlu0 %3592, %v2268
    %v3594 = vpop.permute.xlu0 %3593
    %3596 = vset.pattern.permute.xlu0 2
    %3597 = vperm.xlu0 %3596, %v2269
    %v3598 = vpop.permute.xlu0 %3597
    %3600 = vset.pattern.permute.xlu0 2
    %3601 = vperm.xlu0 %3600, %v2270
    %v3602 = vpop.permute.xlu0 %3601
    %3604 = vset.pattern.permute.xlu0 2
    %3605 = vperm.xlu0 %3604, %v2271
    %v3606 = vpop.permute.xlu0 %3605
    %3608 = vset.pattern.permute.xlu0 2
    %3609 = vperm.xlu0 %3608, %v2288
    %v3610 = vpop.permute.xlu0 %3609
    %3612 = vset.pattern.permute.xlu0 2
    %3613 = vperm.xlu0 %3612, %v2289
    %v3614 = vpop.permute.xlu0 %3613
    %3616 = vset.pattern.permute.xlu0 2
    %3617 = vperm.xlu0 %3616, %v2290
    %v3618 = vpop.permute.xlu0 %3617
    %3620 = vset.pattern.permute.xlu0 2
    %3621 = vperm.xlu0 %3620, %v2291
    %v3622 = vpop.permute.xlu0 %3621
    %3624 = vset.pattern.permute.xlu0 2
    %3625 = vperm.xlu0 %3624, %v2292
    %v3626 = vpop.permute.xlu0 %3625
    %3628 = vset.pattern.permute.xlu0 2
    %3629 = vperm.xlu0 %3628, %v2293
    %v3630 = vpop.permute.xlu0 %3629
    %3632 = vset.pattern.permute.xlu0 2
    %3633 = vperm.xlu0 %3632, %v2294
    %v3634 = vpop.permute.xlu0 %3633
    %3636 = vset.pattern.permute.xlu0 2
    %3637 = vperm.xlu0 %3636, %v2295
    %v3638 = vpop.permute.xlu0 %3637
    %3640 = vset.pattern.permute.xlu0 2
    %3641 = vperm.xlu0 %3640, %v2296
    %v3642 = vpop.permute.xlu0 %3641
    %3644 = vset.pattern.permute.xlu0 2
    %3645 = vperm.xlu0 %3644, %v2297
    %v3646 = vpop.permute.xlu0 %3645
    %3648 = vset.pattern.permute.xlu0 2
    %3649 = vperm.xlu0 %3648, %v2298
    %v3650 = vpop.permute.xlu0 %3649
    %3652 = vset.pattern.permute.xlu0 2
    %3653 = vperm.xlu0 %3652, %v2299
    %v3654 = vpop.permute.xlu0 %3653
    %3656 = vset.pattern.permute.xlu0 2
    %3657 = vperm.xlu0 %3656, %v2300
    %v3658 = vpop.permute.xlu0 %3657
    %3660 = vset.pattern.permute.xlu0 2
    %3661 = vperm.xlu0 %3660, %v2301
    %v3662 = vpop.permute.xlu0 %3661
    %3664 = vset.pattern.permute.xlu0 2
    %3665 = vperm.xlu0 %3664, %v2302
    %v3666 = vpop.permute.xlu0 %3665
    %3668 = vset.pattern.permute.xlu0 2
    %3669 = vperm.xlu0 %3668, %v2303
    %v3670 = vpop.permute.xlu0 %3669
    %vm3672 = vcmp.gt.f32.partialorder %v3546, %v2233
    %vm3673 = vcmp.gt.f32.partialorder %v3546, %v2237
    %vm3674 = vcmp.gt.f32.partialorder %v3550, %v2233
    %vm3675 = vcmp.gt.f32.partialorder %v3550, %v2237
    %vm3676 = vcmp.gt.f32.partialorder %v3554, %v2233
    %vm3677 = vcmp.gt.f32.partialorder %v3554, %v2237
    %vm3678 = vcmp.gt.f32.partialorder %v3558, %v2233
    %vm3679 = vcmp.gt.f32.partialorder %v3558, %v2237
    %vm3680 = vcmp.gt.f32.partialorder %v3562, %v2233
    %vm3681 = vcmp.gt.f32.partialorder %v3562, %v2237
    %vm3682 = vcmp.gt.f32.partialorder %v3566, %v2233
    %vm3683 = vcmp.gt.f32.partialorder %v3566, %v2237
    %vm3684 = vcmp.gt.f32.partialorder %v3570, %v2233
    %vm3685 = vcmp.gt.f32.partialorder %v3570, %v2237
    %vm3686 = vcmp.gt.f32.partialorder %v3574, %v2233
    %vm3687 = vcmp.gt.f32.partialorder %v3574, %v2237
    %vm3688 = vcmp.gt.f32.partialorder %v3578, %v2233
    %vm3689 = vcmp.gt.f32.partialorder %v3578, %v2237
    %vm3690 = vcmp.gt.f32.partialorder %v3582, %v2233
    %vm3691 = vcmp.gt.f32.partialorder %v3582, %v2237
    %vm3692 = vcmp.gt.f32.partialorder %v3586, %v2233
    %vm3693 = vcmp.gt.f32.partialorder %v3586, %v2237
    %vm3694 = vcmp.gt.f32.partialorder %v3590, %v2233
    %vm3695 = vcmp.gt.f32.partialorder %v3590, %v2237
    %vm3696 = vcmp.gt.f32.partialorder %v3594, %v2233
    %vm3697 = vcmp.gt.f32.partialorder %v3594, %v2237
    %vm3698 = vcmp.gt.f32.partialorder %v3598, %v2233
    %vm3699 = vcmp.gt.f32.partialorder %v3598, %v2237
    %vm3700 = vcmp.gt.f32.partialorder %v3602, %v2233
    %vm3701 = vcmp.gt.f32.partialorder %v3602, %v2237
    %vm3702 = vcmp.gt.f32.partialorder %v3606, %v2233
    %vm3703 = vcmp.gt.f32.partialorder %v3606, %v2237
    %vm3704 = vcmp.gt.f32.partialorder %v3610, %v2233
    %vm3705 = vcmp.gt.f32.partialorder %v3610, %v2237
    %vm3706 = vcmp.gt.f32.partialorder %v3614, %v2233
    %vm3707 = vcmp.gt.f32.partialorder %v3614, %v2237
    %vm3708 = vcmp.gt.f32.partialorder %v3618, %v2233
    %vm3709 = vcmp.gt.f32.partialorder %v3618, %v2237
    %vm3710 = vcmp.gt.f32.partialorder %v3622, %v2233
    %vm3711 = vcmp.gt.f32.partialorder %v3622, %v2237
    %vm3712 = vcmp.gt.f32.partialorder %v3626, %v2233
    %vm3713 = vcmp.gt.f32.partialorder %v3626, %v2237
    %vm3714 = vcmp.gt.f32.partialorder %v3630, %v2233
    %vm3715 = vcmp.gt.f32.partialorder %v3630, %v2237
    %vm3716 = vcmp.gt.f32.partialorder %v3634, %v2233
    %vm3717 = vcmp.gt.f32.partialorder %v3634, %v2237
    %vm3718 = vcmp.gt.f32.partialorder %v3638, %v2233
    %vm3719 = vcmp.gt.f32.partialorder %v3638, %v2237
    %vm3720 = vcmp.gt.f32.partialorder %v3642, %v2233
    %vm3721 = vcmp.gt.f32.partialorder %v3642, %v2237
    %vm3722 = vcmp.gt.f32.partialorder %v3646, %v2233
    %vm3723 = vcmp.gt.f32.partialorder %v3646, %v2237
    %vm3724 = vcmp.gt.f32.partialorder %v3650, %v2233
    %vm3725 = vcmp.gt.f32.partialorder %v3650, %v2237
    %vm3726 = vcmp.gt.f32.partialorder %v3654, %v2233
    %vm3727 = vcmp.gt.f32.partialorder %v3654, %v2237
    %vm3728 = vcmp.gt.f32.partialorder %v3658, %v2233
    %vm3729 = vcmp.gt.f32.partialorder %v3658, %v2237
    %vm3730 = vcmp.gt.f32.partialorder %v3662, %v2233
    %vm3731 = vcmp.gt.f32.partialorder %v3662, %v2237
    %vm3732 = vcmp.gt.f32.partialorder %v3666, %v2233
    %vm3733 = vcmp.gt.f32.partialorder %v3666, %v2237
    %vm3734 = vcmp.gt.f32.partialorder %v3670, %v2233
    %vm3735 = vcmp.gt.f32.partialorder %v3670, %v2237
    %vm3736 = vcmp.eq.f32.partialorder %v3546, %v2233
    %vm3737 = vcmp.eq.f32.partialorder %v3546, %v2237
    %vm3738 = vcmp.eq.f32.partialorder %v3550, %v2233
    %vm3739 = vcmp.eq.f32.partialorder %v3550, %v2237
    %vm3740 = vcmp.eq.f32.partialorder %v3554, %v2233
    %vm3741 = vcmp.eq.f32.partialorder %v3554, %v2237
    %vm3742 = vcmp.eq.f32.partialorder %v3558, %v2233
    %vm3743 = vcmp.eq.f32.partialorder %v3558, %v2237
    %vm3744 = vcmp.eq.f32.partialorder %v3562, %v2233
    %vm3745 = vcmp.eq.f32.partialorder %v3562, %v2237
    %vm3746 = vcmp.eq.f32.partialorder %v3566, %v2233
    %vm3747 = vcmp.eq.f32.partialorder %v3566, %v2237
    %vm3748 = vcmp.eq.f32.partialorder %v3570, %v2233
    %vm3749 = vcmp.eq.f32.partialorder %v3570, %v2237
    %vm3750 = vcmp.eq.f32.partialorder %v3574, %v2233
    %vm3751 = vcmp.eq.f32.partialorder %v3574, %v2237
    %vm3752 = vcmp.eq.f32.partialorder %v3578, %v2233
    %vm3753 = vcmp.eq.f32.partialorder %v3578, %v2237
    %vm3754 = vcmp.eq.f32.partialorder %v3582, %v2233
    %vm3755 = vcmp.eq.f32.partialorder %v3582, %v2237
    %vm3756 = vcmp.eq.f32.partialorder %v3586, %v2233
    %vm3757 = vcmp.eq.f32.partialorder %v3586, %v2237
    %vm3758 = vcmp.eq.f32.partialorder %v3590, %v2233
    %vm3759 = vcmp.eq.f32.partialorder %v3590, %v2237
    %vm3760 = vcmp.eq.f32.partialorder %v3594, %v2233
    %vm3761 = vcmp.eq.f32.partialorder %v3594, %v2237
    %vm3762 = vcmp.eq.f32.partialorder %v3598, %v2233
    %vm3763 = vcmp.eq.f32.partialorder %v3598, %v2237
    %vm3764 = vcmp.eq.f32.partialorder %v3602, %v2233
    %vm3765 = vcmp.eq.f32.partialorder %v3602, %v2237
    %vm3766 = vcmp.eq.f32.partialorder %v3606, %v2233
    %vm3767 = vcmp.eq.f32.partialorder %v3606, %v2237
    %vm3768 = vcmp.eq.f32.partialorder %v3610, %v2233
    %vm3769 = vcmp.eq.f32.partialorder %v3610, %v2237
    %vm3770 = vcmp.eq.f32.partialorder %v3614, %v2233
    %vm3771 = vcmp.eq.f32.partialorder %v3614, %v2237
    %vm3772 = vcmp.eq.f32.partialorder %v3618, %v2233
    %vm3773 = vcmp.eq.f32.partialorder %v3618, %v2237
    %vm3774 = vcmp.eq.f32.partialorder %v3622, %v2233
    %vm3775 = vcmp.eq.f32.partialorder %v3622, %v2237
    %vm3776 = vcmp.eq.f32.partialorder %v3626, %v2233
    %vm3777 = vcmp.eq.f32.partialorder %v3626, %v2237
    %vm3778 = vcmp.eq.f32.partialorder %v3630, %v2233
    %vm3779 = vcmp.eq.f32.partialorder %v3630, %v2237
    %vm3780 = vcmp.eq.f32.partialorder %v3634, %v2233
    %vm3781 = vcmp.eq.f32.partialorder %v3634, %v2237
    %vm3782 = vcmp.eq.f32.partialorder %v3638, %v2233
    %vm3783 = vcmp.eq.f32.partialorder %v3638, %v2237
    %vm3784 = vcmp.eq.f32.partialorder %v3642, %v2233
    %vm3785 = vcmp.eq.f32.partialorder %v3642, %v2237
    %vm3786 = vcmp.eq.f32.partialorder %v3646, %v2233
    %vm3787 = vcmp.eq.f32.partialorder %v3646, %v2237
    %vm3788 = vcmp.eq.f32.partialorder %v3650, %v2233
    %vm3789 = vcmp.eq.f32.partialorder %v3650, %v2237
    %vm3790 = vcmp.eq.f32.partialorder %v3654, %v2233
    %vm3791 = vcmp.eq.f32.partialorder %v3654, %v2237
    %vm3792 = vcmp.eq.f32.partialorder %v3658, %v2233
    %vm3793 = vcmp.eq.f32.partialorder %v3658, %v2237
    %vm3794 = vcmp.eq.f32.partialorder %v3662, %v2233
    %vm3795 = vcmp.eq.f32.partialorder %v3662, %v2237
    %vm3796 = vcmp.eq.f32.partialorder %v3666, %v2233
    %vm3797 = vcmp.eq.f32.partialorder %v3666, %v2237
    %vm3798 = vcmp.eq.f32.partialorder %v3670, %v2233
    %vm3799 = vcmp.eq.f32.partialorder %v3670, %v2237
    %vm3800 = vmand %vm3736, %vm1705
    %vm3801 = vmand %vm3737, %vm1706
    %vm3802 = vmand %vm3738, %vm1707
    %vm3803 = vmand %vm3739, %vm1708
    %vm3804 = vmand %vm3740, %vm1709
    %vm3805 = vmand %vm3741, %vm1710
    %vm3806 = vmand %vm3742, %vm1711
    %vm3807 = vmand %vm3743, %vm1712
    %vm3808 = vmand %vm3744, %vm1713
    %vm3809 = vmand %vm3745, %vm1714
    %vm3810 = vmand %vm3746, %vm1715
    %vm3811 = vmand %vm3747, %vm1716
    %vm3812 = vmand %vm3748, %vm1717
    %vm3813 = vmand %vm3749, %vm1718
    %vm3814 = vmand %vm3750, %vm1719
    %vm3815 = vmand %vm3751, %vm1720
    %vm3816 = vmand %vm3752, %vm1721
    %vm3817 = vmand %vm3753, %vm1722
    %vm3818 = vmand %vm3754, %vm1723
    %vm3819 = vmand %vm3755, %vm1724
    %vm3820 = vmand %vm3756, %vm1725
    %vm3821 = vmand %vm3757, %vm1726
    %vm3822 = vmand %vm3758, %vm1727
    %vm3823 = vmand %vm3759, %vm1728
    %vm3824 = vmand %vm3760, %vm1729
    %vm3825 = vmand %vm3761, %vm1730
    %vm3826 = vmand %vm3762, %vm1731
    %vm3827 = vmand %vm3763, %vm1732
    %vm3828 = vmand %vm3764, %vm1733
    %vm3829 = vmand %vm3765, %vm1734
    %vm3830 = vmand %vm3766, %vm1735
    %vm3831 = vmand %vm3767, %vm1736
    %vm3832 = vmand %vm3768, %vm1737
    %vm3833 = vmand %vm3769, %vm1738
    %vm3834 = vmand %vm3770, %vm1739
    %vm3835 = vmand %vm3771, %vm1740
    %vm3836 = vmand %vm3772, %vm1741
    %vm3837 = vmand %vm3773, %vm1742
    %vm3838 = vmand %vm3774, %vm1743
    %vm3839 = vmand %vm3775, %vm1744
    %vm3840 = vmand %vm3776, %vm1745
    %vm3841 = vmand %vm3777, %vm1746
    %vm3842 = vmand %vm3778, %vm1747
    %vm3843 = vmand %vm3779, %vm1748
    %vm3844 = vmand %vm3780, %vm1749
    %vm3845 = vmand %vm3781, %vm1750
    %vm3846 = vmand %vm3782, %vm1751
    %vm3847 = vmand %vm3783, %vm1752
    %vm3848 = vmand %vm3784, %vm1753
    %vm3849 = vmand %vm3785, %vm1754
    %vm3850 = vmand %vm3786, %vm1755
    %vm3851 = vmand %vm3787, %vm1756
    %vm3852 = vmand %vm3788, %vm1757
    %vm3853 = vmand %vm3789, %vm1758
    %vm3854 = vmand %vm3790, %vm1759
    %vm3855 = vmand %vm3791, %vm1760
    %vm3856 = vmand %vm3792, %vm1761
    %vm3857 = vmand %vm3793, %vm1762
    %vm3858 = vmand %vm3794, %vm1763
    %vm3859 = vmand %vm3795, %vm1764
    %vm3860 = vmand %vm3796, %vm1765
    %vm3861 = vmand %vm3797, %vm1766
    %vm3862 = vmand %vm3798, %vm1767
    %vm3863 = vmand %vm3799, %vm1768
    %vm3864 = vmor %vm3672, %vm3800
    %vm3865 = vmor %vm3673, %vm3801
    %vm3866 = vmor %vm3674, %vm3802
    %vm3867 = vmor %vm3675, %vm3803
    %vm3868 = vmor %vm3676, %vm3804
    %vm3869 = vmor %vm3677, %vm3805
    %vm3870 = vmor %vm3678, %vm3806
    %vm3871 = vmor %vm3679, %vm3807
    %vm3872 = vmor %vm3680, %vm3808
    %vm3873 = vmor %vm3681, %vm3809
    %vm3874 = vmor %vm3682, %vm3810
    %vm3875 = vmor %vm3683, %vm3811
    %vm3876 = vmor %vm3684, %vm3812
    %vm3877 = vmor %vm3685, %vm3813
    %vm3878 = vmor %vm3686, %vm3814
    %vm3879 = vmor %vm3687, %vm3815
    %vm3880 = vmor %vm3688, %vm3816
    %vm3881 = vmor %vm3689, %vm3817
    %vm3882 = vmor %vm3690, %vm3818
    %vm3883 = vmor %vm3691, %vm3819
    %vm3884 = vmor %vm3692, %vm3820
    %vm3885 = vmor %vm3693, %vm3821
    %vm3886 = vmor %vm3694, %vm3822
    %vm3887 = vmor %vm3695, %vm3823
    %vm3888 = vmor %vm3696, %vm3824
    %vm3889 = vmor %vm3697, %vm3825
    %vm3890 = vmor %vm3698, %vm3826
    %vm3891 = vmor %vm3699, %vm3827
    %vm3892 = vmor %vm3700, %vm3828
    %vm3893 = vmor %vm3701, %vm3829
    %vm3894 = vmor %vm3702, %vm3830
    %vm3895 = vmor %vm3703, %vm3831
    %vm3896 = vmor %vm3704, %vm3832
    %vm3897 = vmor %vm3705, %vm3833
    %vm3898 = vmor %vm3706, %vm3834
    %vm3899 = vmor %vm3707, %vm3835
    %vm3900 = vmor %vm3708, %vm3836
    %vm3901 = vmor %vm3709, %vm3837
    %vm3902 = vmor %vm3710, %vm3838
    %vm3903 = vmor %vm3711, %vm3839
    %vm3904 = vmor %vm3712, %vm3840
    %vm3905 = vmor %vm3713, %vm3841
    %vm3906 = vmor %vm3714, %vm3842
    %vm3907 = vmor %vm3715, %vm3843
    %vm3908 = vmor %vm3716, %vm3844
    %vm3909 = vmor %vm3717, %vm3845
    %vm3910 = vmor %vm3718, %vm3846
    %vm3911 = vmor %vm3719, %vm3847
    %vm3912 = vmor %vm3720, %vm3848
    %vm3913 = vmor %vm3721, %vm3849
    %vm3914 = vmor %vm3722, %vm3850
    %vm3915 = vmor %vm3723, %vm3851
    %vm3916 = vmor %vm3724, %vm3852
    %vm3917 = vmor %vm3725, %vm3853
    %vm3918 = vmor %vm3726, %vm3854
    %vm3919 = vmor %vm3727, %vm3855
    %vm3920 = vmor %vm3728, %vm3856
    %vm3921 = vmor %vm3729, %vm3857
    %vm3922 = vmor %vm3730, %vm3858
    %vm3923 = vmor %vm3731, %vm3859
    %vm3924 = vmor %vm3732, %vm3860
    %vm3925 = vmor %vm3733, %vm3861
    %vm3926 = vmor %vm3734, %vm3862
    %vm3927 = vmor %vm3735, %vm3863
    %v3928 = vsel %vm3864, 1, 0
    %v3929 = vsel %vm3865, 1, 0
    %v3930 = vsel %vm3866, 1, 0
    %v3931 = vsel %vm3867, 1, 0
    %v3932 = vsel %vm3868, 1, 0
    %v3933 = vsel %vm3869, 1, 0
    %v3934 = vsel %vm3870, 1, 0
    %v3935 = vsel %vm3871, 1, 0
    %v3936 = vsel %vm3872, 1, 0
    %v3937 = vsel %vm3873, 1, 0
    %v3938 = vsel %vm3874, 1, 0
    %v3939 = vsel %vm3875, 1, 0
    %v3940 = vsel %vm3876, 1, 0
    %v3941 = vsel %vm3877, 1, 0
    %v3942 = vsel %vm3878, 1, 0
    %v3943 = vsel %vm3879, 1, 0
    %v3944 = vsel %vm3880, 1, 0
    %v3945 = vsel %vm3881, 1, 0
    %v3946 = vsel %vm3882, 1, 0
    %v3947 = vsel %vm3883, 1, 0
    %v3948 = vsel %vm3884, 1, 0
    %v3949 = vsel %vm3885, 1, 0
    %v3950 = vsel %vm3886, 1, 0
    %v3951 = vsel %vm3887, 1, 0
    %v3952 = vsel %vm3888, 1, 0
    %v3953 = vsel %vm3889, 1, 0
    %v3954 = vsel %vm3890, 1, 0
    %v3955 = vsel %vm3891, 1, 0
    %v3956 = vsel %vm3892, 1, 0
    %v3957 = vsel %vm3893, 1, 0
    %v3958 = vsel %vm3894, 1, 0
    %v3959 = vsel %vm3895, 1, 0
    %v3960 = vsel %vm3896, 1, 0
    %v3961 = vsel %vm3897, 1, 0
    %v3962 = vsel %vm3898, 1, 0
    %v3963 = vsel %vm3899, 1, 0
    %v3964 = vsel %vm3900, 1, 0
    %v3965 = vsel %vm3901, 1, 0
    %v3966 = vsel %vm3902, 1, 0
    %v3967 = vsel %vm3903, 1, 0
    %v3968 = vsel %vm3904, 1, 0
    %v3969 = vsel %vm3905, 1, 0
    %v3970 = vsel %vm3906, 1, 0
    %v3971 = vsel %vm3907, 1, 0
    %v3972 = vsel %vm3908, 1, 0
    %v3973 = vsel %vm3909, 1, 0
    %v3974 = vsel %vm3910, 1, 0
    %v3975 = vsel %vm3911, 1, 0
    %v3976 = vsel %vm3912, 1, 0
    %v3977 = vsel %vm3913, 1, 0
    %v3978 = vsel %vm3914, 1, 0
    %v3979 = vsel %vm3915, 1, 0
    %v3980 = vsel %vm3916, 1, 0
    %v3981 = vsel %vm3917, 1, 0
    %v3982 = vsel %vm3918, 1, 0
    %v3983 = vsel %vm3919, 1, 0
    %v3984 = vsel %vm3920, 1, 0
    %v3985 = vsel %vm3921, 1, 0
    %v3986 = vsel %vm3922, 1, 0
    %v3987 = vsel %vm3923, 1, 0
    %v3988 = vsel %vm3924, 1, 0
    %v3989 = vsel %vm3925, 1, 0
    %v3990 = vsel %vm3926, 1, 0
    %v3991 = vsel %vm3927, 1, 0
    %v3992 = vadd.s32 %v3928, %v3932
    %v3993 = vadd.s32 %v3930, %v3934
    %v3994 = vadd.s32 %v3992, %v3936
    %v3995 = vadd.s32 %v3993, %v3938
    %v3996 = vadd.s32 %v3994, %v3940
    %v3997 = vadd.s32 %v3995, %v3942
    %v3998 = vadd.s32 %v3996, %v3944
    %v3999 = vadd.s32 %v3997, %v3946
    %v4000 = vadd.s32 %v3998, %v3948
    %v4001 = vadd.s32 %v3999, %v3950
    %v4002 = vadd.s32 %v4000, %v3952
    %v4003 = vadd.s32 %v4001, %v3954
    %v4004 = vadd.s32 %v4002, %v3956
    %v4005 = vadd.s32 %v4003, %v3958
    %v4006 = vadd.s32 %v4004, %v3960
    %v4007 = vadd.s32 %v4005, %v3962
    %v4008 = vadd.s32 %v4006, %v3964
    %v4009 = vadd.s32 %v4007, %v3966
    %v4010 = vadd.s32 %v4008, %v3968
    %v4011 = vadd.s32 %v4009, %v3970
    %v4012 = vadd.s32 %v4010, %v3972
    %v4013 = vadd.s32 %v4011, %v3974
    %v4014 = vadd.s32 %v4012, %v3976
    %v4015 = vadd.s32 %v4013, %v3978
    %v4016 = vadd.s32 %v4014, %v3980
    %v4017 = vadd.s32 %v4015, %v3982
    %v4018 = vadd.s32 %v4016, %v3984
    %v4019 = vadd.s32 %v4017, %v3986
    %v4020 = vadd.s32 %v4018, %v3988
    %v4021 = vadd.s32 %v4019, %v3990
    %v4022 = vadd.s32 %v4020, %v4021
    %v4023 = vrot.slane %v4022, 4
    %v4024 = vadd.s32 %v4022, %v4023
    %v4025 = vrot.slane %v4024, 2
    %v4026 = vadd.s32 %v4024, %v4025
    %v4027 = vrot.slane %v4026, 1
    %v4028 = vadd.s32 %v4026, %v4027
    %v4029 = vadd.s32 %v3929, %v3933
    %v4030 = vadd.s32 %v3931, %v3935
    %v4031 = vadd.s32 %v4029, %v3937
    %v4032 = vadd.s32 %v4030, %v3939
    %v4033 = vadd.s32 %v4031, %v3941
    %v4034 = vadd.s32 %v4032, %v3943
    %v4035 = vadd.s32 %v4033, %v3945
    %v4036 = vadd.s32 %v4034, %v3947
    %v4037 = vadd.s32 %v4035, %v3949
    %v4038 = vadd.s32 %v4036, %v3951
    %v4039 = vadd.s32 %v4037, %v3953
    %v4040 = vadd.s32 %v4038, %v3955
    %v4041 = vadd.s32 %v4039, %v3957
    %v4042 = vadd.s32 %v4040, %v3959
    %v4043 = vadd.s32 %v4041, %v3961
    %v4044 = vadd.s32 %v4042, %v3963
    %v4045 = vadd.s32 %v4043, %v3965
    %v4046 = vadd.s32 %v4044, %v3967
    %v4047 = vadd.s32 %v4045, %v3969
    %v4048 = vadd.s32 %v4046, %v3971
    %v4049 = vadd.s32 %v4047, %v3973
    %v4050 = vadd.s32 %v4048, %v3975
    %v4051 = vadd.s32 %v4049, %v3977
    %v4052 = vadd.s32 %v4050, %v3979
    %v4053 = vadd.s32 %v4051, %v3981
    %v4054 = vadd.s32 %v4052, %v3983
    %v4055 = vadd.s32 %v4053, %v3985
    %v4056 = vadd.s32 %v4054, %v3987
    %v4057 = vadd.s32 %v4055, %v3989
    %v4058 = vadd.s32 %v4056, %v3991
    %v4059 = vadd.s32 %v4057, %v4058
    %v4060 = vrot.slane %v4059, 4
    %v4061 = vadd.s32 %v4059, %v4060
    %v4062 = vrot.slane %v4061, 2
    %v4063 = vadd.s32 %v4061, %v4062
    %v4064 = vrot.slane %v4063, 1
    %v4065 = vadd.s32 %v4063, %v4064
    %vm4066 = vcmp.eq.s32.totalorder %v4028, 0
    %vm4067 = vcmp.eq.s32.totalorder %v4065, 0
    %s4068 = sld [smem:[#allocation2 + $0x14]]
    %v4069 = vstv %s4068
    %v4070 = vsel %vm4066, %v4069, 0.0
    %v4071 = vsel %vm4067, %v4069, 0.0
    %v4072 = vadd.f32 %v4070, 0.0
    %v4073 = vadd.f32 %v4071, 0.0
    %vm4074 = vcmp.eq.s32.totalorder %v4028, 1
    %vm4075 = vcmp.eq.s32.totalorder %v4065, 1
    %s4076 = sld [smem:[#allocation2 + $0x15]]
    %v4077 = vstv %s4076
    %v4078 = vsel %vm4074, %v4077, 0.0
    %v4079 = vsel %vm4075, %v4077, 0.0
    %v4080 = vadd.f32 %v4072, %v4078
    %v4081 = vadd.f32 %v4073, %v4079
    %vm4082 = vcmp.eq.s32.totalorder %v4028, 2
    %vm4083 = vcmp.eq.s32.totalorder %v4065, 2
    %s4084 = sld [smem:[#allocation2 + $0x16]]
    %v4085 = vstv %s4084
    %v4086 = vsel %vm4082, %v4085, 0.0
    %v4087 = vsel %vm4083, %v4085, 0.0
    %v4088 = vadd.f32 %v4080, %v4086
    %v4089 = vadd.f32 %v4081, %v4087
    %vm4090 = vcmp.eq.s32.totalorder %v4028, 3
    %vm4091 = vcmp.eq.s32.totalorder %v4065, 3
    %s4092 = sld [smem:[#allocation2 + $0x17]]
    %v4093 = vstv %s4092
    %v4094 = vsel %vm4090, %v4093, 0.0
    %v4095 = vsel %vm4091, %v4093, 0.0
    %v4096 = vadd.f32 %v4088, %v4094
    %v4097 = vadd.f32 %v4089, %v4095
    %vm4098 = vcmp.eq.s32.totalorder %v4028, 4
    %vm4099 = vcmp.eq.s32.totalorder %v4065, 4
    %s4100 = sld [smem:[#allocation2 + $0x18]]
    %v4101 = vstv %s4100
    %v4102 = vsel %vm4098, %v4101, 0.0
    %v4103 = vsel %vm4099, %v4101, 0.0
    %v4104 = vadd.f32 %v4096, %v4102
    %v4105 = vadd.f32 %v4097, %v4103
    %vm4106 = vcmp.eq.s32.totalorder %v4028, 5
    %vm4107 = vcmp.eq.s32.totalorder %v4065, 5
    %s4108 = sld [smem:[#allocation2 + $0x19]]
    %v4109 = vstv %s4108
    %v4110 = vsel %vm4106, %v4109, 0.0
    %v4111 = vsel %vm4107, %v4109, 0.0
    %v4112 = vadd.f32 %v4104, %v4110
    %v4113 = vadd.f32 %v4105, %v4111
    %vm4114 = vcmp.eq.s32.totalorder %v4028, 6
    %vm4115 = vcmp.eq.s32.totalorder %v4065, 6
    %s4116 = sld [smem:[#allocation2 + $0x1a]]
    %v4117 = vstv %s4116
    %v4118 = vsel %vm4114, %v4117, 0.0
    %v4119 = vsel %vm4115, %v4117, 0.0
    %v4120 = vadd.f32 %v4112, %v4118
    %v4121 = vadd.f32 %v4113, %v4119
    %vm4122 = vcmp.eq.s32.totalorder %v4028, 7
    %vm4123 = vcmp.eq.s32.totalorder %v4065, 7
    %s4124 = sld [smem:[#allocation2 + $0x1b]]
    %v4125 = vstv %s4124
    %v4126 = vsel %vm4122, %v4125, 0.0
    %v4127 = vsel %vm4123, %v4125, 0.0
    %v4128 = vadd.f32 %v4120, %v4126
    %v4129 = vadd.f32 %v4121, %v4127
    %vm4130 = vcmp.eq.s32.totalorder %v4028, 8
    %vm4131 = vcmp.eq.s32.totalorder %v4065, 8
    %s4132 = sld [smem:[#allocation2 + $0x1c]]
    %v4133 = vstv %s4132
    %v4134 = vsel %vm4130, %v4133, 0.0
    %v4135 = vsel %vm4131, %v4133, 0.0
    %v4136 = vadd.f32 %v4128, %v4134
    %v4137 = vadd.f32 %v4129, %v4135
    %vm4138 = vcmp.eq.s32.totalorder %v4028, 9
    %vm4139 = vcmp.eq.s32.totalorder %v4065, 9
    %s4140 = sld [smem:[#allocation2 + $0x1d]]
    %v4141 = vstv %s4140
    %v4142 = vsel %vm4138, %v4141, 0.0
    %v4143 = vsel %vm4139, %v4141, 0.0
    %v4144 = vadd.f32 %v4136, %v4142
    %v4145 = vadd.f32 %v4137, %v4143
    %v4146 = vadd.f32 %v3542, %v4144
    %v4147 = vadd.f32 %v3543, %v4145
    %v4148 = vsel %vm1915, %v4146, 0.0
    %v4149 = vsel %vm1915, %v4147, 0.0
    %4150 = vxpose.xlu0.b32.start [1/16] %v4148, 128
    %4151 = vxpose.xlu0.b32.cont [2/16] 0.0, 128
    %4152 = vxpose.xlu0.b32.cont [3/16] 0.0, 128
    %4153 = vxpose.xlu0.b32.cont [4/16] 0.0, 128
    %4154 = vxpose.xlu0.b32.cont [5/16] 0.0, 128
    %4155 = vxpose.xlu0.b32.cont [6/16] 0.0, 128
    %4156 = vxpose.xlu0.b32.cont [7/16] 0.0, 128
    %4157 = vxpose.xlu0.b32.cont [8/16] 0.0, 128
    %4158 = vxpose.xlu0.b32.cont [9/16] 0.0, 128
    %4159 = vxpose.xlu0.b32.cont [10/16] 0.0, 128
    %4160 = vxpose.xlu0.b32.cont [11/16] 0.0, 128
    %4161 = vxpose.xlu0.b32.cont [12/16] 0.0, 128
    %4162 = vxpose.xlu0.b32.cont [13/16] 0.0, 128
    %4163 = vxpose.xlu0.b32.cont [14/16] 0.0, 128
    %4164 = vxpose.xlu0.b32.cont [15/16] 0.0, 128
    %4165 = vxpose.xlu0.b32.end [16/16] 0.0, 128
    %v4166 = vpop.trf.xlu0
    %v4167 = vpop.trf.xlu0
    %v4168 = vpop.trf.xlu0
    %v4169 = vpop.trf.xlu0
    %v4170 = vpop.trf.xlu0
    %v4171 = vpop.trf.xlu0
    %v4172 = vpop.trf.xlu0
    %v4173 = vpop.trf.xlu0
    %v4174 = vpop.trf.xlu0
    %v4175 = vpop.trf.xlu0
    %v4176 = vpop.trf.xlu0
    %v4177 = vpop.trf.xlu0
    %v4178 = vpop.trf.xlu0
    %v4179 = vpop.trf.xlu0
    %v4180 = vpop.trf.xlu0
    %v4181 = vpop.trf.xlu0
    %4182 = vxpose.xlu0.b32.start [1/16] %v4149, 128
    %4183 = vxpose.xlu0.b32.cont [2/16] 0.0, 128
    %4184 = vxpose.xlu0.b32.cont [3/16] 0.0, 128
    %4185 = vxpose.xlu0.b32.cont [4/16] 0.0, 128
    %4186 = vxpose.xlu0.b32.cont [5/16] 0.0, 128
    %4187 = vxpose.xlu0.b32.cont [6/16] 0.0, 128
    %4188 = vxpose.xlu0.b32.cont [7/16] 0.0, 128
    %4189 = vxpose.xlu0.b32.cont [8/16] 0.0, 128
    %4190 = vxpose.xlu0.b32.cont [9/16] 0.0, 128
    %4191 = vxpose.xlu0.b32.cont [10/16] 0.0, 128
    %4192 = vxpose.xlu0.b32.cont [11/16] 0.0, 128
    %4193 = vxpose.xlu0.b32.cont [12/16] 0.0, 128
    %4194 = vxpose.xlu0.b32.cont [13/16] 0.0, 128
    %4195 = vxpose.xlu0.b32.cont [14/16] 0.0, 128
    %4196 = vxpose.xlu0.b32.cont [15/16] 0.0, 128
    %4197 = vxpose.xlu0.b32.end [16/16] 0.0, 128
    %v4198 = vpop.trf.xlu0
    %v4199 = vpop.trf.xlu0
    %v4200 = vpop.trf.xlu0
    %v4201 = vpop.trf.xlu0
    %v4202 = vpop.trf.xlu0
    %v4203 = vpop.trf.xlu0
    %v4204 = vpop.trf.xlu0
    %v4205 = vpop.trf.xlu0
    %v4206 = vpop.trf.xlu0
    %v4207 = vpop.trf.xlu0
    %v4208 = vpop.trf.xlu0
    %v4209 = vpop.trf.xlu0
    %v4210 = vpop.trf.xlu0
    %v4211 = vpop.trf.xlu0
    %v4212 = vpop.trf.xlu0
    %v4213 = vpop.trf.xlu0
    %4215 = vset.pattern.permute.xlu0 0
    %4216 = vperm.xlu0 %4215, %v4166
    %v4217 = vpop.permute.xlu0 %4216
    %4220 = vset.pattern.permute.xlu0 0
    %4221 = vperm.xlu0 %4220, %v4167
    %v4222 = vpop.permute.xlu0 %4221
    %4225 = vset.pattern.permute.xlu0 0
    %4226 = vperm.xlu0 %4225, %v4168
    %v4227 = vpop.permute.xlu0 %4226
    %4230 = vset.pattern.permute.xlu0 0
    %4231 = vperm.xlu0 %4230, %v4169
    %v4232 = vpop.permute.xlu0 %4231
    %4235 = vset.pattern.permute.xlu0 0
    %4236 = vperm.xlu0 %4235, %v4170
    %v4237 = vpop.permute.xlu0 %4236
    %4240 = vset.pattern.permute.xlu0 0
    %4241 = vperm.xlu0 %4240, %v4171
    %v4242 = vpop.permute.xlu0 %4241
    %4245 = vset.pattern.permute.xlu0 0
    %4246 = vperm.xlu0 %4245, %v4172
    %v4247 = vpop.permute.xlu0 %4246
    %4250 = vset.pattern.permute.xlu0 0
    %4251 = vperm.xlu0 %4250, %v4173
    %v4252 = vpop.permute.xlu0 %4251
    %4255 = vset.pattern.permute.xlu0 0
    %4256 = vperm.xlu0 %4255, %v4174
    %v4257 = vpop.permute.xlu0 %4256
    %4260 = vset.pattern.permute.xlu0 0
    %4261 = vperm.xlu0 %4260, %v4175
    %v4262 = vpop.permute.xlu0 %4261
    %4265 = vset.pattern.permute.xlu0 0
    %4266 = vperm.xlu0 %4265, %v4176
    %v4267 = vpop.permute.xlu0 %4266
    %4270 = vset.pattern.permute.xlu0 0
    %4271 = vperm.xlu0 %4270, %v4177
    %v4272 = vpop.permute.xlu0 %4271
    %4275 = vset.pattern.permute.xlu0 0
    %4276 = vperm.xlu0 %4275, %v4178
    %v4277 = vpop.permute.xlu0 %4276
    %4280 = vset.pattern.permute.xlu0 0
    %4281 = vperm.xlu0 %4280, %v4179
    %v4282 = vpop.permute.xlu0 %4281
    %4285 = vset.pattern.permute.xlu0 0
    %4286 = vperm.xlu0 %4285, %v4180
    %v4287 = vpop.permute.xlu0 %4286
    %4290 = vset.pattern.permute.xlu0 0
    %4291 = vperm.xlu0 %4290, %v4181
    %v4292 = vpop.permute.xlu0 %4291
    %4295 = vset.pattern.permute.xlu0 0
    %4296 = vperm.xlu0 %4295, %v4198
    %v4297 = vpop.permute.xlu0 %4296
    %4300 = vset.pattern.permute.xlu0 0
    %4301 = vperm.xlu0 %4300, %v4199
    %v4302 = vpop.permute.xlu0 %4301
    %4305 = vset.pattern.permute.xlu0 0
    %4306 = vperm.xlu0 %4305, %v4200
    %v4307 = vpop.permute.xlu0 %4306
    %4310 = vset.pattern.permute.xlu0 0
    %4311 = vperm.xlu0 %4310, %v4201
    %v4312 = vpop.permute.xlu0 %4311
    %4315 = vset.pattern.permute.xlu0 0
    %4316 = vperm.xlu0 %4315, %v4202
    %v4317 = vpop.permute.xlu0 %4316
    %4320 = vset.pattern.permute.xlu0 0
    %4321 = vperm.xlu0 %4320, %v4203
    %v4322 = vpop.permute.xlu0 %4321
    %4325 = vset.pattern.permute.xlu0 0
    %4326 = vperm.xlu0 %4325, %v4204
    %v4327 = vpop.permute.xlu0 %4326
    %4330 = vset.pattern.permute.xlu0 0
    %4331 = vperm.xlu0 %4330, %v4205
    %v4332 = vpop.permute.xlu0 %4331
    %4335 = vset.pattern.permute.xlu0 0
    %4336 = vperm.xlu0 %4335, %v4206
    %v4337 = vpop.permute.xlu0 %4336
    %4340 = vset.pattern.permute.xlu0 0
    %4341 = vperm.xlu0 %4340, %v4207
    %v4342 = vpop.permute.xlu0 %4341
    %4345 = vset.pattern.permute.xlu0 0
    %4346 = vperm.xlu0 %4345, %v4208
    %v4347 = vpop.permute.xlu0 %4346
    %4350 = vset.pattern.permute.xlu0 0
    %4351 = vperm.xlu0 %4350, %v4209
    %v4352 = vpop.permute.xlu0 %4351
    %4355 = vset.pattern.permute.xlu0 0
    %4356 = vperm.xlu0 %4355, %v4210
    %v4357 = vpop.permute.xlu0 %4356
    %4360 = vset.pattern.permute.xlu0 0
    %4361 = vperm.xlu0 %4360, %v4211
    %v4362 = vpop.permute.xlu0 %4361
    %4365 = vset.pattern.permute.xlu0 0
    %4366 = vperm.xlu0 %4365, %v4212
    %v4367 = vpop.permute.xlu0 %4366
    %4370 = vset.pattern.permute.xlu0 0
    %4371 = vperm.xlu0 %4370, %v4213
    %v4372 = vpop.permute.xlu0 %4371
    %vm4374 = vcmp.gt.f32.partialorder %v4217, %v4146
    %vm4375 = vcmp.gt.f32.partialorder %v4217, %v4147
    %vm4376 = vcmp.gt.f32.partialorder %v4222, %v4146
    %vm4377 = vcmp.gt.f32.partialorder %v4222, %v4147
    %vm4378 = vcmp.gt.f32.partialorder %v4227, %v4146
    %vm4379 = vcmp.gt.f32.partialorder %v4227, %v4147
    %vm4380 = vcmp.gt.f32.partialorder %v4232, %v4146
    %vm4381 = vcmp.gt.f32.partialorder %v4232, %v4147
    %vm4382 = vcmp.gt.f32.partialorder %v4237, %v4146
    %vm4383 = vcmp.gt.f32.partialorder %v4237, %v4147
    %vm4384 = vcmp.gt.f32.partialorder %v4242, %v4146
    %vm4385 = vcmp.gt.f32.partialorder %v4242, %v4147
    %vm4386 = vcmp.gt.f32.partialorder %v4247, %v4146
    %vm4387 = vcmp.gt.f32.partialorder %v4247, %v4147
    %vm4388 = vcmp.gt.f32.partialorder %v4252, %v4146
    %vm4389 = vcmp.gt.f32.partialorder %v4252, %v4147
    %vm4390 = vcmp.gt.f32.partialorder %v4257, %v4146
    %vm4391 = vcmp.gt.f32.partialorder %v4257, %v4147
    %vm4392 = vcmp.gt.f32.partialorder %v4262, %v4146
    %vm4393 = vcmp.gt.f32.partialorder %v4262, %v4147
    %vm4394 = vcmp.gt.f32.partialorder %v4267, %v4146
    %vm4395 = vcmp.gt.f32.partialorder %v4267, %v4147
    %vm4396 = vcmp.gt.f32.partialorder %v4272, %v4146
    %vm4397 = vcmp.gt.f32.partialorder %v4272, %v4147
    %vm4398 = vcmp.gt.f32.partialorder %v4277, %v4146
    %vm4399 = vcmp.gt.f32.partialorder %v4277, %v4147
    %vm4400 = vcmp.gt.f32.partialorder %v4282, %v4146
    %vm4401 = vcmp.gt.f32.partialorder %v4282, %v4147
    %vm4402 = vcmp.gt.f32.partialorder %v4287, %v4146
    %vm4403 = vcmp.gt.f32.partialorder %v4287, %v4147
    %vm4404 = vcmp.gt.f32.partialorder %v4292, %v4146
    %vm4405 = vcmp.gt.f32.partialorder %v4292, %v4147
    %vm4406 = vcmp.gt.f32.partialorder %v4297, %v4146
    %vm4407 = vcmp.gt.f32.partialorder %v4297, %v4147
    %vm4408 = vcmp.gt.f32.partialorder %v4302, %v4146
    %vm4409 = vcmp.gt.f32.partialorder %v4302, %v4147
    %vm4410 = vcmp.gt.f32.partialorder %v4307, %v4146
    %vm4411 = vcmp.gt.f32.partialorder %v4307, %v4147
    %vm4412 = vcmp.gt.f32.partialorder %v4312, %v4146
    %vm4413 = vcmp.gt.f32.partialorder %v4312, %v4147
    %vm4414 = vcmp.gt.f32.partialorder %v4317, %v4146
    %vm4415 = vcmp.gt.f32.partialorder %v4317, %v4147
    %vm4416 = vcmp.gt.f32.partialorder %v4322, %v4146
    %vm4417 = vcmp.gt.f32.partialorder %v4322, %v4147
    %vm4418 = vcmp.gt.f32.partialorder %v4327, %v4146
    %vm4419 = vcmp.gt.f32.partialorder %v4327, %v4147
    %vm4420 = vcmp.gt.f32.partialorder %v4332, %v4146
    %vm4421 = vcmp.gt.f32.partialorder %v4332, %v4147
    %vm4422 = vcmp.gt.f32.partialorder %v4337, %v4146
    %vm4423 = vcmp.gt.f32.partialorder %v4337, %v4147
    %vm4424 = vcmp.gt.f32.partialorder %v4342, %v4146
    %vm4425 = vcmp.gt.f32.partialorder %v4342, %v4147
    %vm4426 = vcmp.gt.f32.partialorder %v4347, %v4146
    %vm4427 = vcmp.gt.f32.partialorder %v4347, %v4147
    %vm4428 = vcmp.gt.f32.partialorder %v4352, %v4146
    %vm4429 = vcmp.gt.f32.partialorder %v4352, %v4147
    %vm4430 = vcmp.gt.f32.partialorder %v4357, %v4146
    %vm4431 = vcmp.gt.f32.partialorder %v4357, %v4147
    %vm4432 = vcmp.gt.f32.partialorder %v4362, %v4146
    %vm4433 = vcmp.gt.f32.partialorder %v4362, %v4147
    %vm4434 = vcmp.gt.f32.partialorder %v4367, %v4146
    %vm4435 = vcmp.gt.f32.partialorder %v4367, %v4147
    %vm4436 = vcmp.gt.f32.partialorder %v4372, %v4146
    %vm4437 = vcmp.gt.f32.partialorder %v4372, %v4147
    %vm4438 = vcmp.eq.f32.partialorder %v4217, %v4146
    %vm4439 = vcmp.eq.f32.partialorder %v4217, %v4147
    %vm4440 = vcmp.eq.f32.partialorder %v4222, %v4146
    %vm4441 = vcmp.eq.f32.partialorder %v4222, %v4147
    %vm4442 = vcmp.eq.f32.partialorder %v4227, %v4146
    %vm4443 = vcmp.eq.f32.partialorder %v4227, %v4147
    %vm4444 = vcmp.eq.f32.partialorder %v4232, %v4146
    %vm4445 = vcmp.eq.f32.partialorder %v4232, %v4147
    %vm4446 = vcmp.eq.f32.partialorder %v4237, %v4146
    %vm4447 = vcmp.eq.f32.partialorder %v4237, %v4147
    %vm4448 = vcmp.eq.f32.partialorder %v4242, %v4146
    %vm4449 = vcmp.eq.f32.partialorder %v4242, %v4147
    %vm4450 = vcmp.eq.f32.partialorder %v4247, %v4146
    %vm4451 = vcmp.eq.f32.partialorder %v4247, %v4147
    %vm4452 = vcmp.eq.f32.partialorder %v4252, %v4146
    %vm4453 = vcmp.eq.f32.partialorder %v4252, %v4147
    %vm4454 = vcmp.eq.f32.partialorder %v4257, %v4146
    %vm4455 = vcmp.eq.f32.partialorder %v4257, %v4147
    %vm4456 = vcmp.eq.f32.partialorder %v4262, %v4146
    %vm4457 = vcmp.eq.f32.partialorder %v4262, %v4147
    %vm4458 = vcmp.eq.f32.partialorder %v4267, %v4146
    %vm4459 = vcmp.eq.f32.partialorder %v4267, %v4147
    %vm4460 = vcmp.eq.f32.partialorder %v4272, %v4146
    %vm4461 = vcmp.eq.f32.partialorder %v4272, %v4147
    %vm4462 = vcmp.eq.f32.partialorder %v4277, %v4146
    %vm4463 = vcmp.eq.f32.partialorder %v4277, %v4147
    %vm4464 = vcmp.eq.f32.partialorder %v4282, %v4146
    %vm4465 = vcmp.eq.f32.partialorder %v4282, %v4147
    %vm4466 = vcmp.eq.f32.partialorder %v4287, %v4146
    %vm4467 = vcmp.eq.f32.partialorder %v4287, %v4147
    %vm4468 = vcmp.eq.f32.partialorder %v4292, %v4146
    %vm4469 = vcmp.eq.f32.partialorder %v4292, %v4147
    %vm4470 = vcmp.eq.f32.partialorder %v4297, %v4146
    %vm4471 = vcmp.eq.f32.partialorder %v4297, %v4147
    %vm4472 = vcmp.eq.f32.partialorder %v4302, %v4146
    %vm4473 = vcmp.eq.f32.partialorder %v4302, %v4147
    %vm4474 = vcmp.eq.f32.partialorder %v4307, %v4146
    %vm4475 = vcmp.eq.f32.partialorder %v4307, %v4147
    %vm4476 = vcmp.eq.f32.partialorder %v4312, %v4146
    %vm4477 = vcmp.eq.f32.partialorder %v4312, %v4147
    %vm4478 = vcmp.eq.f32.partialorder %v4317, %v4146
    %vm4479 = vcmp.eq.f32.partialorder %v4317, %v4147
    %vm4480 = vcmp.eq.f32.partialorder %v4322, %v4146
    %vm4481 = vcmp.eq.f32.partialorder %v4322, %v4147
    %vm4482 = vcmp.eq.f32.partialorder %v4327, %v4146
    %vm4483 = vcmp.eq.f32.partialorder %v4327, %v4147
    %vm4484 = vcmp.eq.f32.partialorder %v4332, %v4146
    %vm4485 = vcmp.eq.f32.partialorder %v4332, %v4147
    %vm4486 = vcmp.eq.f32.partialorder %v4337, %v4146
    %vm4487 = vcmp.eq.f32.partialorder %v4337, %v4147
    %vm4488 = vcmp.eq.f32.partialorder %v4342, %v4146
    %vm4489 = vcmp.eq.f32.partialorder %v4342, %v4147
    %vm4490 = vcmp.eq.f32.partialorder %v4347, %v4146
    %vm4491 = vcmp.eq.f32.partialorder %v4347, %v4147
    %vm4492 = vcmp.eq.f32.partialorder %v4352, %v4146
    %vm4493 = vcmp.eq.f32.partialorder %v4352, %v4147
    %vm4494 = vcmp.eq.f32.partialorder %v4357, %v4146
    %vm4495 = vcmp.eq.f32.partialorder %v4357, %v4147
    %vm4496 = vcmp.eq.f32.partialorder %v4362, %v4146
    %vm4497 = vcmp.eq.f32.partialorder %v4362, %v4147
    %vm4498 = vcmp.eq.f32.partialorder %v4367, %v4146
    %vm4499 = vcmp.eq.f32.partialorder %v4367, %v4147
    %vm4500 = vcmp.eq.f32.partialorder %v4372, %v4146
    %vm4501 = vcmp.eq.f32.partialorder %v4372, %v4147
    %vm4502 = vmand %vm4438, %vm1705
    %vm4503 = vmand %vm4439, %vm1706
    %vm4504 = vmand %vm4440, %vm1707
    %vm4505 = vmand %vm4441, %vm1708
    %vm4506 = vmand %vm4442, %vm1709
    %vm4507 = vmand %vm4443, %vm1710
    %vm4508 = vmand %vm4444, %vm1711
    %vm4509 = vmand %vm4445, %vm1712
    %vm4510 = vmand %vm4446, %vm1713
    %vm4511 = vmand %vm4447, %vm1714
    %vm4512 = vmand %vm4448, %vm1715
    %vm4513 = vmand %vm4449, %vm1716
    %vm4514 = vmand %vm4450, %vm1717
    %vm4515 = vmand %vm4451, %vm1718
    %vm4516 = vmand %vm4452, %vm1719
    %vm4517 = vmand %vm4453, %vm1720
    %vm4518 = vmand %vm4454, %vm1721
    %vm4519 = vmand %vm4455, %vm1722
    %vm4520 = vmand %vm4456, %vm1723
    %vm4521 = vmand %vm4457, %vm1724
    %vm4522 = vmand %vm4458, %vm1725
    %vm4523 = vmand %vm4459, %vm1726
    %vm4524 = vmand %vm4460, %vm1727
    %vm4525 = vmand %vm4461, %vm1728
    %vm4526 = vmand %vm4462, %vm1729
    %vm4527 = vmand %vm4463, %vm1730
    %vm4528 = vmand %vm4464, %vm1731
    %vm4529 = vmand %vm4465, %vm1732
    %vm4530 = vmand %vm4466, %vm1733
    %vm4531 = vmand %vm4467, %vm1734
    %vm4532 = vmand %vm4468, %vm1735
    %vm4533 = vmand %vm4469, %vm1736
    %vm4534 = vmand %vm4470, %vm1737
    %vm4535 = vmand %vm4471, %vm1738
    %vm4536 = vmand %vm4472, %vm1739
    %vm4537 = vmand %vm4473, %vm1740
    %vm4538 = vmand %vm4474, %vm1741
    %vm4539 = vmand %vm4475, %vm1742
    %vm4540 = vmand %vm4476, %vm1743
    %vm4541 = vmand %vm4477, %vm1744
    %vm4542 = vmand %vm4478, %vm1745
    %vm4543 = vmand %vm4479, %vm1746
    %vm4544 = vmand %vm4480, %vm1747
    %vm4545 = vmand %vm4481, %vm1748
    %vm4546 = vmand %vm4482, %vm1749
    %vm4547 = vmand %vm4483, %vm1750
    %vm4548 = vmand %vm4484, %vm1751
    %vm4549 = vmand %vm4485, %vm1752
    %vm4550 = vmand %vm4486, %vm1753
    %vm4551 = vmand %vm4487, %vm1754
    %vm4552 = vmand %vm4488, %vm1755
    %vm4553 = vmand %vm4489, %vm1756
    %vm4554 = vmand %vm4490, %vm1757
    %vm4555 = vmand %vm4491, %vm1758
    %vm4556 = vmand %vm4492, %vm1759
    %vm4557 = vmand %vm4493, %vm1760
    %vm4558 = vmand %vm4494, %vm1761
    %vm4559 = vmand %vm4495, %vm1762
    %vm4560 = vmand %vm4496, %vm1763
    %vm4561 = vmand %vm4497, %vm1764
    %vm4562 = vmand %vm4498, %vm1765
    %vm4563 = vmand %vm4499, %vm1766
    %vm4564 = vmand %vm4500, %vm1767
    %vm4565 = vmand %vm4501, %vm1768
    %vm4566 = vmor %vm4374, %vm4502
    %vm4567 = vmor %vm4375, %vm4503
    %vm4568 = vmor %vm4376, %vm4504
    %vm4569 = vmor %vm4377, %vm4505
    %vm4570 = vmor %vm4378, %vm4506
    %vm4571 = vmor %vm4379, %vm4507
    %vm4572 = vmor %vm4380, %vm4508
    %vm4573 = vmor %vm4381, %vm4509
    %vm4574 = vmor %vm4382, %vm4510
    %vm4575 = vmor %vm4383, %vm4511
    %vm4576 = vmor %vm4384, %vm4512
    %vm4577 = vmor %vm4385, %vm4513
    %vm4578 = vmor %vm4386, %vm4514
    %vm4579 = vmor %vm4387, %vm4515
    %vm4580 = vmor %vm4388, %vm4516
    %vm4581 = vmor %vm4389, %vm4517
    %vm4582 = vmor %vm4390, %vm4518
    %vm4583 = vmor %vm4391, %vm4519
    %vm4584 = vmor %vm4392, %vm4520
    %vm4585 = vmor %vm4393, %vm4521
    %vm4586 = vmor %vm4394, %vm4522
    %vm4587 = vmor %vm4395, %vm4523
    %vm4588 = vmor %vm4396, %vm4524
    %vm4589 = vmor %vm4397, %vm4525
    %vm4590 = vmor %vm4398, %vm4526
    %vm4591 = vmor %vm4399, %vm4527
    %vm4592 = vmor %vm4400, %vm4528
    %vm4593 = vmor %vm4401, %vm4529
    %vm4594 = vmor %vm4402, %vm4530
    %vm4595 = vmor %vm4403, %vm4531
    %vm4596 = vmor %vm4404, %vm4532
    %vm4597 = vmor %vm4405, %vm4533
    %vm4598 = vmor %vm4406, %vm4534
    %vm4599 = vmor %vm4407, %vm4535
    %vm4600 = vmor %vm4408, %vm4536
    %vm4601 = vmor %vm4409, %vm4537
    %vm4602 = vmor %vm4410, %vm4538
    %vm4603 = vmor %vm4411, %vm4539
    %vm4604 = vmor %vm4412, %vm4540
    %vm4605 = vmor %vm4413, %vm4541
    %vm4606 = vmor %vm4414, %vm4542
    %vm4607 = vmor %vm4415, %vm4543
    %vm4608 = vmor %vm4416, %vm4544
    %vm4609 = vmor %vm4417, %vm4545
    %vm4610 = vmor %vm4418, %vm4546
    %vm4611 = vmor %vm4419, %vm4547
    %vm4612 = vmor %vm4420, %vm4548
    %vm4613 = vmor %vm4421, %vm4549
    %vm4614 = vmor %vm4422, %vm4550
    %vm4615 = vmor %vm4423, %vm4551
    %vm4616 = vmor %vm4424, %vm4552
    %vm4617 = vmor %vm4425, %vm4553
    %vm4618 = vmor %vm4426, %vm4554
    %vm4619 = vmor %vm4427, %vm4555
    %vm4620 = vmor %vm4428, %vm4556
    %vm4621 = vmor %vm4429, %vm4557
    %vm4622 = vmor %vm4430, %vm4558
    %vm4623 = vmor %vm4431, %vm4559
    %vm4624 = vmor %vm4432, %vm4560
    %vm4625 = vmor %vm4433, %vm4561
    %vm4626 = vmor %vm4434, %vm4562
    %vm4627 = vmor %vm4435, %vm4563
    %vm4628 = vmor %vm4436, %vm4564
    %vm4629 = vmor %vm4437, %vm4565
    %v4630 = vsel %vm4566, 1, 0
    %v4631 = vsel %vm4567, 1, 0
    %v4632 = vsel %vm4568, 1, 0
    %v4633 = vsel %vm4569, 1, 0
    %v4634 = vsel %vm4570, 1, 0
    %v4635 = vsel %vm4571, 1, 0
    %v4636 = vsel %vm4572, 1, 0
    %v4637 = vsel %vm4573, 1, 0
    %v4638 = vsel %vm4574, 1, 0
    %v4639 = vsel %vm4575, 1, 0
    %v4640 = vsel %vm4576, 1, 0
    %v4641 = vsel %vm4577, 1, 0
    %v4642 = vsel %vm4578, 1, 0
    %v4643 = vsel %vm4579, 1, 0
    %v4644 = vsel %vm4580, 1, 0
    %v4645 = vsel %vm4581, 1, 0
    %v4646 = vsel %vm4582, 1, 0
    %v4647 = vsel %vm4583, 1, 0
    %v4648 = vsel %vm4584, 1, 0
    %v4649 = vsel %vm4585, 1, 0
    %v4650 = vsel %vm4586, 1, 0
    %v4651 = vsel %vm4587, 1, 0
    %v4652 = vsel %vm4588, 1, 0
    %v4653 = vsel %vm4589, 1, 0
    %v4654 = vsel %vm4590, 1, 0
    %v4655 = vsel %vm4591, 1, 0
    %v4656 = vsel %vm4592, 1, 0
    %v4657 = vsel %vm4593, 1, 0
    %v4658 = vsel %vm4594, 1, 0
    %v4659 = vsel %vm4595, 1, 0
    %v4660 = vsel %vm4596, 1, 0
    %v4661 = vsel %vm4597, 1, 0
    %v4662 = vsel %vm4598, 1, 0
    %v4663 = vsel %vm4599, 1, 0
    %v4664 = vsel %vm4600, 1, 0
    %v4665 = vsel %vm4601, 1, 0
    %v4666 = vsel %vm4602, 1, 0
    %v4667 = vsel %vm4603, 1, 0
    %v4668 = vsel %vm4604, 1, 0
    %v4669 = vsel %vm4605, 1, 0
    %v4670 = vsel %vm4606, 1, 0
    %v4671 = vsel %vm4607, 1, 0
    %v4672 = vsel %vm4608, 1, 0
    %v4673 = vsel %vm4609, 1, 0
    %v4674 = vsel %vm4610, 1, 0
    %v4675 = vsel %vm4611, 1, 0
    %v4676 = vsel %vm4612, 1, 0
    %v4677 = vsel %vm4613, 1, 0
    %v4678 = vsel %vm4614, 1, 0
    %v4679 = vsel %vm4615, 1, 0
    %v4680 = vsel %vm4616, 1, 0
    %v4681 = vsel %vm4617, 1, 0
    %v4682 = vsel %vm4618, 1, 0
    %v4683 = vsel %vm4619, 1, 0
    %v4684 = vsel %vm4620, 1, 0
    %v4685 = vsel %vm4621, 1, 0
    %v4686 = vsel %vm4622, 1, 0
    %v4687 = vsel %vm4623, 1, 0
    %v4688 = vsel %vm4624, 1, 0
    %v4689 = vsel %vm4625, 1, 0
    %v4690 = vsel %vm4626, 1, 0
    %v4691 = vsel %vm4627, 1, 0
    %v4692 = vsel %vm4628, 1, 0
    %v4693 = vsel %vm4629, 1, 0
    %v4694 = vadd.s32 %v4630, %v4634
    %v4695 = vadd.s32 %v4632, %v4636
    %v4696 = vadd.s32 %v4694, %v4638
    %v4697 = vadd.s32 %v4695, %v4640
    %v4698 = vadd.s32 %v4696, %v4642
    %v4699 = vadd.s32 %v4697, %v4644
    %v4700 = vadd.s32 %v4698, %v4646
    %v4701 = vadd.s32 %v4699, %v4648
    %v4702 = vadd.s32 %v4700, %v4650
    %v4703 = vadd.s32 %v4701, %v4652
    %v4704 = vadd.s32 %v4702, %v4654
    %v4705 = vadd.s32 %v4703, %v4656
    %v4706 = vadd.s32 %v4704, %v4658
    %v4707 = vadd.s32 %v4705, %v4660
    %v4708 = vadd.s32 %v4706, %v4662
    %v4709 = vadd.s32 %v4707, %v4664
    %v4710 = vadd.s32 %v4708, %v4666
    %v4711 = vadd.s32 %v4709, %v4668
    %v4712 = vadd.s32 %v4710, %v4670
    %v4713 = vadd.s32 %v4711, %v4672
    %v4714 = vadd.s32 %v4712, %v4674
    %v4715 = vadd.s32 %v4713, %v4676
    %v4716 = vadd.s32 %v4714, %v4678
    %v4717 = vadd.s32 %v4715, %v4680
    %v4718 = vadd.s32 %v4716, %v4682
    %v4719 = vadd.s32 %v4717, %v4684
    %v4720 = vadd.s32 %v4718, %v4686
    %v4721 = vadd.s32 %v4719, %v4688
    %v4722 = vadd.s32 %v4720, %v4690
    %v4723 = vadd.s32 %v4721, %v4692
    %v4724 = vadd.s32 %v4722, %v4723
    %v4725 = vrot.slane %v4724, 4
    %v4726 = vadd.s32 %v4724, %v4725
    %v4727 = vrot.slane %v4726, 2
    %v4728 = vadd.s32 %v4726, %v4727
    %v4729 = vrot.slane %v4728, 1
    %v4730 = vadd.s32 %v4728, %v4729
    %v4731 = vadd.s32 %v4631, %v4635
    %v4732 = vadd.s32 %v4633, %v4637
    %v4733 = vadd.s32 %v4731, %v4639
    %v4734 = vadd.s32 %v4732, %v4641
    %v4735 = vadd.s32 %v4733, %v4643
    %v4736 = vadd.s32 %v4734, %v4645
    %v4737 = vadd.s32 %v4735, %v4647
    %v4738 = vadd.s32 %v4736, %v4649
    %v4739 = vadd.s32 %v4737, %v4651
    %v4740 = vadd.s32 %v4738, %v4653
    %v4741 = vadd.s32 %v4739, %v4655
    %v4742 = vadd.s32 %v4740, %v4657
    %v4743 = vadd.s32 %v4741, %v4659
    %v4744 = vadd.s32 %v4742, %v4661
    %v4745 = vadd.s32 %v4743, %v4663
    %v4746 = vadd.s32 %v4744, %v4665
    %v4747 = vadd.s32 %v4745, %v4667
    %v4748 = vadd.s32 %v4746, %v4669
    %v4749 = vadd.s32 %v4747, %v4671
    %v4750 = vadd.s32 %v4748, %v4673
    %v4751 = vadd.s32 %v4749, %v4675
    %v4752 = vadd.s32 %v4750, %v4677
    %v4753 = vadd.s32 %v4751, %v4679
    %v4754 = vadd.s32 %v4752, %v4681
    %v4755 = vadd.s32 %v4753, %v4683
    %v4756 = vadd.s32 %v4754, %v4685
    %v4757 = vadd.s32 %v4755, %v4687
    %v4758 = vadd.s32 %v4756, %v4689
    %v4759 = vadd.s32 %v4757, %v4691
    %v4760 = vadd.s32 %v4758, %v4693
    %v4761 = vadd.s32 %v4759, %v4760
    %v4762 = vrot.slane %v4761, 4
    %v4763 = vadd.s32 %v4761, %v4762
    %v4764 = vrot.slane %v4763, 2
    %v4765 = vadd.s32 %v4763, %v4764
    %v4766 = vrot.slane %v4765, 1
    %v4767 = vadd.s32 %v4765, %v4766
    %vm4768 = vcmp.eq.s32.totalorder %v4730, %v1673
    %vm4769 = vcmp.eq.s32.totalorder %v4767, %v1673
    %vm4770 = vcmp.eq.s32.totalorder %v4730, %v1674
    %vm4771 = vcmp.eq.s32.totalorder %v4767, %v1674
    %v4772 = vsel %vm4768, %v1670, 0
    %v4773 = vsel %vm4769, %v1671, 0
    %v4774 = vsel %vm4770, %v1670, 0
    %v4775 = vsel %vm4771, %v1671, 0
    %v4776 = vadd.s32 %v4772, %v4773
    %v4777 = vand.u32 %v4776, 65535
    %v4778 = vshrl.u32 %v4776, 16
    %v4779 = vcvt.s32.f32 %v4777
    %v4780 = vcvt.s32.f32 %v4778
    %4781 = vadd.xlane.f32.xlu0 %v4779
    %v4782 = vpop.xlane.xlu0 %4781
    %4783 = vadd.xlane.f32.xlu0 %v4780
    %v4784 = vpop.xlane.xlu0 %4783
    %v4785 = vcvt.f32.s32 %v4782
    %v4786 = vcvt.f32.s32 %v4784
    %v4787 = vshll.u32 %v4786, 16
    %v4788 = vadd.s32 %v4787, %v4785
    %v4789 = vadd.s32 %v4774, %v4775
    %v4790 = vand.u32 %v4789, 65535
    %v4791 = vshrl.u32 %v4789, 16
    %v4792 = vcvt.s32.f32 %v4790
    %v4793 = vcvt.s32.f32 %v4791
    %4794 = vadd.xlane.f32.xlu0 %v4792
    %v4795 = vpop.xlane.xlu0 %4794
    %4796 = vadd.xlane.f32.xlu0 %v4793
    %v4797 = vpop.xlane.xlu0 %4796
    %v4798 = vcvt.f32.s32 %v4795
    %v4799 = vcvt.f32.s32 %v4797
    %v4800 = vshll.u32 %v4799, 16
    %v4801 = vadd.s32 %v4800, %v4798
    %vm4802 = vcmask 7168
    %4803 = vst.msk [vmem:[%s4] sm:$0xff] %vm4802, %v4788
    %4804 = vst.msk [vmem:[%s4 + $0x8] sm:$0xff] %vm4802, %v4801
    %v4805 = vsel %vm4768, %v4146, 0.0
    %v4806 = vsel %vm4769, %v4147, 0.0
    %v4807 = vsel %vm4770, %v4146, 0.0
    %v4808 = vsel %vm4771, %v4147, 0.0
    %v4809 = vadd.f32 %v4805, %v4806
    %4810 = vadd.xlane.f32.xlu0 %v4809
    %v4811 = vpop.xlane.xlu0 %4810
    %v4812 = vadd.f32 %v4807, %v4808
    %4813 = vadd.xlane.f32.xlu0 %v4812
    %v4814 = vpop.xlane.xlu0 %4813
    %4815 = vst.msk [vmem:[%s5] sm:$0xff] %vm4802, %v4811
    %4816 = vst.msk [vmem:[%s5 + $0x8] sm:$0xff] %vm4802, %v4814
    // Predicated region
    $region22: #{ensemble_forward.1} parent=1 // pred_check
      _
    $region23: #{ensemble_forward.1} parent=1 // pred_check_branch
      %4818 = sbr.rel (0) target = $region25
    $region24: #{ensemble_forward.1} parent=1 // pred_region
      _
    $region25: #{ensemble_forward.1} parent=1 // pred_fallthru
      _
    // Predicated region
    $region26: #{ensemble_forward.1} parent=1 // pred_check
      _
    $region27: #{ensemble_forward.1} parent=1 // pred_check_branch
      %4820 = sbr.rel (0) target = $region29
    $region28: #{ensemble_forward.1} parent=1 // pred_region
      _
    $region29: #{ensemble_forward.1} parent=1 // pred_fallthru
      _
    // Predicated region
    $region30: #{ensemble_forward.1} parent=1 // pred_check
      _
    $region31: #{ensemble_forward.1} parent=1 // pred_check_branch
      %4822 = sbr.rel (0) target = $region33
    $region32: #{ensemble_forward.1} parent=1 // pred_region
      _
    $region33: #{ensemble_forward.1} parent=1 // pred_fallthru
      _
    // Predicated region
    $region34: #{ensemble_forward.1} parent=1 // pred_check
      _
    $region35: #{ensemble_forward.1} parent=1 // pred_check_branch
      %4824 = sbr.rel (0) target = $region37
    $region36: #{ensemble_forward.1} parent=1 // pred_region
      _
    $region37: #{ensemble_forward.1} parent=1 // pred_fallthru
      _
    %4825 = vsyncpa [#allocation3], 1

</llo_original>
